<compile_context>
chip_gen: v6e
topology: v6e:2x2x1
jax: 0.10.0
libtpu: 0.0.40
codegen_flags: <defaults>
</compile_context>

<pallas_src>
import jax
import jax.numpy as jnp
from jax.experimental import pallas as pl
from jax.experimental.pallas import tpu as pltpu

INPUT_SIZE = 3200   # from nn.LSTM(3200, 256)
HIDDEN = 256
OUT = 8             # from nn.Linear(256, 8)
OUT_PAD = 128       # Linear output padded to a full lane tile -> unmasked stores


def _round_up(n, m):
    return ((n + m - 1) // m) * m


def _lstm_head_kernel(gx_ref, whh_ref, wout_ref, bout_ref, out_ref, h_scr, c_scr):
    """Single invocation: all T LSTM steps + fused output Linear.

    gx_ref:   (T, B_pad, 4H)      f32   precomputed x @ W_ih^T + (b_ih + b_hh)
    whh_ref:  (H, 4H)             bf16  W_hh^T
    wout_ref: (H, OUT_PAD)        bf16  W_out^T zero-padded to 128 lanes
    bout_ref: (1, OUT_PAD)        f32   b_out zero-padded
    out_ref:  (T, B_pad, OUT_PAD) f32   per-timestep Linear output (lane-dense)
    h_scr/c_scr: (B_pad, H)       f32   carries
    """
    T = gx_ref.shape[0]
    H = HIDDEN

    wout = wout_ref[...]
    bout = bout_ref[...]

    # ---- step 0 peeled: h0 == c0 == 0, so gates == gx[0]; no recurrent matmul ----
    g0 = gx_ref[0]
    i0 = jax.nn.sigmoid(g0[:, 0 * H:1 * H])
    gg0 = jnp.tanh(g0[:, 2 * H:3 * H])
    o0 = jax.nn.sigmoid(g0[:, 3 * H:4 * H])
    c0 = i0 * gg0                      # f0 * c0 term vanishes (c0 == 0)
    h0 = o0 * jnp.tanh(c0)
    c_scr[...] = c0
    h_scr[...] = h0
    out_ref[0] = jnp.dot(h0.astype(jnp.bfloat16), wout,
                         preferred_element_type=jnp.float32) + bout

    def step(t, carry):
        # Only the small (B_pad,256)x(256,1024) bf16 matmul is on the serial h-chain.
        gates = gx_ref[t] + jnp.dot(
            h_scr[...].astype(jnp.bfloat16), whh_ref[...],
            preferred_element_type=jnp.float32)                      # (B_pad, 4H) f32

        # PyTorch gate order: i, f, g, o  (elementwise kept in f32 — v5e-safe)
        i = jax.nn.sigmoid(gates[:, 0 * H:1 * H])
        f = jax.nn.sigmoid(gates[:, 1 * H:2 * H])
        g = jnp.tanh(gates[:, 2 * H:3 * H])
        o = jax.nn.sigmoid(gates[:, 3 * H:4 * H])

        c_new = f * c_scr[...] + i * g
        h_new = o * jnp.tanh(c_new)

        c_scr[...] = c_new
        h_scr[...] = h_new
        # Fused Linear(256, 8->128): off the serial path, lane-dense unmasked store.
        out_ref[t] = jnp.dot(h_new.astype(jnp.bfloat16), wout,
                             preferred_element_type=jnp.float32) + bout
        return carry

    # Fully unrolled over the remaining T-1 steps (T is small & static): removes
    # grid/pipeline boundaries and lets the LLO scheduler overlap MXU pushes with
    # EUP sigmoid/tanh across steps.
    jax.lax.fori_loop(1, T, step, 0, unroll=True)


def prepare_params(w_ih, w_hh, b_ih, b_hh, w_out, b_out):
    """One-time weight prep (transpose + bf16 cast + lane padding).

    Call ONCE and reuse — keeps the per-call forward free of the 12.8 MiB W_ih
    transpose/cast HBM round-trip.
    """
    w_ih_t = jnp.transpose(w_ih).astype(jnp.bfloat16)                  # (3200, 1024)
    w_hh_t = jnp.transpose(w_hh).astype(jnp.bfloat16)                  # (256, 1024)
    bias = (b_ih + b_hh).astype(jnp.float32)                           # (1024,)
    w_out_t = jnp.zeros((HIDDEN, OUT_PAD), jnp.bfloat16).at[:, :OUT].set(
        jnp.transpose(w_out).astype(jnp.bfloat16))                     # (256, 128)
    b_out_p = jnp.zeros((1, OUT_PAD), jnp.float32).at[0, :OUT].set(
        b_out.astype(jnp.float32))                                     # (1, 128)
    return w_ih_t, w_hh_t, bias, w_out_t, b_out_p


@jax.jit
def vgg_classifier_forward(x, w_ih_t, w_hh_t, bias, w_out_t, b_out_p):
    """x: (T, B, C, H, W) with C*H*W == 3200.  Returns (T, B, 8) float32."""
    T, B = x.shape[0], x.shape[1]
    xf = x.reshape(T, B, -1)                              # nn.Flatten(start_dim=2)
    assert xf.shape[-1] == INPUT_SIZE

    # ---- hoisted input projection: one (T*B, 3200) @ (3200, 1024) bf16 matmul (XLA) ----
    gx = jnp.dot(xf.reshape(T * B, INPUT_SIZE).astype(jnp.bfloat16), w_ih_t,
                 preferred_element_type=jnp.float32) + bias
    gx = gx.reshape(T, B, 4 * HIDDEN)

    # Pad batch to 16 sublanes: the bf16-cast recurrent-matmul LHS then fills a full
    # packed (16, 128) tile (padded rows see zero gates -> finite garbage, sliced off).
    B_pad = _round_up(max(B, 16), 16)
    if B_pad != B:
        gx = jnp.pad(gx, ((0, 0), (0, B_pad - B), (0, 0)))

    # ---- Pallas: LSTM recurrence + fused output Linear, single grid step ------------
    y = pl.pallas_call(
        _lstm_head_kernel,
        out_shape=jax.ShapeDtypeStruct((T, B_pad, OUT_PAD), jnp.float32),
        grid=(1,),
        in_specs=[
            pl.BlockSpec((T, B_pad, 4 * HIDDEN), lambda i: (0, 0, 0)),   # gates_x
            pl.BlockSpec((HIDDEN, 4 * HIDDEN), lambda i: (0, 0)),        # W_hh^T bf16
            pl.BlockSpec((HIDDEN, OUT_PAD), lambda i: (0, 0)),           # W_out^T bf16
            pl.BlockSpec((1, OUT_PAD), lambda i: (0, 0)),                # b_out padded
        ],
        out_specs=pl.BlockSpec((T, B_pad, OUT_PAD), lambda i: (0, 0, 0)),
        scratch_shapes=[
            pltpu.VMEM((B_pad, HIDDEN), jnp.float32),   # h carry
            pltpu.VMEM((B_pad, HIDDEN), jnp.float32),   # c carry
        ],
        compiler_params=pltpu.CompilerParams(
            dimension_semantics=("arbitrary",)),
    )(gx, w_hh_t, w_out_t, b_out_p)

    return y[:, :B, :OUT]                                 # drop batch/lane padding


def _reference(xf, w_ih, w_hh, b_ih, b_hh, w_out, b_out):
    """Pure-JAX f32 reference (PyTorch LSTM + Linear semantics)."""
    def step(carry, x_t):
        h, c = carry
        gates = x_t @ w_ih.T + b_ih + h @ w_hh.T + b_hh
        i, f, g, o = jnp.split(gates, 4, axis=-1)
        i, f, o = jax.nn.sigmoid(i), jax.nn.sigmoid(f), jax.nn.sigmoid(o)
        g = jnp.tanh(g)
        c = f * c + i * g
        h = o * jnp.tanh(c)
        y = h @ w_out.T + b_out
        return (h, c), y

    B = xf.shape[1]
    init = (jnp.zeros((B, HIDDEN), jnp.float32), jnp.zeros((B, HIDDEN), jnp.float32))
    _, ys = jax.lax.scan(step, init, xf)
    return ys


if __name__ == "__main__":
    T, B, C, H, W = 4, 2, 128, 5, 5            # C*H*W = 3200, as the module requires
    key = jax.random.PRNGKey(0)
    k_x, k1, k2, k3, k4, k5, k6 = jax.random.split(key, 7)

    x = jax.random.normal(k_x, (T, B, C, H, W), dtype=jnp.float32)

    # Deterministic synthetic parameters (shapes per nn.LSTM(3200,256), nn.Linear(256,8))
    w_ih = 0.02 * jax.random.normal(k1, (4 * HIDDEN, INPUT_SIZE), dtype=jnp.float32)
    w_hh = 0.02 * jax.random.normal(k2, (4 * HIDDEN, HIDDEN), dtype=jnp.float32)
    b_ih = 0.02 * jax.random.normal(k3, (4 * HIDDEN,), dtype=jnp.float32)
    b_hh = 0.02 * jax.random.normal(k4, (4 * HIDDEN,), dtype=jnp.float32)
    w_out = 0.02 * jax.random.normal(k5, (OUT, HIDDEN), dtype=jnp.float32)
    b_out = 0.02 * jax.random.normal(k6, (OUT,), dtype=jnp.float32)

    # One-time weight prep (outside the jitted forward, reused across calls).
    params = jax.block_until_ready(
        prepare_params(w_ih, w_hh, b_ih, b_hh, w_out, b_out))

    out = vgg_classifier_forward(x, *params)
    out = jax.block_until_ready(out)

    ref = _reference(x.reshape(T, B, -1), w_ih, w_hh, b_ih, b_hh, w_out, b_out)
    assert out.shape == (T, B, OUT)
    assert jnp.allclose(out, ref, atol=2e-2, rtol=2e-2), "Pallas kernel mismatch vs JAX reference"

    print("KERNEL_OK")
</pallas_src>

<mosaic_0001>
module attributes {stable_mosaic.version = 11 : i64} {
  func.func @_lstm_head_kernel(%arg0: i32, %arg1: memref<4x16x1024xf32, #tpu.memory_space<vmem>>, %arg2: memref<256x1024xbf16, #tpu.memory_space<vmem>>, %arg3: memref<256x128xbf16, #tpu.memory_space<vmem>>, %arg4: memref<1x128xf32, #tpu.memory_space<vmem>>, %arg5: memref<4x16x128xf32, #tpu.memory_space<vmem>>, %arg6: memref<16x256xf32, #tpu.memory_space<vmem>>, %arg7: memref<16x256xf32, #tpu.memory_space<vmem>>) attributes {dimension_semantics = [#tpu.dimension_semantics<arbitrary>], iteration_bounds = array<i64: 1>, scalar_prefetch = 0 : i64, scratch_operands = 2 : i64, tpu.core_type = #tpu.core_type<tc>, window_params = [{pipeline_mode = #tpu.pipeline_mode<synchronous>, transform_indices = @transform_0, window_bounds = array<i64: 4, 16, 1024>}, {pipeline_mode = #tpu.pipeline_mode<synchronous>, transform_indices = @transform_1, window_bounds = array<i64: 256, 1024>}, {pipeline_mode = #tpu.pipeline_mode<synchronous>, transform_indices = @transform_2, window_bounds = array<i64: 256, 128>}, {pipeline_mode = #tpu.pipeline_mode<synchronous>, transform_indices = @transform_3, window_bounds = array<i64: 1, 128>}, {pipeline_mode = #tpu.pipeline_mode<synchronous>, transform_indices = @transform_4, window_bounds = array<i64: 4, 16, 128>}]} {
    %c0 = arith.constant 0 : index
    %c0_0 = arith.constant 0 : index
    %0 = vector.load %arg3[%c0, %c0_0] : memref<256x128xbf16, #tpu.memory_space<vmem>>, vector<256x128xbf16>
    %c0_1 = arith.constant 0 : index
    %c0_2 = arith.constant 0 : index
    %1 = vector.load %arg4[%c0_1, %c0_2] : memref<1x128xf32, #tpu.memory_space<vmem>>, vector<1x128xf32>
    %c0_3 = arith.constant 0 : index
    %c0_4 = arith.constant 0 : index
    %c0_5 = arith.constant 0 : index
    %2 = vector.load %arg1[%c0_3, %c0_4, %c0_5] : memref<4x16x1024xf32, #tpu.memory_space<vmem>>, vector<1x16x1024xf32>
    %3 = vector.shape_cast %2 : vector<1x16x1024xf32> to vector<16x1024xf32>
    %4 = vector.extract_strided_slice %3 {offsets = [0, 0], sizes = [16, 256], strides = [1, 1]} : vector<16x1024xf32> to vector<16x256xf32>
    %5 = arith.negf %4 : vector<16x256xf32>
    %6 = math.exp %5 : vector<16x256xf32>
    %cst = arith.constant 1.000000e+00 : f32
    %7 = vector.broadcast %cst : f32 to vector<16x256xf32>
    %8 = arith.addf %7, %6 : vector<16x256xf32>
    %9 = arith.divf %7, %8 : vector<16x256xf32>
    %10 = vector.extract_strided_slice %3 {offsets = [0, 512], sizes = [16, 256], strides = [1, 1]} : vector<16x1024xf32> to vector<16x256xf32>
    %11 = math.tanh %10 : vector<16x256xf32>
    %12 = vector.extract_strided_slice %3 {offsets = [0, 768], sizes = [16, 256], strides = [1, 1]} : vector<16x1024xf32> to vector<16x256xf32>
    %13 = arith.negf %12 : vector<16x256xf32>
    %14 = math.exp %13 : vector<16x256xf32>
    %cst_6 = arith.constant 1.000000e+00 : f32
    %15 = vector.broadcast %cst_6 : f32 to vector<16x256xf32>
    %16 = arith.addf %15, %14 : vector<16x256xf32>
    %17 = arith.divf %15, %16 : vector<16x256xf32>
    %18 = arith.mulf %9, %11 : vector<16x256xf32>
    %19 = math.tanh %18 : vector<16x256xf32>
    %20 = arith.mulf %17, %19 : vector<16x256xf32>
    %c0_7 = arith.constant 0 : index
    %c0_8 = arith.constant 0 : index
    %21 = vector.load %arg7[%c0_7, %c0_8] : memref<16x256xf32, #tpu.memory_space<vmem>>, vector<16x256xf32>
    tpu.vector_store %arg7[%c0_7, %c0_8], %18 {strides = array<i32>} : memref<16x256xf32, #tpu.memory_space<vmem>>, vector<16x256xf32>,
    %c0_9 = arith.constant 0 : index
    %c0_10 = arith.constant 0 : index
    %22 = vector.load %arg6[%c0_9, %c0_10] : memref<16x256xf32, #tpu.memory_space<vmem>>, vector<16x256xf32>
    tpu.vector_store %arg6[%c0_9, %c0_10], %20 {strides = array<i32>} : memref<16x256xf32, #tpu.memory_space<vmem>>, vector<16x256xf32>,
    %23 = arith.truncf %20 : vector<16x256xf32> to vector<16x256xbf16>
    %cst_11 = arith.constant dense<0.000000e+00> : vector<16x128xf32>
    %24 = tpu.matmul %23, %0, %cst_11 {dimension_numbers = #tpu.dot_dimension_numbers<[1], [0], [0], [1], [0, 0, 1, 1], [], []>} : vector<16x256xbf16>, vector<256x128xbf16>, vector<16x128xf32> -> vector<16x128xf32>
    %25 = vector.broadcast %1 : vector<1x128xf32> to vector<16x128xf32>
    %26 = arith.addf %24, %25 : vector<16x128xf32>
    %c0_12 = arith.constant 0 : index
    %c0_13 = arith.constant 0 : index
    %c0_14 = arith.constant 0 : index
    %27 = vector.load %arg5[%c0_12, %c0_13, %c0_14] : memref<4x16x128xf32, #tpu.memory_space<vmem>>, vector<1x16x128xf32>
    %28 = vector.shape_cast %27 : vector<1x16x128xf32> to vector<16x128xf32>
    %29 = vector.shape_cast %26 : vector<16x128xf32> to vector<1x16x128xf32>
    tpu.vector_store %arg5[%c0_12, %c0_13, %c0_14], %29 {strides = array<i32>} : memref<4x16x128xf32, #tpu.memory_space<vmem>>, vector<1x16x128xf32>,
    %c1_i32 = arith.constant 1 : i32
    %30 = arith.index_cast %c1_i32 : i32 to index
    %c0_15 = arith.constant 0 : index
    %c0_16 = arith.constant 0 : index
    %31 = vector.load %arg1[%30, %c0_15, %c0_16] : memref<4x16x1024xf32, #tpu.memory_space<vmem>>, vector<1x16x1024xf32>
    %32 = vector.shape_cast %31 : vector<1x16x1024xf32> to vector<16x1024xf32>
    %c0_17 = arith.constant 0 : index
    %c0_18 = arith.constant 0 : index
    %33 = vector.load %arg6[%c0_17, %c0_18] : memref<16x256xf32, #tpu.memory_space<vmem>>, vector<16x256xf32>
    %34 = arith.truncf %33 : vector<16x256xf32> to vector<16x256xbf16>
    %c0_19 = arith.constant 0 : index
    %c0_20 = arith.constant 0 : index
    %35 = vector.load %arg2[%c0_19, %c0_20] : memref<256x1024xbf16, #tpu.memory_space<vmem>>, vector<256x1024xbf16>
    %cst_21 = arith.constant dense<0.000000e+00> : vector<16x1024xf32>
    %36 = tpu.matmul %34, %35, %cst_21 {dimension_numbers = #tpu.dot_dimension_numbers<[1], [0], [0], [1], [0, 0, 1, 1], [], []>} : vector<16x256xbf16>, vector<256x1024xbf16>, vector<16x1024xf32> -> vector<16x1024xf32>
    %37 = arith.addf %32, %36 : vector<16x1024xf32>
    %38 = vector.extract_strided_slice %37 {offsets = [0, 0], sizes = [16, 256], strides = [1, 1]} : vector<16x1024xf32> to vector<16x256xf32>
    %39 = arith.negf %38 : vector<16x256xf32>
    %40 = math.exp %39 : vector<16x256xf32>
    %cst_22 = arith.constant 1.000000e+00 : f32
    %41 = vector.broadcast %cst_22 : f32 to vector<16x256xf32>
    %42 = arith.addf %41, %40 : vector<16x256xf32>
    %43 = arith.divf %41, %42 : vector<16x256xf32>
    %44 = vector.extract_strided_slice %37 {offsets = [0, 256], sizes = [16, 256], strides = [1, 1]} : vector<16x1024xf32> to vector<16x256xf32>
    %45 = arith.negf %44 : vector<16x256xf32>
    %46 = math.exp %45 : vector<16x256xf32>
    %cst_23 = arith.constant 1.000000e+00 : f32
    %47 = vector.broadcast %cst_23 : f32 to vector<16x256xf32>
    %48 = arith.addf %47, %46 : vector<16x256xf32>
    %49 = arith.divf %47, %48 : vector<16x256xf32>
    %50 = vector.extract_strided_slice %37 {offsets = [0, 512], sizes = [16, 256], strides = [1, 1]} : vector<16x1024xf32> to vector<16x256xf32>
    %51 = math.tanh %50 : vector<16x256xf32>
    %52 = vector.extract_strided_slice %37 {offsets = [0, 768], sizes = [16, 256], strides = [1, 1]} : vector<16x1024xf32> to vector<16x256xf32>
    %53 = arith.negf %52 : vector<16x256xf32>
    %54 = math.exp %53 : vector<16x256xf32>
    %cst_24 = arith.constant 1.000000e+00 : f32
    %55 = vector.broadcast %cst_24 : f32 to vector<16x256xf32>
    %56 = arith.addf %55, %54 : vector<16x256xf32>
    %57 = arith.divf %55, %56 : vector<16x256xf32>
    %c0_25 = arith.constant 0 : index
    %c0_26 = arith.constant 0 : index
    %58 = vector.load %arg7[%c0_25, %c0_26] : memref<16x256xf32, #tpu.memory_space<vmem>>, vector<16x256xf32>
    %59 = arith.mulf %49, %58 : vector<16x256xf32>
    %60 = arith.mulf %43, %51 : vector<16x256xf32>
    %61 = arith.addf %59, %60 : vector<16x256xf32>
    %62 = math.tanh %61 : vector<16x256xf32>
    %63 = arith.mulf %57, %62 : vector<16x256xf32>
    %c0_27 = arith.constant 0 : index
    %c0_28 = arith.constant 0 : index
    %64 = vector.load %arg7[%c0_27, %c0_28] : memref<16x256xf32, #tpu.memory_space<vmem>>, vector<16x256xf32>
    tpu.vector_store %arg7[%c0_27, %c0_28], %61 {strides = array<i32>} : memref<16x256xf32, #tpu.memory_space<vmem>>, vector<16x256xf32>,
    %c0_29 = arith.constant 0 : index
    %c0_30 = arith.constant 0 : index
    %65 = vector.load %arg6[%c0_29, %c0_30] : memref<16x256xf32, #tpu.memory_space<vmem>>, vector<16x256xf32>
    tpu.vector_store %arg6[%c0_29, %c0_30], %63 {strides = array<i32>} : memref<16x256xf32, #tpu.memory_space<vmem>>, vector<16x256xf32>,
    %66 = arith.truncf %63 : vector<16x256xf32> to vector<16x256xbf16>
    %cst_31 = arith.constant dense<0.000000e+00> : vector<16x128xf32>
    %67 = tpu.matmul %66, %0, %cst_31 {dimension_numbers = #tpu.dot_dimension_numbers<[1], [0], [0], [1], [0, 0, 1, 1], [], []>} : vector<16x256xbf16>, vector<256x128xbf16>, vector<16x128xf32> -> vector<16x128xf32>
    %68 = vector.broadcast %1 : vector<1x128xf32> to vector<16x128xf32>
    %69 = arith.addf %67, %68 : vector<16x128xf32>
    %70 = arith.index_cast %c1_i32 : i32 to index
    %c0_32 = arith.constant 0 : index
    %c0_33 = arith.constant 0 : index
    %71 = vector.load %arg5[%70, %c0_32, %c0_33] : memref<4x16x128xf32, #tpu.memory_space<vmem>>, vector<1x16x128xf32>
    %72 = vector.shape_cast %71 : vector<1x16x128xf32> to vector<16x128xf32>
    %73 = vector.shape_cast %69 : vector<16x128xf32> to vector<1x16x128xf32>
    tpu.vector_store %arg5[%70, %c0_32, %c0_33], %73 {strides = array<i32>} : memref<4x16x128xf32, #tpu.memory_space<vmem>>, vector<1x16x128xf32>,
    %c2_i32 = arith.constant 2 : i32
    %74 = arith.index_cast %c2_i32 : i32 to index
    %c0_34 = arith.constant 0 : index
    %c0_35 = arith.constant 0 : index
    %75 = vector.load %arg1[%74, %c0_34, %c0_35] : memref<4x16x1024xf32, #tpu.memory_space<vmem>>, vector<1x16x1024xf32>
    %76 = vector.shape_cast %75 : vector<1x16x1024xf32> to vector<16x1024xf32>
    %c0_36 = arith.constant 0 : index
    %c0_37 = arith.constant 0 : index
    %77 = vector.load %arg6[%c0_36, %c0_37] : memref<16x256xf32, #tpu.memory_space<vmem>>, vector<16x256xf32>
    %78 = arith.truncf %77 : vector<16x256xf32> to vector<16x256xbf16>
    %c0_38 = arith.constant 0 : index
    %c0_39 = arith.constant 0 : index
    %79 = vector.load %arg2[%c0_38, %c0_39] : memref<256x1024xbf16, #tpu.memory_space<vmem>>, vector<256x1024xbf16>
    %cst_40 = arith.constant dense<0.000000e+00> : vector<16x1024xf32>
    %80 = tpu.matmul %78, %79, %cst_40 {dimension_numbers = #tpu.dot_dimension_numbers<[1], [0], [0], [1], [0, 0, 1, 1], [], []>} : vector<16x256xbf16>, vector<256x1024xbf16>, vector<16x1024xf32> -> vector<16x1024xf32>
    %81 = arith.addf %76, %80 : vector<16x1024xf32>
    %82 = vector.extract_strided_slice %81 {offsets = [0, 0], sizes = [16, 256], strides = [1, 1]} : vector<16x1024xf32> to vector<16x256xf32>
    %83 = arith.negf %82 : vector<16x256xf32>
    %84 = math.exp %83 : vector<16x256xf32>
    %cst_41 = arith.constant 1.000000e+00 : f32
    %85 = vector.broadcast %cst_41 : f32 to vector<16x256xf32>
    %86 = arith.addf %85, %84 : vector<16x256xf32>
    %87 = arith.divf %85, %86 : vector<16x256xf32>
    %88 = vector.extract_strided_slice %81 {offsets = [0, 256], sizes = [16, 256], strides = [1, 1]} : vector<16x1024xf32> to vector<16x256xf32>
    %89 = arith.negf %88 : vector<16x256xf32>
    %90 = math.exp %89 : vector<16x256xf32>
    %cst_42 = arith.constant 1.000000e+00 : f32
    %91 = vector.broadcast %cst_42 : f32 to vector<16x256xf32>
    %92 = arith.addf %91, %90 : vector<16x256xf32>
    %93 = arith.divf %91, %92 : vector<16x256xf32>
    %94 = vector.extract_strided_slice %81 {offsets = [0, 512], sizes = [16, 256], strides = [1, 1]} : vector<16x1024xf32> to vector<16x256xf32>
    %95 = math.tanh %94 : vector<16x256xf32>
    %96 = vector.extract_strided_slice %81 {offsets = [0, 768], sizes = [16, 256], strides = [1, 1]} : vector<16x1024xf32> to vector<16x256xf32>
    %97 = arith.negf %96 : vector<16x256xf32>
    %98 = math.exp %97 : vector<16x256xf32>
    %cst_43 = arith.constant 1.000000e+00 : f32
    %99 = vector.broadcast %cst_43 : f32 to vector<16x256xf32>
    %100 = arith.addf %99, %98 : vector<16x256xf32>
    %101 = arith.divf %99, %100 : vector<16x256xf32>
    %c0_44 = arith.constant 0 : index
    %c0_45 = arith.constant 0 : index
    %102 = vector.load %arg7[%c0_44, %c0_45] : memref<16x256xf32, #tpu.memory_space<vmem>>, vector<16x256xf32>
    %103 = arith.mulf %93, %102 : vector<16x256xf32>
    %104 = arith.mulf %87, %95 : vector<16x256xf32>
    %105 = arith.addf %103, %104 : vector<16x256xf32>
    %106 = math.tanh %105 : vector<16x256xf32>
    %107 = arith.mulf %101, %106 : vector<16x256xf32>
    %c0_46 = arith.constant 0 : index
    %c0_47 = arith.constant 0 : index
    %108 = vector.load %arg7[%c0_46, %c0_47] : memref<16x256xf32, #tpu.memory_space<vmem>>, vector<16x256xf32>
    tpu.vector_store %arg7[%c0_46, %c0_47], %105 {strides = array<i32>} : memref<16x256xf32, #tpu.memory_space<vmem>>, vector<16x256xf32>,
    %c0_48 = arith.constant 0 : index
    %c0_49 = arith.constant 0 : index
    %109 = vector.load %arg6[%c0_48, %c0_49] : memref<16x256xf32, #tpu.memory_space<vmem>>, vector<16x256xf32>
    tpu.vector_store %arg6[%c0_48, %c0_49], %107 {strides = array<i32>} : memref<16x256xf32, #tpu.memory_space<vmem>>, vector<16x256xf32>,
    %110 = arith.truncf %107 : vector<16x256xf32> to vector<16x256xbf16>
    %cst_50 = arith.constant dense<0.000000e+00> : vector<16x128xf32>
    %111 = tpu.matmul %110, %0, %cst_50 {dimension_numbers = #tpu.dot_dimension_numbers<[1], [0], [0], [1], [0, 0, 1, 1], [], []>} : vector<16x256xbf16>, vector<256x128xbf16>, vector<16x128xf32> -> vector<16x128xf32>
    %112 = vector.broadcast %1 : vector<1x128xf32> to vector<16x128xf32>
    %113 = arith.addf %111, %112 : vector<16x128xf32>
    %114 = arith.index_cast %c2_i32 : i32 to index
    %c0_51 = arith.constant 0 : index
    %c0_52 = arith.constant 0 : index
    %115 = vector.load %arg5[%114, %c0_51, %c0_52] : memref<4x16x128xf32, #tpu.memory_space<vmem>>, vector<1x16x128xf32>
    %116 = vector.shape_cast %115 : vector<1x16x128xf32> to vector<16x128xf32>
    %117 = vector.shape_cast %113 : vector<16x128xf32> to vector<1x16x128xf32>
    tpu.vector_store %arg5[%114, %c0_51, %c0_52], %117 {strides = array<i32>} : memref<4x16x128xf32, #tpu.memory_space<vmem>>, vector<1x16x128xf32>,
    %c3_i32 = arith.constant 3 : i32
    %118 = arith.index_cast %c3_i32 : i32 to index
    %c0_53 = arith.constant 0 : index
    %c0_54 = arith.constant 0 : index
    %119 = vector.load %arg1[%118, %c0_53, %c0_54] : memref<4x16x1024xf32, #tpu.memory_space<vmem>>, vector<1x16x1024xf32>
    %120 = vector.shape_cast %119 : vector<1x16x1024xf32> to vector<16x1024xf32>
    %c0_55 = arith.constant 0 : index
    %c0_56 = arith.constant 0 : index
    %121 = vector.load %arg6[%c0_55, %c0_56] : memref<16x256xf32, #tpu.memory_space<vmem>>, vector<16x256xf32>
    %122 = arith.truncf %121 : vector<16x256xf32> to vector<16x256xbf16>
    %c0_57 = arith.constant 0 : index
    %c0_58 = arith.constant 0 : index
    %123 = vector.load %arg2[%c0_57, %c0_58] : memref<256x1024xbf16, #tpu.memory_space<vmem>>, vector<256x1024xbf16>
    %cst_59 = arith.constant dense<0.000000e+00> : vector<16x1024xf32>
    %124 = tpu.matmul %122, %123, %cst_59 {dimension_numbers = #tpu.dot_dimension_numbers<[1], [0], [0], [1], [0, 0, 1, 1], [], []>} : vector<16x256xbf16>, vector<256x1024xbf16>, vector<16x1024xf32> -> vector<16x1024xf32>
    %125 = arith.addf %120, %124 : vector<16x1024xf32>
    %126 = vector.extract_strided_slice %125 {offsets = [0, 0], sizes = [16, 256], strides = [1, 1]} : vector<16x1024xf32> to vector<16x256xf32>
    %127 = arith.negf %126 : vector<16x256xf32>
    %128 = math.exp %127 : vector<16x256xf32>
    %cst_60 = arith.constant 1.000000e+00 : f32
    %129 = vector.broadcast %cst_60 : f32 to vector<16x256xf32>
    %130 = arith.addf %129, %128 : vector<16x256xf32>
    %131 = arith.divf %129, %130 : vector<16x256xf32>
    %132 = vector.extract_strided_slice %125 {offsets = [0, 256], sizes = [16, 256], strides = [1, 1]} : vector<16x1024xf32> to vector<16x256xf32>
    %133 = arith.negf %132 : vector<16x256xf32>
    %134 = math.exp %133 : vector<16x256xf32>
    %cst_61 = arith.constant 1.000000e+00 : f32
    %135 = vector.broadcast %cst_61 : f32 to vector<16x256xf32>
    %136 = arith.addf %135, %134 : vector<16x256xf32>
    %137 = arith.divf %135, %136 : vector<16x256xf32>
    %138 = vector.extract_strided_slice %125 {offsets = [0, 512], sizes = [16, 256], strides = [1, 1]} : vector<16x1024xf32> to vector<16x256xf32>
    %139 = math.tanh %138 : vector<16x256xf32>
    %140 = vector.extract_strided_slice %125 {offsets = [0, 768], sizes = [16, 256], strides = [1, 1]} : vector<16x1024xf32> to vector<16x256xf32>
    %141 = arith.negf %140 : vector<16x256xf32>
    %142 = math.exp %141 : vector<16x256xf32>
    %cst_62 = arith.constant 1.000000e+00 : f32
    %143 = vector.broadcast %cst_62 : f32 to vector<16x256xf32>
    %144 = arith.addf %143, %142 : vector<16x256xf32>
    %145 = arith.divf %143, %144 : vector<16x256xf32>
    %c0_63 = arith.constant 0 : index
    %c0_64 = arith.constant 0 : index
    %146 = vector.load %arg7[%c0_63, %c0_64] : memref<16x256xf32, #tpu.memory_space<vmem>>, vector<16x256xf32>
    %147 = arith.mulf %137, %146 : vector<16x256xf32>
    %148 = arith.mulf %131, %139 : vector<16x256xf32>
    %149 = arith.addf %147, %148 : vector<16x256xf32>
    %150 = math.tanh %149 : vector<16x256xf32>
    %151 = arith.mulf %145, %150 : vector<16x256xf32>
    %c0_65 = arith.constant 0 : index
    %c0_66 = arith.constant 0 : index
    %152 = vector.load %arg7[%c0_65, %c0_66] : memref<16x256xf32, #tpu.memory_space<vmem>>, vector<16x256xf32>
    tpu.vector_store %arg7[%c0_65, %c0_66], %149 {strides = array<i32>} : memref<16x256xf32, #tpu.memory_space<vmem>>, vector<16x256xf32>,
    %c0_67 = arith.constant 0 : index
    %c0_68 = arith.constant 0 : index
    %153 = vector.load %arg6[%c0_67, %c0_68] : memref<16x256xf32, #tpu.memory_space<vmem>>, vector<16x256xf32>
    tpu.vector_store %arg6[%c0_67, %c0_68], %151 {strides = array<i32>} : memref<16x256xf32, #tpu.memory_space<vmem>>, vector<16x256xf32>,
    %154 = arith.truncf %151 : vector<16x256xf32> to vector<16x256xbf16>
    %cst_69 = arith.constant dense<0.000000e+00> : vector<16x128xf32>
    %155 = tpu.matmul %154, %0, %cst_69 {dimension_numbers = #tpu.dot_dimension_numbers<[1], [0], [0], [1], [0, 0, 1, 1], [], []>} : vector<16x256xbf16>, vector<256x128xbf16>, vector<16x128xf32> -> vector<16x128xf32>
    %156 = vector.broadcast %1 : vector<1x128xf32> to vector<16x128xf32>
    %157 = arith.addf %155, %156 : vector<16x128xf32>
    %158 = arith.index_cast %c3_i32 : i32 to index
    %c0_70 = arith.constant 0 : index
    %c0_71 = arith.constant 0 : index
    %159 = vector.load %arg5[%158, %c0_70, %c0_71] : memref<4x16x128xf32, #tpu.memory_space<vmem>>, vector<1x16x128xf32>
    %160 = vector.shape_cast %159 : vector<1x16x128xf32> to vector<16x128xf32>
    %161 = vector.shape_cast %157 : vector<16x128xf32> to vector<1x16x128xf32>
    tpu.vector_store %arg5[%158, %c0_70, %c0_71], %161 {strides = array<i32>} : memref<4x16x128xf32, #tpu.memory_space<vmem>>, vector<1x16x128xf32>,
    %c3_i32_72 = arith.constant 3 : i32
    return
  }
  func.func @transform_0(%arg0: i32) -> (i32, i32, i32) {
    %c0_i32 = arith.constant 0 : i32
    %c0_i32_0 = arith.constant 0 : i32
    %c0_i32_1 = arith.constant 0 : i32
    %c0_i32_2 = arith.constant 0 : i32
    return %c0_i32, %c0_i32_0, %c0_i32_1 : i32, i32, i32
  }
  func.func @transform_1(%arg0: i32) -> (i32, i32) {
    %c0_i32 = arith.constant 0 : i32
    %c0_i32_0 = arith.constant 0 : i32
    %c0_i32_1 = arith.constant 0 : i32
    return %c0_i32, %c0_i32_0 : i32, i32
  }
  func.func @transform_2(%arg0: i32) -> (i32, i32) {
    %c0_i32 = arith.constant 0 : i32
    %c0_i32_0 = arith.constant 0 : i32
    %c0_i32_1 = arith.constant 0 : i32
    return %c0_i32, %c0_i32_0 : i32, i32
  }
  func.func @transform_3(%arg0: i32) -> (i32, i32) {
    %c0_i32 = arith.constant 0 : i32
    %c0_i32_0 = arith.constant 0 : i32
    %c0_i32_1 = arith.constant 0 : i32
    return %c0_i32, %c0_i32_0 : i32, i32
  }
  func.func @transform_4(%arg0: i32) -> (i32, i32, i32) {
    %c0_i32 = arith.constant 0 : i32
    %c0_i32_0 = arith.constant 0 : i32
    %c0_i32_1 = arith.constant 0 : i32
    %c0_i32_2 = arith.constant 0 : i32
    return %c0_i32, %c0_i32_0, %c0_i32_1 : i32, i32, i32
  }
}

</mosaic_0001>

<llo_original>
// kernel: vgg_classifier_forward.1
$region0: #{vgg_classifier_forward.1}
  #allocation0 [shape = 'u32[]', space=smem, size = 0x4, offset = 0x4, fixed_abs, tag = 'smem constant byte address 0x4 - core index']
  #allocation1 [shape = 'u32[144,128]{1,0:T(1,128)}', space=vmem, size = 0x12000, scoped, tag = 'internal scratch']
  #allocation2 [shape = 'f32[16,256]{1,0:T(8,128)}', space=vmem, size = 0x4000, scoped, tag = 'scratch operand']
  #allocation3 [shape = 'f32[16,256]{1,0:T(8,128)}', space=vmem, size = 0x4000, scoped, tag = 'scratch operand']
  %s0 = inlined_call_operand.vmem [shape: f32[4,16,1024], index: 0, kind: input, shape index: {}]
  %s1 = inlined_call_operand.vmem [shape: bf16[256,1024], index: 1, kind: input, shape index: {}]
  %s2 = inlined_call_operand.vmem [shape: bf16[256,128], index: 2, kind: input, shape index: {}]
  %s3 = inlined_call_operand.vmem [shape: f32[1,128], index: 3, kind: input, shape index: {}]
  %s4 = inlined_call_operand.vmem [shape: f32[4,16,128], index: 4, kind: output, shape index: {}]
  %s5 = sld [smem:[#allocation0]]
  $region26: #{vgg_classifier_forward.1} parent=0
    _
  %s7 = ssub.s32 1, %s5
  %s8 = scalar_select 0, %s7, %s5
  // Predicated region
  $region2: #{vgg_classifier_forward.1} parent=0 // pred_check
    _
  $region3: #{vgg_classifier_forward.1} parent=0 // pred_check_branch
    %10 = sbr.rel (0) target = $region5
  $region4: #{vgg_classifier_forward.1} parent=0 // pred_region
    _
  $region5: #{vgg_classifier_forward.1} parent=0 // pred_fallthru
    _
  // Predicated region
  $region6: #{vgg_classifier_forward.1} parent=0 // pred_check
    _
  $region7: #{vgg_classifier_forward.1} parent=0 // pred_check_branch
    %12 = sbr.rel (0) target = $region9
  $region8: #{vgg_classifier_forward.1} parent=0 // pred_region
    _
  $region9: #{vgg_classifier_forward.1} parent=0 // pred_fallthru
    _
  // Predicated region
  $region10: #{vgg_classifier_forward.1} parent=0 // pred_check
    _
  $region11: #{vgg_classifier_forward.1} parent=0 // pred_check_branch
    %14 = sbr.rel (0) target = $region13
  $region12: #{vgg_classifier_forward.1} parent=0 // pred_region
    _
  $region13: #{vgg_classifier_forward.1} parent=0 // pred_fallthru
    _
  // Predicated region
  $region14: #{vgg_classifier_forward.1} parent=0 // pred_check
    _
  $region15: #{vgg_classifier_forward.1} parent=0 // pred_check_branch
    %16 = sbr.rel (0) target = $region17
  $region16: #{vgg_classifier_forward.1} parent=0 // pred_region
    _
  $region17: #{vgg_classifier_forward.1} parent=0 // pred_fallthru
    _
  %v18 = vld [vmem:[%s2] sm:$0xf]
  %v19 = vld [vmem:[%s2 + $0x4] sm:$0xf]
  %v20 = vld [vmem:[%s2 + $0x8] sm:$0xf]
  %v21 = vld [vmem:[%s2 + $0xc] sm:$0xf]
  %v22 = vld [vmem:[%s2 + $0x10] sm:$0xf]
  %v23 = vld [vmem:[%s2 + $0x14] sm:$0xf]
  %v24 = vld [vmem:[%s2 + $0x18] sm:$0xf]
  %v25 = vld [vmem:[%s2 + $0x1c] sm:$0xf]
  %v26 = vld [vmem:[%s2 + $0x20] sm:$0xf]
  %v27 = vld [vmem:[%s2 + $0x24] sm:$0xf]
  %v28 = vld [vmem:[%s2 + $0x28] sm:$0xf]
  %v29 = vld [vmem:[%s2 + $0x2c] sm:$0xf]
  %v30 = vld [vmem:[%s2 + $0x30] sm:$0xf]
  %v31 = vld [vmem:[%s2 + $0x34] sm:$0xf]
  %v32 = vld [vmem:[%s2 + $0x38] sm:$0xf]
  %v33 = vld [vmem:[%s2 + $0x3c] sm:$0xf]
  %v34 = vld [vmem:[%s2 + $0x40] sm:$0xf]
  %v35 = vld [vmem:[%s2 + $0x44] sm:$0xf]
  %v36 = vld [vmem:[%s2 + $0x48] sm:$0xf]
  %v37 = vld [vmem:[%s2 + $0x4c] sm:$0xf]
  %v38 = vld [vmem:[%s2 + $0x50] sm:$0xf]
  %v39 = vld [vmem:[%s2 + $0x54] sm:$0xf]
  %v40 = vld [vmem:[%s2 + $0x58] sm:$0xf]
  %v41 = vld [vmem:[%s2 + $0x5c] sm:$0xf]
  %v42 = vld [vmem:[%s2 + $0x60] sm:$0xf]
  %v43 = vld [vmem:[%s2 + $0x64] sm:$0xf]
  %v44 = vld [vmem:[%s2 + $0x68] sm:$0xf]
  %v45 = vld [vmem:[%s2 + $0x6c] sm:$0xf]
  %v46 = vld [vmem:[%s2 + $0x70] sm:$0xf]
  %v47 = vld [vmem:[%s2 + $0x74] sm:$0xf]
  %v48 = vld [vmem:[%s2 + $0x78] sm:$0xf]
  %v49 = vld [vmem:[%s2 + $0x7c] sm:$0xf]
  %v50 = vld [vmem:[%s3] sm:$0x1]
  %v51 = vld [vmem:[%s0] sm:$0xff]
  %v52 = vld [vmem:[%s0 + $0x8] sm:$0xff]
  %v53 = vld [vmem:[%s0 + $0x20] sm:$0xff]
  %v54 = vld [vmem:[%s0 + $0x28] sm:$0xff]
  %v55 = vld [vmem:[%s0 + $0x30] sm:$0xff]
  %v56 = vld [vmem:[%s0 + $0x38] sm:$0xff]
  %v57 = vld [vmem:[%s0 + $0x40] sm:$0xff]
  %v58 = vld [vmem:[%s0 + $0x48] sm:$0xff]
  %v59 = vld [vmem:[%s0 + $0x60] sm:$0xff]
  %v60 = vld [vmem:[%s0 + $0x68] sm:$0xff]
  %v61 = vld [vmem:[%s0 + $0x70] sm:$0xff]
  %v62 = vld [vmem:[%s0 + $0x78] sm:$0xff]
  %v63 = vxor.u32 %v51, 2147483648
  %v64 = vxor.u32 %v52, 2147483648
  %v65 = vxor.u32 %v57, 2147483648
  %v66 = vxor.u32 %v58, 2147483648
  %v67 = vmul.f32 %v63, 1.442695
  %v68 = vpow.pop %v67
  %v69 = vmul.f32 %v64, 1.442695
  %v70 = vpow.pop %v69
  %v71 = vmul.f32 %v65, 1.442695
  %v72 = vpow.pop %v71
  %v73 = vmul.f32 %v66, 1.442695
  %v74 = vpow.pop %v73
  %v75 = vadd.f32 %v68, 1.0
  %v76 = vadd.f32 %v70, 1.0
  %v77 = vadd.f32 %v72, 1.0
  %v78 = vadd.f32 %v74, 1.0
  %v79 = vrcp.pop %v75
  %v80 = vmul.f32 1.0, %v79
  %v81 = vrcp.pop %v76
  %v82 = vmul.f32 1.0, %v81
  %v83 = vrcp.pop %v77
  %v84 = vmul.f32 1.0, %v83
  %v85 = vrcp.pop %v78
  %v86 = vmul.f32 1.0, %v85
  %v87 = vtanh.pop %v53
  %v88 = vtanh.pop %v54
  %v89 = vtanh.pop %v59
  %v90 = vtanh.pop %v60
  %v91 = vxor.u32 %v55, 2147483648
  %v92 = vxor.u32 %v56, 2147483648
  %v93 = vxor.u32 %v61, 2147483648
  %v94 = vxor.u32 %v62, 2147483648
  %v95 = vmul.f32 %v91, 1.442695
  %v96 = vpow.pop %v95
  %v97 = vmul.f32 %v92, 1.442695
  %v98 = vpow.pop %v97
  %v99 = vmul.f32 %v93, 1.442695
  %v100 = vpow.pop %v99
  %v101 = vmul.f32 %v94, 1.442695
  %v102 = vpow.pop %v101
  %v103 = vadd.f32 %v96, 1.0
  %v104 = vadd.f32 %v98, 1.0
  %v105 = vadd.f32 %v100, 1.0
  %v106 = vadd.f32 %v102, 1.0
  %v107 = vrcp.pop %v103
  %v108 = vmul.f32 1.0, %v107
  %v109 = vrcp.pop %v104
  %v110 = vmul.f32 1.0, %v109
  %v111 = vrcp.pop %v105
  %v112 = vmul.f32 1.0, %v111
  %v113 = vrcp.pop %v106
  %v114 = vmul.f32 1.0, %v113
  %v115 = vmul.f32 %v80, %v87
  %v116 = vmul.f32 %v82, %v88
  %v117 = vmul.f32 %v84, %v89
  %v118 = vmul.f32 %v86, %v90
  %v119 = vtanh.pop %v115
  %v120 = vtanh.pop %v116
  %v121 = vtanh.pop %v117
  %v122 = vtanh.pop %v118
  %v123 = vmul.f32 %v108, %v119
  %v124 = vmul.f32 %v110, %v120
  %v125 = vmul.f32 %v112, %v121
  %v126 = vmul.f32 %v114, %v122
  %127 = vst [vmem:[#allocation3] sm:$0xff] %v115
  %128 = vst [vmem:[#allocation3 + $0x8] sm:$0xff] %v116
  %129 = vst [vmem:[#allocation3 + $0x10] sm:$0xff] %v117
  %130 = vst [vmem:[#allocation3 + $0x18] sm:$0xff] %v118
  %131 = vst [vmem:[#allocation2] sm:$0xff] %v123
  %132 = vst [vmem:[#allocation2 + $0x8] sm:$0xff] %v124
  %133 = vst [vmem:[#allocation2 + $0x10] sm:$0xff] %v125
  %134 = vst [vmem:[#allocation2 + $0x18] sm:$0xff] %v126
  %v135 = vpack.c.bf16 %v125, %v123
  %v136 = vpack.c.bf16 %v126, %v124
  %v138 = vlaneseq
  %v139 = vshrl.u32 %v138, 7
  %v140 = vsub.s32 0, %v139
  %v141 = vrot.slane %v50, %v140
  %v175 = vunpack.c.l.b16 %v18
  %v176 = vunpack.c.l.b16 %v19
  %v177 = vunpack.c.l.b16 %v20
  %v178 = vunpack.c.l.b16 %v21
  %v179 = vunpack.c.l.b16 %v22
  %v180 = vunpack.c.l.b16 %v23
  %v181 = vunpack.c.l.b16 %v24
  %v182 = vunpack.c.l.b16 %v25
  %v183 = vunpack.c.l.b16 %v26
  %v184 = vunpack.c.l.b16 %v27
  %v185 = vunpack.c.l.b16 %v28
  %v186 = vunpack.c.l.b16 %v29
  %v187 = vunpack.c.l.b16 %v30
  %v188 = vunpack.c.l.b16 %v31
  %v189 = vunpack.c.l.b16 %v32
  %v190 = vunpack.c.l.b16 %v33
  %v191 = vunpack.c.l.b16 %v34
  %v192 = vunpack.c.l.b16 %v35
  %v193 = vunpack.c.l.b16 %v36
  %v194 = vunpack.c.l.b16 %v37
  %v195 = vunpack.c.l.b16 %v38
  %v196 = vunpack.c.l.b16 %v39
  %v197 = vunpack.c.l.b16 %v40
  %v198 = vunpack.c.l.b16 %v41
  %v199 = vunpack.c.l.b16 %v42
  %v200 = vunpack.c.l.b16 %v43
  %v201 = vunpack.c.l.b16 %v44
  %v202 = vunpack.c.l.b16 %v45
  %v203 = vunpack.c.l.b16 %v46
  %v204 = vunpack.c.l.b16 %v47
  %v205 = vunpack.c.l.b16 %v48
  %v206 = vunpack.c.l.b16 %v49
  %v207 = vpack.c.b16 %v176, %v175
  %v208 = vpack.c.b16 %v178, %v177
  %v209 = vpack.c.b16 %v180, %v179
  %v210 = vpack.c.b16 %v182, %v181
  %v211 = vpack.c.b16 %v184, %v183
  %v212 = vpack.c.b16 %v186, %v185
  %v213 = vpack.c.b16 %v188, %v187
  %v214 = vpack.c.b16 %v190, %v189
  %v215 = vpack.c.b16 %v192, %v191
  %v216 = vpack.c.b16 %v194, %v193
  %v217 = vpack.c.b16 %v196, %v195
  %v218 = vpack.c.b16 %v198, %v197
  %v219 = vpack.c.b16 %v200, %v199
  %v220 = vpack.c.b16 %v202, %v201
  %v221 = vpack.c.b16 %v204, %v203
  %v222 = vpack.c.b16 %v206, %v205
  %239 = vmatprep.subr.bf16.mxu0 0
  %240 = vmatpush1.bf16.msra.mxu0 %v214
  %241 = vmatprep.subr.bf16.mxu0 0
  %242 = vmatpush1.bf16.msra.mxu0 %v213
  %243 = vmatprep.subr.bf16.mxu0 0
  %244 = vmatpush1.bf16.msra.mxu0 %v212
  %245 = vmatprep.subr.bf16.mxu0 0
  %246 = vmatpush1.bf16.msra.mxu0 %v211
  %247 = vmatprep.subr.bf16.mxu0 0
  %248 = vmatpush1.bf16.msra.mxu0 %v210
  %249 = vmatprep.subr.bf16.mxu0 0
  %250 = vmatpush1.bf16.msra.mxu0 %v209
  %251 = vmatprep.subr.bf16.mxu0 0
  %252 = vmatpush1.bf16.msra.mxu0 %v208
  %253 = vmatprep.subr.bf16.mxu0 0
  %254 = vmatpush1.bf16.msra.mxu0 %v207
  %255 = vmatprep.subr.bf16.mxu0 0
  %256 = vmatpush2.bf16.msra.mxu0 %v222
  %257 = vmatprep.subr.bf16.mxu0 0
  %258 = vmatpush2.bf16.msra.mxu0 %v221
  %259 = vmatprep.subr.bf16.mxu0 0
  %260 = vmatpush2.bf16.msra.mxu0 %v220
  %261 = vmatprep.subr.bf16.mxu0 0
  %262 = vmatpush2.bf16.msra.mxu0 %v219
  %263 = vmatprep.subr.bf16.mxu0 0
  %264 = vmatpush2.bf16.msra.mxu0 %v218
  %265 = vmatprep.subr.bf16.mxu0 0
  %266 = vmatpush2.bf16.msra.mxu0 %v217
  %267 = vmatprep.subr.bf16.mxu0 0
  %268 = vmatpush2.bf16.msra.mxu0 %v216
  %269 = vmatprep.subr.bf16.mxu0 0
  %270 = vmatpush2.bf16.msra.mxu0 %v215
  %271 = vmatprep.mubr.bf16.mxu0 %v136
  %272 = vmatmul.mubr.bf16.gmra.mxu0 %v135
  %v273 = vpop.f32.mrf.mxu0
  %v274 = vadd.f32 %v141, %v273
  %v275 = vpop.f32.mrf.mxu0
  %v276 = vpop.f32.mrf.mxu0
  %v277 = vadd.f32 %v141, %v276
  %v278 = vpop.f32.mrf.mxu0
  %279 = vdwg.mxu0
  %280 = vst [vmem:[%s4] sm:$0xff] %v274
  %281 = vst [vmem:[%s4 + $0x8] sm:$0xff] %v277
  %s282 = scalar_lea.vmem %s0, 128
  %v283 = vld [vmem:[%s282] sm:$0xff]
  %v284 = vld [vmem:[%s282 + $0x8] sm:$0xff]
  %v285 = vld [vmem:[%s282 + $0x10] sm:$0xff]
  %v286 = vld [vmem:[%s282 + $0x18] sm:$0xff]
  %v287 = vld [vmem:[%s282 + $0x20] sm:$0xff]
  %v288 = vld [vmem:[%s282 + $0x28] sm:$0xff]
  %v289 = vld [vmem:[%s282 + $0x30] sm:$0xff]
  %v290 = vld [vmem:[%s282 + $0x38] sm:$0xff]
  %v291 = vld [vmem:[%s282 + $0x40] sm:$0xff]
  %v292 = vld [vmem:[%s282 + $0x48] sm:$0xff]
  %v293 = vld [vmem:[%s282 + $0x50] sm:$0xff]
  %v294 = vld [vmem:[%s282 + $0x58] sm:$0xff]
  %v295 = vld [vmem:[%s282 + $0x60] sm:$0xff]
  %v296 = vld [vmem:[%s282 + $0x68] sm:$0xff]
  %v297 = vld [vmem:[%s282 + $0x70] sm:$0xff]
  %v298 = vld [vmem:[%s282 + $0x78] sm:$0xff]
  %v299 = vld [vmem:[#allocation2] sm:$0xff]
  %v300 = vld [vmem:[#allocation2 + $0x8] sm:$0xff]
  %v301 = vld [vmem:[#allocation2 + $0x10] sm:$0xff]
  %v302 = vld [vmem:[#allocation2 + $0x18] sm:$0xff]
  %v303 = vpack.c.bf16 %v301, %v299
  %v304 = vpack.c.bf16 %v302, %v300
  %v305 = vld [vmem:[%s1] sm:$0xff]
  %v306 = vld [vmem:[%s1 + $0x8] sm:$0xff]
  %v307 = vld [vmem:[%s1 + $0x10] sm:$0xff]
  %v308 = vld [vmem:[%s1 + $0x18] sm:$0xff]
  %v309 = vld [vmem:[%s1 + $0x20] sm:$0xff]
  %v310 = vld [vmem:[%s1 + $0x28] sm:$0xff]
  %v311 = vld [vmem:[%s1 + $0x30] sm:$0xff]
  %v312 = vld [vmem:[%s1 + $0x38] sm:$0xff]
  %v313 = vld [vmem:[%s1 + $0x40] sm:$0xff]
  %v314 = vld [vmem:[%s1 + $0x48] sm:$0xff]
  %v315 = vld [vmem:[%s1 + $0x50] sm:$0xff]
  %v316 = vld [vmem:[%s1 + $0x58] sm:$0xff]
  %v317 = vld [vmem:[%s1 + $0x60] sm:$0xff]
  %v318 = vld [vmem:[%s1 + $0x68] sm:$0xff]
  %v319 = vld [vmem:[%s1 + $0x70] sm:$0xff]
  %v320 = vld [vmem:[%s1 + $0x78] sm:$0xff]
  %v321 = vld [vmem:[%s1 + $0x80] sm:$0xff]
  %v322 = vld [vmem:[%s1 + $0x88] sm:$0xff]
  %v323 = vld [vmem:[%s1 + $0x90] sm:$0xff]
  %v324 = vld [vmem:[%s1 + $0x98] sm:$0xff]
  %v325 = vld [vmem:[%s1 + $0xa0] sm:$0xff]
  %v326 = vld [vmem:[%s1 + $0xa8] sm:$0xff]
  %v327 = vld [vmem:[%s1 + $0xb0] sm:$0xff]
  %v328 = vld [vmem:[%s1 + $0xb8] sm:$0xff]
  %v329 = vld [vmem:[%s1 + $0xc0] sm:$0xff]
  %v330 = vld [vmem:[%s1 + $0xc8] sm:$0xff]
  %v331 = vld [vmem:[%s1 + $0xd0] sm:$0xff]
  %v332 = vld [vmem:[%s1 + $0xd8] sm:$0xff]
  %v333 = vld [vmem:[%s1 + $0xe0] sm:$0xff]
  %v334 = vld [vmem:[%s1 + $0xe8] sm:$0xff]
  %v335 = vld [vmem:[%s1 + $0xf0] sm:$0xff]
  %v336 = vld [vmem:[%s1 + $0xf8] sm:$0xff]
  %v337 = vld [vmem:[%s1 + $0x100] sm:$0xff]
  %v338 = vld [vmem:[%s1 + $0x108] sm:$0xff]
  %v339 = vld [vmem:[%s1 + $0x110] sm:$0xff]
  %v340 = vld [vmem:[%s1 + $0x118] sm:$0xff]
  %v341 = vld [vmem:[%s1 + $0x120] sm:$0xff]
  %v342 = vld [vmem:[%s1 + $0x128] sm:$0xff]
  %v343 = vld [vmem:[%s1 + $0x130] sm:$0xff]
  %v344 = vld [vmem:[%s1 + $0x138] sm:$0xff]
  %v345 = vld [vmem:[%s1 + $0x140] sm:$0xff]
  %v346 = vld [vmem:[%s1 + $0x148] sm:$0xff]
  %v347 = vld [vmem:[%s1 + $0x150] sm:$0xff]
  %v348 = vld [vmem:[%s1 + $0x158] sm:$0xff]
  %v349 = vld [vmem:[%s1 + $0x160] sm:$0xff]
  %v350 = vld [vmem:[%s1 + $0x168] sm:$0xff]
  %v351 = vld [vmem:[%s1 + $0x170] sm:$0xff]
  %v352 = vld [vmem:[%s1 + $0x178] sm:$0xff]
  %v353 = vld [vmem:[%s1 + $0x180] sm:$0xff]
  %v354 = vld [vmem:[%s1 + $0x188] sm:$0xff]
  %v355 = vld [vmem:[%s1 + $0x190] sm:$0xff]
  %v356 = vld [vmem:[%s1 + $0x198] sm:$0xff]
  %v357 = vld [vmem:[%s1 + $0x1a0] sm:$0xff]
  %v358 = vld [vmem:[%s1 + $0x1a8] sm:$0xff]
  %v359 = vld [vmem:[%s1 + $0x1b0] sm:$0xff]
  %v360 = vld [vmem:[%s1 + $0x1b8] sm:$0xff]
  %v361 = vld [vmem:[%s1 + $0x1c0] sm:$0xff]
  %v362 = vld [vmem:[%s1 + $0x1c8] sm:$0xff]
  %v363 = vld [vmem:[%s1 + $0x1d0] sm:$0xff]
  %v364 = vld [vmem:[%s1 + $0x1d8] sm:$0xff]
  %v365 = vld [vmem:[%s1 + $0x1e0] sm:$0xff]
  %v366 = vld [vmem:[%s1 + $0x1e8] sm:$0xff]
  %v367 = vld [vmem:[%s1 + $0x1f0] sm:$0xff]
  %v368 = vld [vmem:[%s1 + $0x1f8] sm:$0xff]
  %v369 = vld [vmem:[%s1 + $0x200] sm:$0xff]
  %v370 = vld [vmem:[%s1 + $0x208] sm:$0xff]
  %v371 = vld [vmem:[%s1 + $0x210] sm:$0xff]
  %v372 = vld [vmem:[%s1 + $0x218] sm:$0xff]
  %v373 = vld [vmem:[%s1 + $0x220] sm:$0xff]
  %v374 = vld [vmem:[%s1 + $0x228] sm:$0xff]
  %v375 = vld [vmem:[%s1 + $0x230] sm:$0xff]
  %v376 = vld [vmem:[%s1 + $0x238] sm:$0xff]
  %v377 = vld [vmem:[%s1 + $0x240] sm:$0xff]
  %v378 = vld [vmem:[%s1 + $0x248] sm:$0xff]
  %v379 = vld [vmem:[%s1 + $0x250] sm:$0xff]
  %v380 = vld [vmem:[%s1 + $0x258] sm:$0xff]
  %v381 = vld [vmem:[%s1 + $0x260] sm:$0xff]
  %v382 = vld [vmem:[%s1 + $0x268] sm:$0xff]
  %v383 = vld [vmem:[%s1 + $0x270] sm:$0xff]
  %v384 = vld [vmem:[%s1 + $0x278] sm:$0xff]
  %v385 = vld [vmem:[%s1 + $0x280] sm:$0xff]
  %v386 = vld [vmem:[%s1 + $0x288] sm:$0xff]
  %v387 = vld [vmem:[%s1 + $0x290] sm:$0xff]
  %v388 = vld [vmem:[%s1 + $0x298] sm:$0xff]
  %v389 = vld [vmem:[%s1 + $0x2a0] sm:$0xff]
  %v390 = vld [vmem:[%s1 + $0x2a8] sm:$0xff]
  %v391 = vld [vmem:[%s1 + $0x2b0] sm:$0xff]
  %v392 = vld [vmem:[%s1 + $0x2b8] sm:$0xff]
  %v393 = vld [vmem:[%s1 + $0x2c0] sm:$0xff]
  %v394 = vld [vmem:[%s1 + $0x2c8] sm:$0xff]
  %v395 = vld [vmem:[%s1 + $0x2d0] sm:$0xff]
  %v396 = vld [vmem:[%s1 + $0x2d8] sm:$0xff]
  %v397 = vld [vmem:[%s1 + $0x2e0] sm:$0xff]
  %v398 = vld [vmem:[%s1 + $0x2e8] sm:$0xff]
  %v399 = vld [vmem:[%s1 + $0x2f0] sm:$0xff]
  %v400 = vld [vmem:[%s1 + $0x2f8] sm:$0xff]
  %v401 = vld [vmem:[%s1 + $0x300] sm:$0xff]
  %v402 = vld [vmem:[%s1 + $0x308] sm:$0xff]
  %v403 = vld [vmem:[%s1 + $0x310] sm:$0xff]
  %v404 = vld [vmem:[%s1 + $0x318] sm:$0xff]
  %v405 = vld [vmem:[%s1 + $0x320] sm:$0xff]
  %v406 = vld [vmem:[%s1 + $0x328] sm:$0xff]
  %v407 = vld [vmem:[%s1 + $0x330] sm:$0xff]
  %v408 = vld [vmem:[%s1 + $0x338] sm:$0xff]
  %v409 = vld [vmem:[%s1 + $0x340] sm:$0xff]
  %v410 = vld [vmem:[%s1 + $0x348] sm:$0xff]
  %v411 = vld [vmem:[%s1 + $0x350] sm:$0xff]
  %v412 = vld [vmem:[%s1 + $0x358] sm:$0xff]
  %v413 = vld [vmem:[%s1 + $0x360] sm:$0xff]
  %v414 = vld [vmem:[%s1 + $0x368] sm:$0xff]
  %v415 = vld [vmem:[%s1 + $0x370] sm:$0xff]
  %v416 = vld [vmem:[%s1 + $0x378] sm:$0xff]
  %v417 = vld [vmem:[%s1 + $0x380] sm:$0xff]
  %v418 = vld [vmem:[%s1 + $0x388] sm:$0xff]
  %v419 = vld [vmem:[%s1 + $0x390] sm:$0xff]
  %v420 = vld [vmem:[%s1 + $0x398] sm:$0xff]
  %v421 = vld [vmem:[%s1 + $0x3a0] sm:$0xff]
  %v422 = vld [vmem:[%s1 + $0x3a8] sm:$0xff]
  %v423 = vld [vmem:[%s1 + $0x3b0] sm:$0xff]
  %v424 = vld [vmem:[%s1 + $0x3b8] sm:$0xff]
  %v425 = vld [vmem:[%s1 + $0x3c0] sm:$0xff]
  %v426 = vld [vmem:[%s1 + $0x3c8] sm:$0xff]
  %v427 = vld [vmem:[%s1 + $0x3d0] sm:$0xff]
  %v428 = vld [vmem:[%s1 + $0x3d8] sm:$0xff]
  %v429 = vld [vmem:[%s1 + $0x3e0] sm:$0xff]
  %v430 = vld [vmem:[%s1 + $0x3e8] sm:$0xff]
  %v431 = vld [vmem:[%s1 + $0x3f0] sm:$0xff]
  %v432 = vld [vmem:[%s1 + $0x3f8] sm:$0xff]
  %v561 = vunpack.c.l.b16 %v305
  %v562 = vunpack.c.h.b16 %v305
  %v563 = vunpack.c.l.b16 %v306
  %v564 = vunpack.c.h.b16 %v306
  %v565 = vunpack.c.l.b16 %v307
  %v566 = vunpack.c.h.b16 %v307
  %v567 = vunpack.c.l.b16 %v308
  %v568 = vunpack.c.h.b16 %v308
  %v569 = vunpack.c.l.b16 %v309
  %v570 = vunpack.c.h.b16 %v309
  %v571 = vunpack.c.l.b16 %v310
  %v572 = vunpack.c.h.b16 %v310
  %v573 = vunpack.c.l.b16 %v311
  %v574 = vunpack.c.h.b16 %v311
  %v575 = vunpack.c.l.b16 %v312
  %v576 = vunpack.c.h.b16 %v312
  %v577 = vunpack.c.l.b16 %v313
  %v578 = vunpack.c.h.b16 %v313
  %v579 = vunpack.c.l.b16 %v314
  %v580 = vunpack.c.h.b16 %v314
  %v581 = vunpack.c.l.b16 %v315
  %v582 = vunpack.c.h.b16 %v315
  %v583 = vunpack.c.l.b16 %v316
  %v584 = vunpack.c.h.b16 %v316
  %v585 = vunpack.c.l.b16 %v317
  %v586 = vunpack.c.h.b16 %v317
  %v587 = vunpack.c.l.b16 %v318
  %v588 = vunpack.c.h.b16 %v318
  %v589 = vunpack.c.l.b16 %v319
  %v590 = vunpack.c.h.b16 %v319
  %v591 = vunpack.c.l.b16 %v320
  %v592 = vunpack.c.h.b16 %v320
  %v593 = vunpack.c.l.b16 %v321
  %v594 = vunpack.c.h.b16 %v321
  %v595 = vunpack.c.l.b16 %v322
  %v596 = vunpack.c.h.b16 %v322
  %v597 = vunpack.c.l.b16 %v323
  %v598 = vunpack.c.h.b16 %v323
  %v599 = vunpack.c.l.b16 %v324
  %v600 = vunpack.c.h.b16 %v324
  %v601 = vunpack.c.l.b16 %v325
  %v602 = vunpack.c.h.b16 %v325
  %v603 = vunpack.c.l.b16 %v326
  %v604 = vunpack.c.h.b16 %v326
  %v605 = vunpack.c.l.b16 %v327
  %v606 = vunpack.c.h.b16 %v327
  %v607 = vunpack.c.l.b16 %v328
  %v608 = vunpack.c.h.b16 %v328
  %v609 = vunpack.c.l.b16 %v329
  %v610 = vunpack.c.h.b16 %v329
  %v611 = vunpack.c.l.b16 %v330
  %v612 = vunpack.c.h.b16 %v330
  %v613 = vunpack.c.l.b16 %v331
  %v614 = vunpack.c.h.b16 %v331
  %v615 = vunpack.c.l.b16 %v332
  %v616 = vunpack.c.h.b16 %v332
  %v617 = vunpack.c.l.b16 %v333
  %v618 = vunpack.c.h.b16 %v333
  %v619 = vunpack.c.l.b16 %v334
  %v620 = vunpack.c.h.b16 %v334
  %v621 = vunpack.c.l.b16 %v335
  %v622 = vunpack.c.h.b16 %v335
  %v623 = vunpack.c.l.b16 %v336
  %v624 = vunpack.c.h.b16 %v336
  %v625 = vunpack.c.l.b16 %v337
  %v626 = vunpack.c.h.b16 %v337
  %v627 = vunpack.c.l.b16 %v338
  %v628 = vunpack.c.h.b16 %v338
  %v629 = vunpack.c.l.b16 %v339
  %v630 = vunpack.c.h.b16 %v339
  %v631 = vunpack.c.l.b16 %v340
  %v632 = vunpack.c.h.b16 %v340
  %v633 = vunpack.c.l.b16 %v341
  %v634 = vunpack.c.h.b16 %v341
  %v635 = vunpack.c.l.b16 %v342
  %v636 = vunpack.c.h.b16 %v342
  %v637 = vunpack.c.l.b16 %v343
  %v638 = vunpack.c.h.b16 %v343
  %v639 = vunpack.c.l.b16 %v344
  %v640 = vunpack.c.h.b16 %v344
  %v641 = vunpack.c.l.b16 %v345
  %v642 = vunpack.c.h.b16 %v345
  %v643 = vunpack.c.l.b16 %v346
  %v644 = vunpack.c.h.b16 %v346
  %v645 = vunpack.c.l.b16 %v347
  %v646 = vunpack.c.h.b16 %v347
  %v647 = vunpack.c.l.b16 %v348
  %v648 = vunpack.c.h.b16 %v348
  %v649 = vunpack.c.l.b16 %v349
  %v650 = vunpack.c.h.b16 %v349
  %v651 = vunpack.c.l.b16 %v350
  %v652 = vunpack.c.h.b16 %v350
  %v653 = vunpack.c.l.b16 %v351
  %v654 = vunpack.c.h.b16 %v351
  %v655 = vunpack.c.l.b16 %v352
  %v656 = vunpack.c.h.b16 %v352
  %v657 = vunpack.c.l.b16 %v353
  %v658 = vunpack.c.h.b16 %v353
  %v659 = vunpack.c.l.b16 %v354
  %v660 = vunpack.c.h.b16 %v354
  %v661 = vunpack.c.l.b16 %v355
  %v662 = vunpack.c.h.b16 %v355
  %v663 = vunpack.c.l.b16 %v356
  %v664 = vunpack.c.h.b16 %v356
  %v665 = vunpack.c.l.b16 %v357
  %v666 = vunpack.c.h.b16 %v357
  %v667 = vunpack.c.l.b16 %v358
  %v668 = vunpack.c.h.b16 %v358
  %v669 = vunpack.c.l.b16 %v359
  %v670 = vunpack.c.h.b16 %v359
  %v671 = vunpack.c.l.b16 %v360
  %v672 = vunpack.c.h.b16 %v360
  %v673 = vunpack.c.l.b16 %v361
  %v674 = vunpack.c.h.b16 %v361
  %v675 = vunpack.c.l.b16 %v362
  %v676 = vunpack.c.h.b16 %v362
  %v677 = vunpack.c.l.b16 %v363
  %v678 = vunpack.c.h.b16 %v363
  %v679 = vunpack.c.l.b16 %v364
  %v680 = vunpack.c.h.b16 %v364
  %v681 = vunpack.c.l.b16 %v365
  %v682 = vunpack.c.h.b16 %v365
  %v683 = vunpack.c.l.b16 %v366
  %v684 = vunpack.c.h.b16 %v366
  %v685 = vunpack.c.l.b16 %v367
  %v686 = vunpack.c.h.b16 %v367
  %v687 = vunpack.c.l.b16 %v368
  %v688 = vunpack.c.h.b16 %v368
  %v689 = vunpack.c.l.b16 %v369
  %v690 = vunpack.c.h.b16 %v369
  %v691 = vunpack.c.l.b16 %v370
  %v692 = vunpack.c.h.b16 %v370
  %v693 = vunpack.c.l.b16 %v371
  %v694 = vunpack.c.h.b16 %v371
  %v695 = vunpack.c.l.b16 %v372
  %v696 = vunpack.c.h.b16 %v372
  %v697 = vunpack.c.l.b16 %v373
  %v698 = vunpack.c.h.b16 %v373
  %v699 = vunpack.c.l.b16 %v374
  %v700 = vunpack.c.h.b16 %v374
  %v701 = vunpack.c.l.b16 %v375
  %v702 = vunpack.c.h.b16 %v375
  %v703 = vunpack.c.l.b16 %v376
  %v704 = vunpack.c.h.b16 %v376
  %v705 = vunpack.c.l.b16 %v377
  %v706 = vunpack.c.h.b16 %v377
  %v707 = vunpack.c.l.b16 %v378
  %v708 = vunpack.c.h.b16 %v378
  %v709 = vunpack.c.l.b16 %v379
  %v710 = vunpack.c.h.b16 %v379
  %v711 = vunpack.c.l.b16 %v380
  %v712 = vunpack.c.h.b16 %v380
  %v713 = vunpack.c.l.b16 %v381
  %v714 = vunpack.c.h.b16 %v381
  %v715 = vunpack.c.l.b16 %v382
  %v716 = vunpack.c.h.b16 %v382
  %v717 = vunpack.c.l.b16 %v383
  %v718 = vunpack.c.h.b16 %v383
  %v719 = vunpack.c.l.b16 %v384
  %v720 = vunpack.c.h.b16 %v384
  %v721 = vunpack.c.l.b16 %v385
  %v722 = vunpack.c.h.b16 %v385
  %v723 = vunpack.c.l.b16 %v386
  %v724 = vunpack.c.h.b16 %v386
  %v725 = vunpack.c.l.b16 %v387
  %v726 = vunpack.c.h.b16 %v387
  %v727 = vunpack.c.l.b16 %v388
  %v728 = vunpack.c.h.b16 %v388
  %v729 = vunpack.c.l.b16 %v389
  %v730 = vunpack.c.h.b16 %v389
  %v731 = vunpack.c.l.b16 %v390
  %v732 = vunpack.c.h.b16 %v390
  %v733 = vunpack.c.l.b16 %v391
  %v734 = vunpack.c.h.b16 %v391
  %v735 = vunpack.c.l.b16 %v392
  %v736 = vunpack.c.h.b16 %v392
  %v737 = vunpack.c.l.b16 %v393
  %v738 = vunpack.c.h.b16 %v393
  %v739 = vunpack.c.l.b16 %v394
  %v740 = vunpack.c.h.b16 %v394
  %v741 = vunpack.c.l.b16 %v395
  %v742 = vunpack.c.h.b16 %v395
  %v743 = vunpack.c.l.b16 %v396
  %v744 = vunpack.c.h.b16 %v396
  %v745 = vunpack.c.l.b16 %v397
  %v746 = vunpack.c.h.b16 %v397
  %v747 = vunpack.c.l.b16 %v398
  %v748 = vunpack.c.h.b16 %v398
  %v749 = vunpack.c.l.b16 %v399
  %v750 = vunpack.c.h.b16 %v399
  %v751 = vunpack.c.l.b16 %v400
  %v752 = vunpack.c.h.b16 %v400
  %v753 = vunpack.c.l.b16 %v401
  %v754 = vunpack.c.h.b16 %v401
  %v755 = vunpack.c.l.b16 %v402
  %v756 = vunpack.c.h.b16 %v402
  %v757 = vunpack.c.l.b16 %v403
  %v758 = vunpack.c.h.b16 %v403
  %v759 = vunpack.c.l.b16 %v404
  %v760 = vunpack.c.h.b16 %v404
  %v761 = vunpack.c.l.b16 %v405
  %v762 = vunpack.c.h.b16 %v405
  %v763 = vunpack.c.l.b16 %v406
  %v764 = vunpack.c.h.b16 %v406
  %v765 = vunpack.c.l.b16 %v407
  %v766 = vunpack.c.h.b16 %v407
  %v767 = vunpack.c.l.b16 %v408
  %v768 = vunpack.c.h.b16 %v408
  %v769 = vunpack.c.l.b16 %v409
  %v770 = vunpack.c.h.b16 %v409
  %v771 = vunpack.c.l.b16 %v410
  %v772 = vunpack.c.h.b16 %v410
  %v773 = vunpack.c.l.b16 %v411
  %v774 = vunpack.c.h.b16 %v411
  %v775 = vunpack.c.l.b16 %v412
  %v776 = vunpack.c.h.b16 %v412
  %v777 = vunpack.c.l.b16 %v413
  %v778 = vunpack.c.h.b16 %v413
  %v779 = vunpack.c.l.b16 %v414
  %v780 = vunpack.c.h.b16 %v414
  %v781 = vunpack.c.l.b16 %v415
  %v782 = vunpack.c.h.b16 %v415
  %v783 = vunpack.c.l.b16 %v416
  %v784 = vunpack.c.h.b16 %v416
  %v785 = vunpack.c.l.b16 %v417
  %v786 = vunpack.c.h.b16 %v417
  %v787 = vunpack.c.l.b16 %v418
  %v788 = vunpack.c.h.b16 %v418
  %v789 = vunpack.c.l.b16 %v419
  %v790 = vunpack.c.h.b16 %v419
  %v791 = vunpack.c.l.b16 %v420
  %v792 = vunpack.c.h.b16 %v420
  %v793 = vunpack.c.l.b16 %v421
  %v794 = vunpack.c.h.b16 %v421
  %v795 = vunpack.c.l.b16 %v422
  %v796 = vunpack.c.h.b16 %v422
  %v797 = vunpack.c.l.b16 %v423
  %v798 = vunpack.c.h.b16 %v423
  %v799 = vunpack.c.l.b16 %v424
  %v800 = vunpack.c.h.b16 %v424
  %v801 = vunpack.c.l.b16 %v425
  %v802 = vunpack.c.h.b16 %v425
  %v803 = vunpack.c.l.b16 %v426
  %v804 = vunpack.c.h.b16 %v426
  %v805 = vunpack.c.l.b16 %v427
  %v806 = vunpack.c.h.b16 %v427
  %v807 = vunpack.c.l.b16 %v428
  %v808 = vunpack.c.h.b16 %v428
  %v809 = vunpack.c.l.b16 %v429
  %v810 = vunpack.c.h.b16 %v429
  %v811 = vunpack.c.l.b16 %v430
  %v812 = vunpack.c.h.b16 %v430
  %v813 = vunpack.c.l.b16 %v431
  %v814 = vunpack.c.h.b16 %v431
  %v815 = vunpack.c.l.b16 %v432
  %v816 = vunpack.c.h.b16 %v432
  %v817 = vpack.c.b16 %v569, %v561
  %v818 = vpack.c.b16 %v570, %v562
  %v819 = vpack.c.b16 %v571, %v563
  %v820 = vpack.c.b16 %v572, %v564
  %v821 = vpack.c.b16 %v573, %v565
  %v822 = vpack.c.b16 %v574, %v566
  %v823 = vpack.c.b16 %v575, %v567
  %v824 = vpack.c.b16 %v576, %v568
  %v825 = vpack.c.b16 %v585, %v577
  %v826 = vpack.c.b16 %v586, %v578
  %v827 = vpack.c.b16 %v587, %v579
  %v828 = vpack.c.b16 %v588, %v580
  %v829 = vpack.c.b16 %v589, %v581
  %v830 = vpack.c.b16 %v590, %v582
  %v831 = vpack.c.b16 %v591, %v583
  %v832 = vpack.c.b16 %v592, %v584
  %v833 = vpack.c.b16 %v601, %v593
  %v834 = vpack.c.b16 %v602, %v594
  %v835 = vpack.c.b16 %v603, %v595
  %v836 = vpack.c.b16 %v604, %v596
  %v837 = vpack.c.b16 %v605, %v597
  %v838 = vpack.c.b16 %v606, %v598
  %v839 = vpack.c.b16 %v607, %v599
  %v840 = vpack.c.b16 %v608, %v600
  %v841 = vpack.c.b16 %v617, %v609
  %v842 = vpack.c.b16 %v618, %v610
  %v843 = vpack.c.b16 %v619, %v611
  %v844 = vpack.c.b16 %v620, %v612
  %v845 = vpack.c.b16 %v621, %v613
  %v846 = vpack.c.b16 %v622, %v614
  %v847 = vpack.c.b16 %v623, %v615
  %v848 = vpack.c.b16 %v624, %v616
  %v849 = vpack.c.b16 %v633, %v625
  %v850 = vpack.c.b16 %v634, %v626
  %v851 = vpack.c.b16 %v635, %v627
  %v852 = vpack.c.b16 %v636, %v628
  %v853 = vpack.c.b16 %v637, %v629
  %v854 = vpack.c.b16 %v638, %v630
  %v855 = vpack.c.b16 %v639, %v631
  %v856 = vpack.c.b16 %v640, %v632
  %v857 = vpack.c.b16 %v649, %v641
  %v858 = vpack.c.b16 %v650, %v642
  %v859 = vpack.c.b16 %v651, %v643
  %v860 = vpack.c.b16 %v652, %v644
  %v861 = vpack.c.b16 %v653, %v645
  %v862 = vpack.c.b16 %v654, %v646
  %v863 = vpack.c.b16 %v655, %v647
  %v864 = vpack.c.b16 %v656, %v648
  %v865 = vpack.c.b16 %v665, %v657
  %v866 = vpack.c.b16 %v666, %v658
  %v867 = vpack.c.b16 %v667, %v659
  %v868 = vpack.c.b16 %v668, %v660
  %v869 = vpack.c.b16 %v669, %v661
  %v870 = vpack.c.b16 %v670, %v662
  %v871 = vpack.c.b16 %v671, %v663
  %v872 = vpack.c.b16 %v672, %v664
  %v873 = vpack.c.b16 %v681, %v673
  %v874 = vpack.c.b16 %v682, %v674
  %v875 = vpack.c.b16 %v683, %v675
  %v876 = vpack.c.b16 %v684, %v676
  %v877 = vpack.c.b16 %v685, %v677
  %v878 = vpack.c.b16 %v686, %v678
  %v879 = vpack.c.b16 %v687, %v679
  %v880 = vpack.c.b16 %v688, %v680
  %v881 = vpack.c.b16 %v697, %v689
  %v882 = vpack.c.b16 %v698, %v690
  %v883 = vpack.c.b16 %v699, %v691
  %v884 = vpack.c.b16 %v700, %v692
  %v885 = vpack.c.b16 %v701, %v693
  %v886 = vpack.c.b16 %v702, %v694
  %v887 = vpack.c.b16 %v703, %v695
  %v888 = vpack.c.b16 %v704, %v696
  %v889 = vpack.c.b16 %v713, %v705
  %v890 = vpack.c.b16 %v714, %v706
  %v891 = vpack.c.b16 %v715, %v707
  %v892 = vpack.c.b16 %v716, %v708
  %v893 = vpack.c.b16 %v717, %v709
  %v894 = vpack.c.b16 %v718, %v710
  %v895 = vpack.c.b16 %v719, %v711
  %v896 = vpack.c.b16 %v720, %v712
  %v897 = vpack.c.b16 %v729, %v721
  %v898 = vpack.c.b16 %v730, %v722
  %v899 = vpack.c.b16 %v731, %v723
  %v900 = vpack.c.b16 %v732, %v724
  %v901 = vpack.c.b16 %v733, %v725
  %v902 = vpack.c.b16 %v734, %v726
  %v903 = vpack.c.b16 %v735, %v727
  %v904 = vpack.c.b16 %v736, %v728
  %v905 = vpack.c.b16 %v745, %v737
  %v906 = vpack.c.b16 %v746, %v738
  %v907 = vpack.c.b16 %v747, %v739
  %v908 = vpack.c.b16 %v748, %v740
  %v909 = vpack.c.b16 %v749, %v741
  %v910 = vpack.c.b16 %v750, %v742
  %v911 = vpack.c.b16 %v751, %v743
  %v912 = vpack.c.b16 %v752, %v744
  %v913 = vpack.c.b16 %v761, %v753
  %v914 = vpack.c.b16 %v762, %v754
  %v915 = vpack.c.b16 %v763, %v755
  %v916 = vpack.c.b16 %v764, %v756
  %v917 = vpack.c.b16 %v765, %v757
  %v918 = vpack.c.b16 %v766, %v758
  %v919 = vpack.c.b16 %v767, %v759
  %v920 = vpack.c.b16 %v768, %v760
  %v921 = vpack.c.b16 %v777, %v769
  %v922 = vpack.c.b16 %v778, %v770
  %v923 = vpack.c.b16 %v779, %v771
  %v924 = vpack.c.b16 %v780, %v772
  %v925 = vpack.c.b16 %v781, %v773
  %v926 = vpack.c.b16 %v782, %v774
  %v927 = vpack.c.b16 %v783, %v775
  %v928 = vpack.c.b16 %v784, %v776
  %v929 = vpack.c.b16 %v793, %v785
  %v930 = vpack.c.b16 %v794, %v786
  %v931 = vpack.c.b16 %v795, %v787
  %v932 = vpack.c.b16 %v796, %v788
  %v933 = vpack.c.b16 %v797, %v789
  %v934 = vpack.c.b16 %v798, %v790
  %v935 = vpack.c.b16 %v799, %v791
  %v936 = vpack.c.b16 %v800, %v792
  %v937 = vpack.c.b16 %v809, %v801
  %v938 = vpack.c.b16 %v810, %v802
  %v939 = vpack.c.b16 %v811, %v803
  %v940 = vpack.c.b16 %v812, %v804
  %v941 = vpack.c.b16 %v813, %v805
  %v942 = vpack.c.b16 %v814, %v806
  %v943 = vpack.c.b16 %v815, %v807
  %v944 = vpack.c.b16 %v816, %v808
  %1073 = vmatprep.subr.bf16.mxu0 %v874
  %1074 = vmatpush1.bf16.msra.mxu0 %v873
  %1075 = vmatprep.subr.bf16.mxu0 %v866
  %1076 = vmatpush1.bf16.msra.mxu0 %v865
  %1077 = vmatprep.subr.bf16.mxu0 %v858
  %1078 = vmatpush1.bf16.msra.mxu0 %v857
  %1079 = vmatprep.subr.bf16.mxu0 %v850
  %1080 = vmatpush1.bf16.msra.mxu0 %v849
  %1081 = vmatprep.subr.bf16.mxu0 %v842
  %1082 = vmatpush1.bf16.msra.mxu0 %v841
  %1083 = vmatprep.subr.bf16.mxu0 %v834
  %1084 = vmatpush1.bf16.msra.mxu0 %v833
  %1085 = vmatprep.subr.bf16.mxu0 %v826
  %1086 = vmatpush1.bf16.msra.mxu0 %v825
  %1087 = vmatprep.subr.bf16.mxu0 %v818
  %1088 = vmatpush1.bf16.msra.mxu0 %v817
  %1089 = vmatprep.subr.bf16.mxu0 %v938
  %1090 = vmatpush2.bf16.msra.mxu0 %v937
  %1091 = vmatprep.subr.bf16.mxu0 %v930
  %1092 = vmatpush2.bf16.msra.mxu0 %v929
  %1093 = vmatprep.subr.bf16.mxu0 %v922
  %1094 = vmatpush2.bf16.msra.mxu0 %v921
  %1095 = vmatprep.subr.bf16.mxu0 %v914
  %1096 = vmatpush2.bf16.msra.mxu0 %v913
  %1097 = vmatprep.subr.bf16.mxu0 %v906
  %1098 = vmatpush2.bf16.msra.mxu0 %v905
  %1099 = vmatprep.subr.bf16.mxu0 %v898
  %1100 = vmatpush2.bf16.msra.mxu0 %v897
  %1101 = vmatprep.subr.bf16.mxu0 %v890
  %1102 = vmatpush2.bf16.msra.mxu0 %v889
  %1103 = vmatprep.subr.bf16.mxu0 %v882
  %1104 = vmatpush2.bf16.msra.mxu0 %v881
  %1105 = vmatprep.mubr.bf16.mxu0 %v304
  %1106 = vmatmul.mubr.bf16.gmra.mxu0 %v303
  %v1107 = vpop.f32.mrf.mxu0
  %v1108 = vadd.f32 0.0, %v1107
  %v1109 = vpop.f32.mrf.mxu0
  %v1110 = vadd.f32 0.0, %v1109
  %v1111 = vpop.f32.mrf.mxu0
  %v1112 = vadd.f32 0.0, %v1111
  %v1113 = vpop.f32.mrf.mxu0
  %v1114 = vadd.f32 0.0, %v1113
  %1115 = vdwg.mxu0
  %1116 = vmatprep.subr.bf16.mxu0 %v876
  %1117 = vmatpush1.bf16.msra.mxu0 %v875
  %1118 = vmatprep.subr.bf16.mxu0 %v868
  %1119 = vmatpush1.bf16.msra.mxu0 %v867
  %1120 = vmatprep.subr.bf16.mxu0 %v860
  %1121 = vmatpush1.bf16.msra.mxu0 %v859
  %1122 = vmatprep.subr.bf16.mxu0 %v852
  %1123 = vmatpush1.bf16.msra.mxu0 %v851
  %1124 = vmatprep.subr.bf16.mxu0 %v844
  %1125 = vmatpush1.bf16.msra.mxu0 %v843
  %1126 = vmatprep.subr.bf16.mxu0 %v836
  %1127 = vmatpush1.bf16.msra.mxu0 %v835
  %1128 = vmatprep.subr.bf16.mxu0 %v828
  %1129 = vmatpush1.bf16.msra.mxu0 %v827
  %1130 = vmatprep.subr.bf16.mxu0 %v820
  %1131 = vmatpush1.bf16.msra.mxu0 %v819
  %1132 = vmatprep.subr.bf16.mxu0 %v940
  %1133 = vmatpush2.bf16.msra.mxu0 %v939
  %1134 = vmatprep.subr.bf16.mxu0 %v932
  %1135 = vmatpush2.bf16.msra.mxu0 %v931
  %1136 = vmatprep.subr.bf16.mxu0 %v924
  %1137 = vmatpush2.bf16.msra.mxu0 %v923
  %1138 = vmatprep.subr.bf16.mxu0 %v916
  %1139 = vmatpush2.bf16.msra.mxu0 %v915
  %1140 = vmatprep.subr.bf16.mxu0 %v908
  %1141 = vmatpush2.bf16.msra.mxu0 %v907
  %1142 = vmatprep.subr.bf16.mxu0 %v900
  %1143 = vmatpush2.bf16.msra.mxu0 %v899
  %1144 = vmatprep.subr.bf16.mxu0 %v892
  %1145 = vmatpush2.bf16.msra.mxu0 %v891
  %1146 = vmatprep.subr.bf16.mxu0 %v884
  %1147 = vmatpush2.bf16.msra.mxu0 %v883
  %1148 = vmatprep.mubr.bf16.mxu0 %v304
  %1149 = vmatmul.mubr.bf16.gmra.mxu0 %v303
  %v1150 = vpop.f32.mrf.mxu0
  %v1151 = vadd.f32 0.0, %v1150
  %v1152 = vpop.f32.mrf.mxu0
  %v1153 = vadd.f32 0.0, %v1152
  %v1154 = vpop.f32.mrf.mxu0
  %v1155 = vadd.f32 0.0, %v1154
  %v1156 = vpop.f32.mrf.mxu0
  %v1157 = vadd.f32 0.0, %v1156
  %1158 = vdwg.mxu0
  %1159 = vmatprep.subr.bf16.mxu0 %v878
  %1160 = vmatpush1.bf16.msra.mxu0 %v877
  %1161 = vmatprep.subr.bf16.mxu0 %v870
  %1162 = vmatpush1.bf16.msra.mxu0 %v869
  %1163 = vmatprep.subr.bf16.mxu0 %v862
  %1164 = vmatpush1.bf16.msra.mxu0 %v861
  %1165 = vmatprep.subr.bf16.mxu0 %v854
  %1166 = vmatpush1.bf16.msra.mxu0 %v853
  %1167 = vmatprep.subr.bf16.mxu0 %v846
  %1168 = vmatpush1.bf16.msra.mxu0 %v845
  %1169 = vmatprep.subr.bf16.mxu0 %v838
  %1170 = vmatpush1.bf16.msra.mxu0 %v837
  %1171 = vmatprep.subr.bf16.mxu0 %v830
  %1172 = vmatpush1.bf16.msra.mxu0 %v829
  %1173 = vmatprep.subr.bf16.mxu0 %v822
  %1174 = vmatpush1.bf16.msra.mxu0 %v821
  %1175 = vmatprep.subr.bf16.mxu0 %v942
  %1176 = vmatpush2.bf16.msra.mxu0 %v941
  %1177 = vmatprep.subr.bf16.mxu0 %v934
  %1178 = vmatpush2.bf16.msra.mxu0 %v933
  %1179 = vmatprep.subr.bf16.mxu0 %v926
  %1180 = vmatpush2.bf16.msra.mxu0 %v925
  %1181 = vmatprep.subr.bf16.mxu0 %v918
  %1182 = vmatpush2.bf16.msra.mxu0 %v917
  %1183 = vmatprep.subr.bf16.mxu0 %v910
  %1184 = vmatpush2.bf16.msra.mxu0 %v909
  %1185 = vmatprep.subr.bf16.mxu0 %v902
  %1186 = vmatpush2.bf16.msra.mxu0 %v901
  %1187 = vmatprep.subr.bf16.mxu0 %v894
  %1188 = vmatpush2.bf16.msra.mxu0 %v893
  %1189 = vmatprep.subr.bf16.mxu0 %v886
  %1190 = vmatpush2.bf16.msra.mxu0 %v885
  %1191 = vmatprep.mubr.bf16.mxu0 %v304
  %1192 = vmatmul.mubr.bf16.gmra.mxu0 %v303
  %v1193 = vpop.f32.mrf.mxu0
  %v1194 = vadd.f32 0.0, %v1193
  %v1195 = vpop.f32.mrf.mxu0
  %v1196 = vadd.f32 0.0, %v1195
  %v1197 = vpop.f32.mrf.mxu0
  %v1198 = vadd.f32 0.0, %v1197
  %v1199 = vpop.f32.mrf.mxu0
  %v1200 = vadd.f32 0.0, %v1199
  %1201 = vdwg.mxu0
  %1202 = vmatprep.subr.bf16.mxu0 %v880
  %1203 = vmatpush1.bf16.msra.mxu0 %v879
  %1204 = vmatprep.subr.bf16.mxu0 %v872
  %1205 = vmatpush1.bf16.msra.mxu0 %v871
  %1206 = vmatprep.subr.bf16.mxu0 %v864
  %1207 = vmatpush1.bf16.msra.mxu0 %v863
  %1208 = vmatprep.subr.bf16.mxu0 %v856
  %1209 = vmatpush1.bf16.msra.mxu0 %v855
  %1210 = vmatprep.subr.bf16.mxu0 %v848
  %1211 = vmatpush1.bf16.msra.mxu0 %v847
  %1212 = vmatprep.subr.bf16.mxu0 %v840
  %1213 = vmatpush1.bf16.msra.mxu0 %v839
  %1214 = vmatprep.subr.bf16.mxu0 %v832
  %1215 = vmatpush1.bf16.msra.mxu0 %v831
  %1216 = vmatprep.subr.bf16.mxu0 %v824
  %1217 = vmatpush1.bf16.msra.mxu0 %v823
  %1218 = vmatprep.subr.bf16.mxu0 %v944
  %1219 = vmatpush2.bf16.msra.mxu0 %v943
  %1220 = vmatprep.subr.bf16.mxu0 %v936
  %1221 = vmatpush2.bf16.msra.mxu0 %v935
  %1222 = vmatprep.subr.bf16.mxu0 %v928
  %1223 = vmatpush2.bf16.msra.mxu0 %v927
  %1224 = vmatprep.subr.bf16.mxu0 %v920
  %1225 = vmatpush2.bf16.msra.mxu0 %v919
  %1226 = vmatprep.subr.bf16.mxu0 %v912
  %1227 = vmatpush2.bf16.msra.mxu0 %v911
  %1228 = vmatprep.subr.bf16.mxu0 %v904
  %1229 = vmatpush2.bf16.msra.mxu0 %v903
  %1230 = vmatprep.subr.bf16.mxu0 %v896
  %1231 = vmatpush2.bf16.msra.mxu0 %v895
  %1232 = vmatprep.subr.bf16.mxu0 %v888
  %1233 = vmatpush2.bf16.msra.mxu0 %v887
  %1234 = vmatprep.mubr.bf16.mxu0 %v304
  %1235 = vmatmul.mubr.bf16.gmra.mxu0 %v303
  %v1236 = vpop.f32.mrf.mxu0
  %v1237 = vadd.f32 0.0, %v1236
  %v1238 = vpop.f32.mrf.mxu0
  %v1239 = vadd.f32 0.0, %v1238
  %v1240 = vpop.f32.mrf.mxu0
  %v1241 = vadd.f32 0.0, %v1240
  %v1242 = vpop.f32.mrf.mxu0
  %v1243 = vadd.f32 0.0, %v1242
  %1244 = vdwg.mxu0
  %v1245 = vadd.f32 %v283, %v1108
  %v1246 = vadd.f32 %v284, %v1110
  %v1247 = vadd.f32 %v285, %v1151
  %v1248 = vadd.f32 %v286, %v1153
  %v1249 = vadd.f32 %v287, %v1194
  %v1250 = vadd.f32 %v288, %v1196
  %v1251 = vadd.f32 %v289, %v1237
  %v1252 = vadd.f32 %v290, %v1239
  %v1253 = vadd.f32 %v291, %v1112
  %v1254 = vadd.f32 %v292, %v1114
  %v1255 = vadd.f32 %v293, %v1155
  %v1256 = vadd.f32 %v294, %v1157
  %v1257 = vadd.f32 %v295, %v1198
  %v1258 = vadd.f32 %v296, %v1200
  %v1259 = vadd.f32 %v297, %v1241
  %v1260 = vadd.f32 %v298, %v1243
  %v1261 = vxor.u32 %v1245, 2147483648
  %v1262 = vxor.u32 %v1246, 2147483648
  %v1263 = vxor.u32 %v1253, 2147483648
  %v1264 = vxor.u32 %v1254, 2147483648
  %v1265 = vmul.f32 %v1261, 1.442695
  %v1266 = vpow.pop %v1265
  %v1267 = vmul.f32 %v1262, 1.442695
  %v1268 = vpow.pop %v1267
  %v1269 = vmul.f32 %v1263, 1.442695
  %v1270 = vpow.pop %v1269
  %v1271 = vmul.f32 %v1264, 1.442695
  %v1272 = vpow.pop %v1271
  %v1273 = vadd.f32 %v1266, 1.0
  %v1274 = vadd.f32 %v1268, 1.0
  %v1275 = vadd.f32 %v1270, 1.0
  %v1276 = vadd.f32 %v1272, 1.0
  %v1277 = vrcp.pop %v1273
  %v1278 = vmul.f32 1.0, %v1277
  %v1279 = vrcp.pop %v1274
  %v1280 = vmul.f32 1.0, %v1279
  %v1281 = vrcp.pop %v1275
  %v1282 = vmul.f32 1.0, %v1281
  %v1283 = vrcp.pop %v1276
  %v1284 = vmul.f32 1.0, %v1283
  %v1285 = vxor.u32 %v1247, 2147483648
  %v1286 = vxor.u32 %v1248, 2147483648
  %v1287 = vxor.u32 %v1255, 2147483648
  %v1288 = vxor.u32 %v1256, 2147483648
  %v1289 = vmul.f32 %v1285, 1.442695
  %v1290 = vpow.pop %v1289
  %v1291 = vmul.f32 %v1286, 1.442695
  %v1292 = vpow.pop %v1291
  %v1293 = vmul.f32 %v1287, 1.442695
  %v1294 = vpow.pop %v1293
  %v1295 = vmul.f32 %v1288, 1.442695
  %v1296 = vpow.pop %v1295
  %v1297 = vadd.f32 %v1290, 1.0
  %v1298 = vadd.f32 %v1292, 1.0
  %v1299 = vadd.f32 %v1294, 1.0
  %v1300 = vadd.f32 %v1296, 1.0
  %v1301 = vrcp.pop %v1297
  %v1302 = vmul.f32 1.0, %v1301
  %v1303 = vrcp.pop %v1298
  %v1304 = vmul.f32 1.0, %v1303
  %v1305 = vrcp.pop %v1299
  %v1306 = vmul.f32 1.0, %v1305
  %v1307 = vrcp.pop %v1300
  %v1308 = vmul.f32 1.0, %v1307
  %v1309 = vtanh.pop %v1249
  %v1310 = vtanh.pop %v1250
  %v1311 = vtanh.pop %v1257
  %v1312 = vtanh.pop %v1258
  %v1313 = vxor.u32 %v1251, 2147483648
  %v1314 = vxor.u32 %v1252, 2147483648
  %v1315 = vxor.u32 %v1259, 2147483648
  %v1316 = vxor.u32 %v1260, 2147483648
  %v1317 = vmul.f32 %v1313, 1.442695
  %v1318 = vpow.pop %v1317
  %v1319 = vmul.f32 %v1314, 1.442695
  %v1320 = vpow.pop %v1319
  %v1321 = vmul.f32 %v1315, 1.442695
  %v1322 = vpow.pop %v1321
  %v1323 = vmul.f32 %v1316, 1.442695
  %v1324 = vpow.pop %v1323
  %v1325 = vadd.f32 %v1318, 1.0
  %v1326 = vadd.f32 %v1320, 1.0
  %v1327 = vadd.f32 %v1322, 1.0
  %v1328 = vadd.f32 %v1324, 1.0
  %v1329 = vrcp.pop %v1325
  %v1330 = vmul.f32 1.0, %v1329
  %v1331 = vrcp.pop %v1326
  %v1332 = vmul.f32 1.0, %v1331
  %v1333 = vrcp.pop %v1327
  %v1334 = vmul.f32 1.0, %v1333
  %v1335 = vrcp.pop %v1328
  %v1336 = vmul.f32 1.0, %v1335
  %v1337 = vld [vmem:[#allocation3] sm:$0xff]
  %v1338 = vld [vmem:[#allocation3 + $0x8] sm:$0xff]
  %v1339 = vld [vmem:[#allocation3 + $0x10] sm:$0xff]
  %v1340 = vld [vmem:[#allocation3 + $0x18] sm:$0xff]
  %v1341 = vmul.f32 %v1302, %v1337
  %v1342 = vmul.f32 %v1304, %v1338
  %v1343 = vmul.f32 %v1306, %v1339
  %v1344 = vmul.f32 %v1308, %v1340
  %v1345 = vmul.f32 %v1278, %v1309
  %v1346 = vmul.f32 %v1280, %v1310
  %v1347 = vmul.f32 %v1282, %v1311
  %v1348 = vmul.f32 %v1284, %v1312
  %v1349 = vadd.f32 %v1341, %v1345
  %v1350 = vadd.f32 %v1342, %v1346
  %v1351 = vadd.f32 %v1343, %v1347
  %v1352 = vadd.f32 %v1344, %v1348
  %v1353 = vtanh.pop %v1349
  %v1354 = vtanh.pop %v1350
  %v1355 = vtanh.pop %v1351
  %v1356 = vtanh.pop %v1352
  %v1357 = vmul.f32 %v1330, %v1353
  %v1358 = vmul.f32 %v1332, %v1354
  %v1359 = vmul.f32 %v1334, %v1355
  %v1360 = vmul.f32 %v1336, %v1356
  %1361 = vst [vmem:[#allocation3] sm:$0xff] %v1349
  %1362 = vst [vmem:[#allocation3 + $0x8] sm:$0xff] %v1350
  %1363 = vst [vmem:[#allocation3 + $0x10] sm:$0xff] %v1351
  %1364 = vst [vmem:[#allocation3 + $0x18] sm:$0xff] %v1352
  %1365 = vst [vmem:[#allocation2] sm:$0xff] %v1357
  %1366 = vst [vmem:[#allocation2 + $0x8] sm:$0xff] %v1358
  %1367 = vst [vmem:[#allocation2 + $0x10] sm:$0xff] %v1359
  %1368 = vst [vmem:[#allocation2 + $0x18] sm:$0xff] %v1360
  %v1369 = vpack.c.bf16 %v1359, %v1357
  %v1370 = vpack.c.bf16 %v1360, %v1358
  %1371 = vmatprep.subr.bf16.mxu0 0
  %1372 = vmatpush1.bf16.msra.mxu0 %v214
  %1373 = vmatprep.subr.bf16.mxu0 0
  %1374 = vmatpush1.bf16.msra.mxu0 %v213
  %1375 = vmatprep.subr.bf16.mxu0 0
  %1376 = vmatpush1.bf16.msra.mxu0 %v212
  %1377 = vmatprep.subr.bf16.mxu0 0
  %1378 = vmatpush1.bf16.msra.mxu0 %v211
  %1379 = vmatprep.subr.bf16.mxu0 0
  %1380 = vmatpush1.bf16.msra.mxu0 %v210
  %1381 = vmatprep.subr.bf16.mxu0 0
  %1382 = vmatpush1.bf16.msra.mxu0 %v209
  %1383 = vmatprep.subr.bf16.mxu0 0
  %1384 = vmatpush1.bf16.msra.mxu0 %v208
  %1385 = vmatprep.subr.bf16.mxu0 0
  %1386 = vmatpush1.bf16.msra.mxu0 %v207
  %1387 = vmatprep.subr.bf16.mxu0 0
  %1388 = vmatpush2.bf16.msra.mxu0 %v222
  %1389 = vmatprep.subr.bf16.mxu0 0
  %1390 = vmatpush2.bf16.msra.mxu0 %v221
  %1391 = vmatprep.subr.bf16.mxu0 0
  %1392 = vmatpush2.bf16.msra.mxu0 %v220
  %1393 = vmatprep.subr.bf16.mxu0 0
  %1394 = vmatpush2.bf16.msra.mxu0 %v219
  %1395 = vmatprep.subr.bf16.mxu0 0
  %1396 = vmatpush2.bf16.msra.mxu0 %v218
  %1397 = vmatprep.subr.bf16.mxu0 0
  %1398 = vmatpush2.bf16.msra.mxu0 %v217
  %1399 = vmatprep.subr.bf16.mxu0 0
  %1400 = vmatpush2.bf16.msra.mxu0 %v216
  %1401 = vmatprep.subr.bf16.mxu0 0
  %1402 = vmatpush2.bf16.msra.mxu0 %v215
  %1403 = vmatprep.mubr.bf16.mxu0 %v1370
  %1404 = vmatmul.mubr.bf16.gmra.mxu0 %v1369
  %v1405 = vpop.f32.mrf.mxu0
  %v1406 = vadd.f32 %v141, %v1405
  %v1407 = vpop.f32.mrf.mxu0
  %v1408 = vpop.f32.mrf.mxu0
  %v1409 = vadd.f32 %v141, %v1408
  %v1410 = vpop.f32.mrf.mxu0
  %1411 = vdwg.mxu0
  %s1412 = scalar_lea.vmem %s4, 16
  %1413 = vst [vmem:[%s1412] sm:$0xff] %v1406
  %1414 = vst [vmem:[%s1412 + $0x8] sm:$0xff] %v1409
  %s1415 = scalar_lea.vmem %s0, 256
  %v1416 = vld [vmem:[%s1415] sm:$0xff]
  %v1417 = vld [vmem:[%s1415 + $0x8] sm:$0xff]
  %v1418 = vld [vmem:[%s1415 + $0x10] sm:$0xff]
  %v1419 = vld [vmem:[%s1415 + $0x18] sm:$0xff]
  %v1420 = vld [vmem:[%s1415 + $0x20] sm:$0xff]
  %v1421 = vld [vmem:[%s1415 + $0x28] sm:$0xff]
  %v1422 = vld [vmem:[%s1415 + $0x30] sm:$0xff]
  %v1423 = vld [vmem:[%s1415 + $0x38] sm:$0xff]
  %v1424 = vld [vmem:[%s1415 + $0x40] sm:$0xff]
  %v1425 = vld [vmem:[%s1415 + $0x48] sm:$0xff]
  %v1426 = vld [vmem:[%s1415 + $0x50] sm:$0xff]
  %v1427 = vld [vmem:[%s1415 + $0x58] sm:$0xff]
  %v1428 = vld [vmem:[%s1415 + $0x60] sm:$0xff]
  %v1429 = vld [vmem:[%s1415 + $0x68] sm:$0xff]
  %v1430 = vld [vmem:[%s1415 + $0x70] sm:$0xff]
  %v1431 = vld [vmem:[%s1415 + $0x78] sm:$0xff]
  %v1432 = vld [vmem:[#allocation2] sm:$0xff]
  %v1433 = vld [vmem:[#allocation2 + $0x8] sm:$0xff]
  %v1434 = vld [vmem:[#allocation2 + $0x10] sm:$0xff]
  %v1435 = vld [vmem:[#allocation2 + $0x18] sm:$0xff]
  %v1436 = vpack.c.bf16 %v1434, %v1432
  %v1437 = vpack.c.bf16 %v1435, %v1433
  %v1438 = vld [vmem:[%s1] sm:$0xff]
  %v1439 = vld [vmem:[%s1 + $0x8] sm:$0xff]
  %v1440 = vld [vmem:[%s1 + $0x10] sm:$0xff]
  %v1441 = vld [vmem:[%s1 + $0x18] sm:$0xff]
  %v1442 = vld [vmem:[%s1 + $0x20] sm:$0xff]
  %v1443 = vld [vmem:[%s1 + $0x28] sm:$0xff]
  %v1444 = vld [vmem:[%s1 + $0x30] sm:$0xff]
  %v1445 = vld [vmem:[%s1 + $0x38] sm:$0xff]
  %v1446 = vld [vmem:[%s1 + $0x40] sm:$0xff]
  %v1447 = vld [vmem:[%s1 + $0x48] sm:$0xff]
  %v1448 = vld [vmem:[%s1 + $0x50] sm:$0xff]
  %v1449 = vld [vmem:[%s1 + $0x58] sm:$0xff]
  %v1450 = vld [vmem:[%s1 + $0x60] sm:$0xff]
  %v1451 = vld [vmem:[%s1 + $0x68] sm:$0xff]
  %v1452 = vld [vmem:[%s1 + $0x70] sm:$0xff]
  %v1453 = vld [vmem:[%s1 + $0x78] sm:$0xff]
  %v1454 = vld [vmem:[%s1 + $0x80] sm:$0xff]
  %v1455 = vld [vmem:[%s1 + $0x88] sm:$0xff]
  %v1456 = vld [vmem:[%s1 + $0x90] sm:$0xff]
  %v1457 = vld [vmem:[%s1 + $0x98] sm:$0xff]
  %v1458 = vld [vmem:[%s1 + $0xa0] sm:$0xff]
  %v1459 = vld [vmem:[%s1 + $0xa8] sm:$0xff]
  %v1460 = vld [vmem:[%s1 + $0xb0] sm:$0xff]
  %v1461 = vld [vmem:[%s1 + $0xb8] sm:$0xff]
  %v1462 = vld [vmem:[%s1 + $0xc0] sm:$0xff]
  %v1463 = vld [vmem:[%s1 + $0xc8] sm:$0xff]
  %v1464 = vld [vmem:[%s1 + $0xd0] sm:$0xff]
  %v1465 = vld [vmem:[%s1 + $0xd8] sm:$0xff]
  %v1466 = vld [vmem:[%s1 + $0xe0] sm:$0xff]
  %v1467 = vld [vmem:[%s1 + $0xe8] sm:$0xff]
  %v1468 = vld [vmem:[%s1 + $0xf0] sm:$0xff]
  %v1469 = vld [vmem:[%s1 + $0xf8] sm:$0xff]
  %v1470 = vld [vmem:[%s1 + $0x100] sm:$0xff]
  %v1471 = vld [vmem:[%s1 + $0x108] sm:$0xff]
  %v1472 = vld [vmem:[%s1 + $0x110] sm:$0xff]
  %v1473 = vld [vmem:[%s1 + $0x118] sm:$0xff]
  %v1474 = vld [vmem:[%s1 + $0x120] sm:$0xff]
  %v1475 = vld [vmem:[%s1 + $0x128] sm:$0xff]
  %v1476 = vld [vmem:[%s1 + $0x130] sm:$0xff]
  %v1477 = vld [vmem:[%s1 + $0x138] sm:$0xff]
  %v1478 = vld [vmem:[%s1 + $0x140] sm:$0xff]
  %v1479 = vld [vmem:[%s1 + $0x148] sm:$0xff]
  %v1480 = vld [vmem:[%s1 + $0x150] sm:$0xff]
  %v1481 = vld [vmem:[%s1 + $0x158] sm:$0xff]
  %v1482 = vld [vmem:[%s1 + $0x160] sm:$0xff]
  %v1483 = vld [vmem:[%s1 + $0x168] sm:$0xff]
  %v1484 = vld [vmem:[%s1 + $0x170] sm:$0xff]
  %v1485 = vld [vmem:[%s1 + $0x178] sm:$0xff]
  %v1486 = vld [vmem:[%s1 + $0x180] sm:$0xff]
  %v1487 = vld [vmem:[%s1 + $0x188] sm:$0xff]
  %v1488 = vld [vmem:[%s1 + $0x190] sm:$0xff]
  %v1489 = vld [vmem:[%s1 + $0x198] sm:$0xff]
  %v1490 = vld [vmem:[%s1 + $0x1a0] sm:$0xff]
  %v1491 = vld [vmem:[%s1 + $0x1a8] sm:$0xff]
  %v1492 = vld [vmem:[%s1 + $0x1b0] sm:$0xff]
  %v1493 = vld [vmem:[%s1 + $0x1b8] sm:$0xff]
  %v1494 = vld [vmem:[%s1 + $0x1c0] sm:$0xff]
  %v1495 = vld [vmem:[%s1 + $0x1c8] sm:$0xff]
  %v1496 = vld [vmem:[%s1 + $0x1d0] sm:$0xff]
  %v1497 = vld [vmem:[%s1 + $0x1d8] sm:$0xff]
  %v1498 = vld [vmem:[%s1 + $0x1e0] sm:$0xff]
  %v1499 = vld [vmem:[%s1 + $0x1e8] sm:$0xff]
  %v1500 = vld [vmem:[%s1 + $0x1f0] sm:$0xff]
  %v1501 = vld [vmem:[%s1 + $0x1f8] sm:$0xff]
  %v1502 = vld [vmem:[%s1 + $0x200] sm:$0xff]
  %v1503 = vld [vmem:[%s1 + $0x208] sm:$0xff]
  %v1504 = vld [vmem:[%s1 + $0x210] sm:$0xff]
  %v1505 = vld [vmem:[%s1 + $0x218] sm:$0xff]
  %v1506 = vld [vmem:[%s1 + $0x220] sm:$0xff]
  %v1507 = vld [vmem:[%s1 + $0x228] sm:$0xff]
  %v1508 = vld [vmem:[%s1 + $0x230] sm:$0xff]
  %v1509 = vld [vmem:[%s1 + $0x238] sm:$0xff]
  %v1510 = vld [vmem:[%s1 + $0x240] sm:$0xff]
  %v1511 = vld [vmem:[%s1 + $0x248] sm:$0xff]
  %v1512 = vld [vmem:[%s1 + $0x250] sm:$0xff]
  %v1513 = vld [vmem:[%s1 + $0x258] sm:$0xff]
  %v1514 = vld [vmem:[%s1 + $0x260] sm:$0xff]
  %v1515 = vld [vmem:[%s1 + $0x268] sm:$0xff]
  %v1516 = vld [vmem:[%s1 + $0x270] sm:$0xff]
  %v1517 = vld [vmem:[%s1 + $0x278] sm:$0xff]
  %v1518 = vld [vmem:[%s1 + $0x280] sm:$0xff]
  %v1519 = vld [vmem:[%s1 + $0x288] sm:$0xff]
  %v1520 = vld [vmem:[%s1 + $0x290] sm:$0xff]
  %v1521 = vld [vmem:[%s1 + $0x298] sm:$0xff]
  %v1522 = vld [vmem:[%s1 + $0x2a0] sm:$0xff]
  %v1523 = vld [vmem:[%s1 + $0x2a8] sm:$0xff]
  %v1524 = vld [vmem:[%s1 + $0x2b0] sm:$0xff]
  %v1525 = vld [vmem:[%s1 + $0x2b8] sm:$0xff]
  %v1526 = vld [vmem:[%s1 + $0x2c0] sm:$0xff]
  %v1527 = vld [vmem:[%s1 + $0x2c8] sm:$0xff]
  %v1528 = vld [vmem:[%s1 + $0x2d0] sm:$0xff]
  %v1529 = vld [vmem:[%s1 + $0x2d8] sm:$0xff]
  %v1530 = vld [vmem:[%s1 + $0x2e0] sm:$0xff]
  %v1531 = vld [vmem:[%s1 + $0x2e8] sm:$0xff]
  %v1532 = vld [vmem:[%s1 + $0x2f0] sm:$0xff]
  %v1533 = vld [vmem:[%s1 + $0x2f8] sm:$0xff]
  %v1534 = vld [vmem:[%s1 + $0x300] sm:$0xff]
  %v1535 = vld [vmem:[%s1 + $0x308] sm:$0xff]
  %v1536 = vld [vmem:[%s1 + $0x310] sm:$0xff]
  %v1537 = vld [vmem:[%s1 + $0x318] sm:$0xff]
  %v1538 = vld [vmem:[%s1 + $0x320] sm:$0xff]
  %v1539 = vld [vmem:[%s1 + $0x328] sm:$0xff]
  %v1540 = vld [vmem:[%s1 + $0x330] sm:$0xff]
  %v1541 = vld [vmem:[%s1 + $0x338] sm:$0xff]
  %v1542 = vld [vmem:[%s1 + $0x340] sm:$0xff]
  %v1543 = vld [vmem:[%s1 + $0x348] sm:$0xff]
  %v1544 = vld [vmem:[%s1 + $0x350] sm:$0xff]
  %v1545 = vld [vmem:[%s1 + $0x358] sm:$0xff]
  %v1546 = vld [vmem:[%s1 + $0x360] sm:$0xff]
  %v1547 = vld [vmem:[%s1 + $0x368] sm:$0xff]
  %v1548 = vld [vmem:[%s1 + $0x370] sm:$0xff]
  %v1549 = vld [vmem:[%s1 + $0x378] sm:$0xff]
  %v1550 = vld [vmem:[%s1 + $0x380] sm:$0xff]
  %v1551 = vld [vmem:[%s1 + $0x388] sm:$0xff]
  %v1552 = vld [vmem:[%s1 + $0x390] sm:$0xff]
  %v1553 = vld [vmem:[%s1 + $0x398] sm:$0xff]
  %v1554 = vld [vmem:[%s1 + $0x3a0] sm:$0xff]
  %v1555 = vld [vmem:[%s1 + $0x3a8] sm:$0xff]
  %v1556 = vld [vmem:[%s1 + $0x3b0] sm:$0xff]
  %v1557 = vld [vmem:[%s1 + $0x3b8] sm:$0xff]
  %v1558 = vld [vmem:[%s1 + $0x3c0] sm:$0xff]
  %v1559 = vld [vmem:[%s1 + $0x3c8] sm:$0xff]
  %v1560 = vld [vmem:[%s1 + $0x3d0] sm:$0xff]
  %v1561 = vld [vmem:[%s1 + $0x3d8] sm:$0xff]
  %v1562 = vld [vmem:[%s1 + $0x3e0] sm:$0xff]
  %v1563 = vld [vmem:[%s1 + $0x3e8] sm:$0xff]
  %v1564 = vld [vmem:[%s1 + $0x3f0] sm:$0xff]
  %v1565 = vld [vmem:[%s1 + $0x3f8] sm:$0xff]
  %v1694 = vunpack.c.l.b16 %v1438
  %v1695 = vunpack.c.h.b16 %v1438
  %v1696 = vunpack.c.l.b16 %v1439
  %v1697 = vunpack.c.h.b16 %v1439
  %v1698 = vunpack.c.l.b16 %v1440
  %v1699 = vunpack.c.h.b16 %v1440
  %v1700 = vunpack.c.l.b16 %v1441
  %v1701 = vunpack.c.h.b16 %v1441
  %v1702 = vunpack.c.l.b16 %v1442
  %v1703 = vunpack.c.h.b16 %v1442
  %v1704 = vunpack.c.l.b16 %v1443
  %v1705 = vunpack.c.h.b16 %v1443
  %v1706 = vunpack.c.l.b16 %v1444
  %v1707 = vunpack.c.h.b16 %v1444
  %v1708 = vunpack.c.l.b16 %v1445
  %v1709 = vunpack.c.h.b16 %v1445
  %v1710 = vunpack.c.l.b16 %v1446
  %v1711 = vunpack.c.h.b16 %v1446
  %v1712 = vunpack.c.l.b16 %v1447
  %v1713 = vunpack.c.h.b16 %v1447
  %v1714 = vunpack.c.l.b16 %v1448
  %v1715 = vunpack.c.h.b16 %v1448
  %v1716 = vunpack.c.l.b16 %v1449
  %v1717 = vunpack.c.h.b16 %v1449
  %v1718 = vunpack.c.l.b16 %v1450
  %v1719 = vunpack.c.h.b16 %v1450
  %v1720 = vunpack.c.l.b16 %v1451
  %v1721 = vunpack.c.h.b16 %v1451
  %v1722 = vunpack.c.l.b16 %v1452
  %v1723 = vunpack.c.h.b16 %v1452
  %v1724 = vunpack.c.l.b16 %v1453
  %v1725 = vunpack.c.h.b16 %v1453
  %v1726 = vunpack.c.l.b16 %v1454
  %v1727 = vunpack.c.h.b16 %v1454
  %v1728 = vunpack.c.l.b16 %v1455
  %v1729 = vunpack.c.h.b16 %v1455
  %v1730 = vunpack.c.l.b16 %v1456
  %v1731 = vunpack.c.h.b16 %v1456
  %v1732 = vunpack.c.l.b16 %v1457
  %v1733 = vunpack.c.h.b16 %v1457
  %v1734 = vunpack.c.l.b16 %v1458
  %v1735 = vunpack.c.h.b16 %v1458
  %v1736 = vunpack.c.l.b16 %v1459
  %v1737 = vunpack.c.h.b16 %v1459
  %v1738 = vunpack.c.l.b16 %v1460
  %v1739 = vunpack.c.h.b16 %v1460
  %v1740 = vunpack.c.l.b16 %v1461
  %v1741 = vunpack.c.h.b16 %v1461
  %v1742 = vunpack.c.l.b16 %v1462
  %v1743 = vunpack.c.h.b16 %v1462
  %v1744 = vunpack.c.l.b16 %v1463
  %v1745 = vunpack.c.h.b16 %v1463
  %v1746 = vunpack.c.l.b16 %v1464
  %v1747 = vunpack.c.h.b16 %v1464
  %v1748 = vunpack.c.l.b16 %v1465
  %v1749 = vunpack.c.h.b16 %v1465
  %v1750 = vunpack.c.l.b16 %v1466
  %v1751 = vunpack.c.h.b16 %v1466
  %v1752 = vunpack.c.l.b16 %v1467
  %v1753 = vunpack.c.h.b16 %v1467
  %v1754 = vunpack.c.l.b16 %v1468
  %v1755 = vunpack.c.h.b16 %v1468
  %v1756 = vunpack.c.l.b16 %v1469
  %v1757 = vunpack.c.h.b16 %v1469
  %v1758 = vunpack.c.l.b16 %v1470
  %v1759 = vunpack.c.h.b16 %v1470
  %v1760 = vunpack.c.l.b16 %v1471
  %v1761 = vunpack.c.h.b16 %v1471
  %v1762 = vunpack.c.l.b16 %v1472
  %v1763 = vunpack.c.h.b16 %v1472
  %v1764 = vunpack.c.l.b16 %v1473
  %v1765 = vunpack.c.h.b16 %v1473
  %v1766 = vunpack.c.l.b16 %v1474
  %v1767 = vunpack.c.h.b16 %v1474
  %v1768 = vunpack.c.l.b16 %v1475
  %v1769 = vunpack.c.h.b16 %v1475
  %v1770 = vunpack.c.l.b16 %v1476
  %v1771 = vunpack.c.h.b16 %v1476
  %v1772 = vunpack.c.l.b16 %v1477
  %v1773 = vunpack.c.h.b16 %v1477
  %v1774 = vunpack.c.l.b16 %v1478
  %v1775 = vunpack.c.h.b16 %v1478
  %v1776 = vunpack.c.l.b16 %v1479
  %v1777 = vunpack.c.h.b16 %v1479
  %v1778 = vunpack.c.l.b16 %v1480
  %v1779 = vunpack.c.h.b16 %v1480
  %v1780 = vunpack.c.l.b16 %v1481
  %v1781 = vunpack.c.h.b16 %v1481
  %v1782 = vunpack.c.l.b16 %v1482
  %v1783 = vunpack.c.h.b16 %v1482
  %v1784 = vunpack.c.l.b16 %v1483
  %v1785 = vunpack.c.h.b16 %v1483
  %v1786 = vunpack.c.l.b16 %v1484
  %v1787 = vunpack.c.h.b16 %v1484
  %v1788 = vunpack.c.l.b16 %v1485
  %v1789 = vunpack.c.h.b16 %v1485
  %v1790 = vunpack.c.l.b16 %v1486
  %v1791 = vunpack.c.h.b16 %v1486
  %v1792 = vunpack.c.l.b16 %v1487
  %v1793 = vunpack.c.h.b16 %v1487
  %v1794 = vunpack.c.l.b16 %v1488
  %v1795 = vunpack.c.h.b16 %v1488
  %v1796 = vunpack.c.l.b16 %v1489
  %v1797 = vunpack.c.h.b16 %v1489
  %v1798 = vunpack.c.l.b16 %v1490
  %v1799 = vunpack.c.h.b16 %v1490
  %v1800 = vunpack.c.l.b16 %v1491
  %v1801 = vunpack.c.h.b16 %v1491
  %v1802 = vunpack.c.l.b16 %v1492
  %v1803 = vunpack.c.h.b16 %v1492
  %v1804 = vunpack.c.l.b16 %v1493
  %v1805 = vunpack.c.h.b16 %v1493
  %v1806 = vunpack.c.l.b16 %v1494
  %v1807 = vunpack.c.h.b16 %v1494
  %v1808 = vunpack.c.l.b16 %v1495
  %v1809 = vunpack.c.h.b16 %v1495
  %v1810 = vunpack.c.l.b16 %v1496
  %v1811 = vunpack.c.h.b16 %v1496
  %v1812 = vunpack.c.l.b16 %v1497
  %v1813 = vunpack.c.h.b16 %v1497
  %v1814 = vunpack.c.l.b16 %v1498
  %v1815 = vunpack.c.h.b16 %v1498
  %v1816 = vunpack.c.l.b16 %v1499
  %v1817 = vunpack.c.h.b16 %v1499
  %v1818 = vunpack.c.l.b16 %v1500
  %v1819 = vunpack.c.h.b16 %v1500
  %v1820 = vunpack.c.l.b16 %v1501
  %v1821 = vunpack.c.h.b16 %v1501
  %v1822 = vunpack.c.l.b16 %v1502
  %v1823 = vunpack.c.h.b16 %v1502
  %v1824 = vunpack.c.l.b16 %v1503
  %v1825 = vunpack.c.h.b16 %v1503
  %v1826 = vunpack.c.l.b16 %v1504
  %v1827 = vunpack.c.h.b16 %v1504
  %v1828 = vunpack.c.l.b16 %v1505
  %v1829 = vunpack.c.h.b16 %v1505
  %v1830 = vunpack.c.l.b16 %v1506
  %v1831 = vunpack.c.h.b16 %v1506
  %v1832 = vunpack.c.l.b16 %v1507
  %v1833 = vunpack.c.h.b16 %v1507
  %v1834 = vunpack.c.l.b16 %v1508
  %v1835 = vunpack.c.h.b16 %v1508
  %v1836 = vunpack.c.l.b16 %v1509
  %v1837 = vunpack.c.h.b16 %v1509
  %v1838 = vunpack.c.l.b16 %v1510
  %v1839 = vunpack.c.h.b16 %v1510
  %v1840 = vunpack.c.l.b16 %v1511
  %v1841 = vunpack.c.h.b16 %v1511
  %v1842 = vunpack.c.l.b16 %v1512
  %v1843 = vunpack.c.h.b16 %v1512
  %v1844 = vunpack.c.l.b16 %v1513
  %v1845 = vunpack.c.h.b16 %v1513
  %v1846 = vunpack.c.l.b16 %v1514
  %v1847 = vunpack.c.h.b16 %v1514
  %v1848 = vunpack.c.l.b16 %v1515
  %v1849 = vunpack.c.h.b16 %v1515
  %v1850 = vunpack.c.l.b16 %v1516
  %v1851 = vunpack.c.h.b16 %v1516
  %v1852 = vunpack.c.l.b16 %v1517
  %v1853 = vunpack.c.h.b16 %v1517
  %v1854 = vunpack.c.l.b16 %v1518
  %v1855 = vunpack.c.h.b16 %v1518
  %v1856 = vunpack.c.l.b16 %v1519
  %v1857 = vunpack.c.h.b16 %v1519
  %v1858 = vunpack.c.l.b16 %v1520
  %v1859 = vunpack.c.h.b16 %v1520
  %v1860 = vunpack.c.l.b16 %v1521
  %v1861 = vunpack.c.h.b16 %v1521
  %v1862 = vunpack.c.l.b16 %v1522
  %v1863 = vunpack.c.h.b16 %v1522
  %v1864 = vunpack.c.l.b16 %v1523
  %v1865 = vunpack.c.h.b16 %v1523
  %v1866 = vunpack.c.l.b16 %v1524
  %v1867 = vunpack.c.h.b16 %v1524
  %v1868 = vunpack.c.l.b16 %v1525
  %v1869 = vunpack.c.h.b16 %v1525
  %v1870 = vunpack.c.l.b16 %v1526
  %v1871 = vunpack.c.h.b16 %v1526
  %v1872 = vunpack.c.l.b16 %v1527
  %v1873 = vunpack.c.h.b16 %v1527
  %v1874 = vunpack.c.l.b16 %v1528
  %v1875 = vunpack.c.h.b16 %v1528
  %v1876 = vunpack.c.l.b16 %v1529
  %v1877 = vunpack.c.h.b16 %v1529
  %v1878 = vunpack.c.l.b16 %v1530
  %v1879 = vunpack.c.h.b16 %v1530
  %v1880 = vunpack.c.l.b16 %v1531
  %v1881 = vunpack.c.h.b16 %v1531
  %v1882 = vunpack.c.l.b16 %v1532
  %v1883 = vunpack.c.h.b16 %v1532
  %v1884 = vunpack.c.l.b16 %v1533
  %v1885 = vunpack.c.h.b16 %v1533
  %v1886 = vunpack.c.l.b16 %v1534
  %v1887 = vunpack.c.h.b16 %v1534
  %v1888 = vunpack.c.l.b16 %v1535
  %v1889 = vunpack.c.h.b16 %v1535
  %v1890 = vunpack.c.l.b16 %v1536
  %v1891 = vunpack.c.h.b16 %v1536
  %v1892 = vunpack.c.l.b16 %v1537
  %v1893 = vunpack.c.h.b16 %v1537
  %v1894 = vunpack.c.l.b16 %v1538
  %v1895 = vunpack.c.h.b16 %v1538
  %v1896 = vunpack.c.l.b16 %v1539
  %v1897 = vunpack.c.h.b16 %v1539
  %v1898 = vunpack.c.l.b16 %v1540
  %v1899 = vunpack.c.h.b16 %v1540
  %v1900 = vunpack.c.l.b16 %v1541
  %v1901 = vunpack.c.h.b16 %v1541
  %v1902 = vunpack.c.l.b16 %v1542
  %v1903 = vunpack.c.h.b16 %v1542
  %v1904 = vunpack.c.l.b16 %v1543
  %v1905 = vunpack.c.h.b16 %v1543
  %v1906 = vunpack.c.l.b16 %v1544
  %v1907 = vunpack.c.h.b16 %v1544
  %v1908 = vunpack.c.l.b16 %v1545
  %v1909 = vunpack.c.h.b16 %v1545
  %v1910 = vunpack.c.l.b16 %v1546
  %v1911 = vunpack.c.h.b16 %v1546
  %v1912 = vunpack.c.l.b16 %v1547
  %v1913 = vunpack.c.h.b16 %v1547
  %v1914 = vunpack.c.l.b16 %v1548
  %v1915 = vunpack.c.h.b16 %v1548
  %v1916 = vunpack.c.l.b16 %v1549
  %v1917 = vunpack.c.h.b16 %v1549
  %v1918 = vunpack.c.l.b16 %v1550
  %v1919 = vunpack.c.h.b16 %v1550
  %v1920 = vunpack.c.l.b16 %v1551
  %v1921 = vunpack.c.h.b16 %v1551
  %v1922 = vunpack.c.l.b16 %v1552
  %v1923 = vunpack.c.h.b16 %v1552
  %v1924 = vunpack.c.l.b16 %v1553
  %v1925 = vunpack.c.h.b16 %v1553
  %v1926 = vunpack.c.l.b16 %v1554
  %v1927 = vunpack.c.h.b16 %v1554
  %v1928 = vunpack.c.l.b16 %v1555
  %v1929 = vunpack.c.h.b16 %v1555
  %v1930 = vunpack.c.l.b16 %v1556
  %v1931 = vunpack.c.h.b16 %v1556
  %v1932 = vunpack.c.l.b16 %v1557
  %v1933 = vunpack.c.h.b16 %v1557
  %v1934 = vunpack.c.l.b16 %v1558
  %v1935 = vunpack.c.h.b16 %v1558
  %v1936 = vunpack.c.l.b16 %v1559
  %v1937 = vunpack.c.h.b16 %v1559
  %v1938 = vunpack.c.l.b16 %v1560
  %v1939 = vunpack.c.h.b16 %v1560
  %v1940 = vunpack.c.l.b16 %v1561
  %v1941 = vunpack.c.h.b16 %v1561
  %v1942 = vunpack.c.l.b16 %v1562
  %v1943 = vunpack.c.h.b16 %v1562
  %v1944 = vunpack.c.l.b16 %v1563
  %v1945 = vunpack.c.h.b16 %v1563
  %v1946 = vunpack.c.l.b16 %v1564
  %v1947 = vunpack.c.h.b16 %v1564
  %v1948 = vunpack.c.l.b16 %v1565
  %v1949 = vunpack.c.h.b16 %v1565
  %v1950 = vpack.c.b16 %v1702, %v1694
  %v1951 = vpack.c.b16 %v1703, %v1695
  %v1952 = vpack.c.b16 %v1704, %v1696
  %v1953 = vpack.c.b16 %v1705, %v1697
  %v1954 = vpack.c.b16 %v1706, %v1698
  %v1955 = vpack.c.b16 %v1707, %v1699
  %v1956 = vpack.c.b16 %v1708, %v1700
  %v1957 = vpack.c.b16 %v1709, %v1701
  %v1958 = vpack.c.b16 %v1718, %v1710
  %v1959 = vpack.c.b16 %v1719, %v1711
  %v1960 = vpack.c.b16 %v1720, %v1712
  %v1961 = vpack.c.b16 %v1721, %v1713
  %v1962 = vpack.c.b16 %v1722, %v1714
  %v1963 = vpack.c.b16 %v1723, %v1715
  %v1964 = vpack.c.b16 %v1724, %v1716
  %v1965 = vpack.c.b16 %v1725, %v1717
  %v1966 = vpack.c.b16 %v1734, %v1726
  %v1967 = vpack.c.b16 %v1735, %v1727
  %v1968 = vpack.c.b16 %v1736, %v1728
  %v1969 = vpack.c.b16 %v1737, %v1729
  %v1970 = vpack.c.b16 %v1738, %v1730
  %v1971 = vpack.c.b16 %v1739, %v1731
  %v1972 = vpack.c.b16 %v1740, %v1732
  %v1973 = vpack.c.b16 %v1741, %v1733
  %v1974 = vpack.c.b16 %v1750, %v1742
  %v1975 = vpack.c.b16 %v1751, %v1743
  %v1976 = vpack.c.b16 %v1752, %v1744
  %v1977 = vpack.c.b16 %v1753, %v1745
  %v1978 = vpack.c.b16 %v1754, %v1746
  %v1979 = vpack.c.b16 %v1755, %v1747
  %v1980 = vpack.c.b16 %v1756, %v1748
  %v1981 = vpack.c.b16 %v1757, %v1749
  %v1982 = vpack.c.b16 %v1766, %v1758
  %v1983 = vpack.c.b16 %v1767, %v1759
  %v1984 = vpack.c.b16 %v1768, %v1760
  %v1985 = vpack.c.b16 %v1769, %v1761
  %v1986 = vpack.c.b16 %v1770, %v1762
  %v1987 = vpack.c.b16 %v1771, %v1763
  %v1988 = vpack.c.b16 %v1772, %v1764
  %v1989 = vpack.c.b16 %v1773, %v1765
  %v1990 = vpack.c.b16 %v1782, %v1774
  %v1991 = vpack.c.b16 %v1783, %v1775
  %v1992 = vpack.c.b16 %v1784, %v1776
  %v1993 = vpack.c.b16 %v1785, %v1777
  %v1994 = vpack.c.b16 %v1786, %v1778
  %v1995 = vpack.c.b16 %v1787, %v1779
  %v1996 = vpack.c.b16 %v1788, %v1780
  %v1997 = vpack.c.b16 %v1789, %v1781
  %v1998 = vpack.c.b16 %v1798, %v1790
  %v1999 = vpack.c.b16 %v1799, %v1791
  %v2000 = vpack.c.b16 %v1800, %v1792
  %v2001 = vpack.c.b16 %v1801, %v1793
  %v2002 = vpack.c.b16 %v1802, %v1794
  %v2003 = vpack.c.b16 %v1803, %v1795
  %v2004 = vpack.c.b16 %v1804, %v1796
  %v2005 = vpack.c.b16 %v1805, %v1797
  %v2006 = vpack.c.b16 %v1814, %v1806
  %v2007 = vpack.c.b16 %v1815, %v1807
  %v2008 = vpack.c.b16 %v1816, %v1808
  %v2009 = vpack.c.b16 %v1817, %v1809
  %v2010 = vpack.c.b16 %v1818, %v1810
  %v2011 = vpack.c.b16 %v1819, %v1811
  %v2012 = vpack.c.b16 %v1820, %v1812
  %v2013 = vpack.c.b16 %v1821, %v1813
  %v2014 = vpack.c.b16 %v1830, %v1822
  %v2015 = vpack.c.b16 %v1831, %v1823
  %v2016 = vpack.c.b16 %v1832, %v1824
  %v2017 = vpack.c.b16 %v1833, %v1825
  %v2018 = vpack.c.b16 %v1834, %v1826
  %v2019 = vpack.c.b16 %v1835, %v1827
  %v2020 = vpack.c.b16 %v1836, %v1828
  %v2021 = vpack.c.b16 %v1837, %v1829
  %v2022 = vpack.c.b16 %v1846, %v1838
  %v2023 = vpack.c.b16 %v1847, %v1839
  %v2024 = vpack.c.b16 %v1848, %v1840
  %v2025 = vpack.c.b16 %v1849, %v1841
  %v2026 = vpack.c.b16 %v1850, %v1842
  %v2027 = vpack.c.b16 %v1851, %v1843
  %v2028 = vpack.c.b16 %v1852, %v1844
  %v2029 = vpack.c.b16 %v1853, %v1845
  %v2030 = vpack.c.b16 %v1862, %v1854
  %v2031 = vpack.c.b16 %v1863, %v1855
  %v2032 = vpack.c.b16 %v1864, %v1856
  %v2033 = vpack.c.b16 %v1865, %v1857
  %v2034 = vpack.c.b16 %v1866, %v1858
  %v2035 = vpack.c.b16 %v1867, %v1859
  %v2036 = vpack.c.b16 %v1868, %v1860
  %v2037 = vpack.c.b16 %v1869, %v1861
  %v2038 = vpack.c.b16 %v1878, %v1870
  %v2039 = vpack.c.b16 %v1879, %v1871
  %v2040 = vpack.c.b16 %v1880, %v1872
  %v2041 = vpack.c.b16 %v1881, %v1873
  %v2042 = vpack.c.b16 %v1882, %v1874
  %v2043 = vpack.c.b16 %v1883, %v1875
  %v2044 = vpack.c.b16 %v1884, %v1876
  %v2045 = vpack.c.b16 %v1885, %v1877
  %v2046 = vpack.c.b16 %v1894, %v1886
  %v2047 = vpack.c.b16 %v1895, %v1887
  %v2048 = vpack.c.b16 %v1896, %v1888
  %v2049 = vpack.c.b16 %v1897, %v1889
  %v2050 = vpack.c.b16 %v1898, %v1890
  %v2051 = vpack.c.b16 %v1899, %v1891
  %v2052 = vpack.c.b16 %v1900, %v1892
  %v2053 = vpack.c.b16 %v1901, %v1893
  %v2054 = vpack.c.b16 %v1910, %v1902
  %v2055 = vpack.c.b16 %v1911, %v1903
  %v2056 = vpack.c.b16 %v1912, %v1904
  %v2057 = vpack.c.b16 %v1913, %v1905
  %v2058 = vpack.c.b16 %v1914, %v1906
  %v2059 = vpack.c.b16 %v1915, %v1907
  %v2060 = vpack.c.b16 %v1916, %v1908
  %v2061 = vpack.c.b16 %v1917, %v1909
  %v2062 = vpack.c.b16 %v1926, %v1918
  %v2063 = vpack.c.b16 %v1927, %v1919
  %v2064 = vpack.c.b16 %v1928, %v1920
  %v2065 = vpack.c.b16 %v1929, %v1921
  %v2066 = vpack.c.b16 %v1930, %v1922
  %v2067 = vpack.c.b16 %v1931, %v1923
  %v2068 = vpack.c.b16 %v1932, %v1924
  %v2069 = vpack.c.b16 %v1933, %v1925
  %v2070 = vpack.c.b16 %v1942, %v1934
  %v2071 = vpack.c.b16 %v1943, %v1935
  %v2072 = vpack.c.b16 %v1944, %v1936
  %v2073 = vpack.c.b16 %v1945, %v1937
  %v2074 = vpack.c.b16 %v1946, %v1938
  %v2075 = vpack.c.b16 %v1947, %v1939
  %v2076 = vpack.c.b16 %v1948, %v1940
  %v2077 = vpack.c.b16 %v1949, %v1941
  %2206 = vmatprep.subr.bf16.mxu0 %v2007
  %2207 = vmatpush1.bf16.msra.mxu0 %v2006
  %2208 = vmatprep.subr.bf16.mxu0 %v1999
  %2209 = vmatpush1.bf16.msra.mxu0 %v1998
  %2210 = vmatprep.subr.bf16.mxu0 %v1991
  %2211 = vmatpush1.bf16.msra.mxu0 %v1990
  %2212 = vmatprep.subr.bf16.mxu0 %v1983
  %2213 = vmatpush1.bf16.msra.mxu0 %v1982
  %2214 = vmatprep.subr.bf16.mxu0 %v1975
  %2215 = vmatpush1.bf16.msra.mxu0 %v1974
  %2216 = vmatprep.subr.bf16.mxu0 %v1967
  %2217 = vmatpush1.bf16.msra.mxu0 %v1966
  %2218 = vmatprep.subr.bf16.mxu0 %v1959
  %2219 = vmatpush1.bf16.msra.mxu0 %v1958
  %2220 = vmatprep.subr.bf16.mxu0 %v1951
  %2221 = vmatpush1.bf16.msra.mxu0 %v1950
  %2222 = vmatprep.subr.bf16.mxu0 %v2071
  %2223 = vmatpush2.bf16.msra.mxu0 %v2070
  %2224 = vmatprep.subr.bf16.mxu0 %v2063
  %2225 = vmatpush2.bf16.msra.mxu0 %v2062
  %2226 = vmatprep.subr.bf16.mxu0 %v2055
  %2227 = vmatpush2.bf16.msra.mxu0 %v2054
  %2228 = vmatprep.subr.bf16.mxu0 %v2047
  %2229 = vmatpush2.bf16.msra.mxu0 %v2046
  %2230 = vmatprep.subr.bf16.mxu0 %v2039
  %2231 = vmatpush2.bf16.msra.mxu0 %v2038
  %2232 = vmatprep.subr.bf16.mxu0 %v2031
  %2233 = vmatpush2.bf16.msra.mxu0 %v2030
  %2234 = vmatprep.subr.bf16.mxu0 %v2023
  %2235 = vmatpush2.bf16.msra.mxu0 %v2022
  %2236 = vmatprep.subr.bf16.mxu0 %v2015
  %2237 = vmatpush2.bf16.msra.mxu0 %v2014
  %2238 = vmatprep.mubr.bf16.mxu0 %v1437
  %2239 = vmatmul.mubr.bf16.gmra.mxu0 %v1436
  %v2240 = vpop.f32.mrf.mxu0
  %v2241 = vadd.f32 0.0, %v2240
  %v2242 = vpop.f32.mrf.mxu0
  %v2243 = vadd.f32 0.0, %v2242
  %v2244 = vpop.f32.mrf.mxu0
  %v2245 = vadd.f32 0.0, %v2244
  %v2246 = vpop.f32.mrf.mxu0
  %v2247 = vadd.f32 0.0, %v2246
  %2248 = vdwg.mxu0
  %2249 = vmatprep.subr.bf16.mxu0 %v2009
  %2250 = vmatpush1.bf16.msra.mxu0 %v2008
  %2251 = vmatprep.subr.bf16.mxu0 %v2001
  %2252 = vmatpush1.bf16.msra.mxu0 %v2000
  %2253 = vmatprep.subr.bf16.mxu0 %v1993
  %2254 = vmatpush1.bf16.msra.mxu0 %v1992
  %2255 = vmatprep.subr.bf16.mxu0 %v1985
  %2256 = vmatpush1.bf16.msra.mxu0 %v1984
  %2257 = vmatprep.subr.bf16.mxu0 %v1977
  %2258 = vmatpush1.bf16.msra.mxu0 %v1976
  %2259 = vmatprep.subr.bf16.mxu0 %v1969
  %2260 = vmatpush1.bf16.msra.mxu0 %v1968
  %2261 = vmatprep.subr.bf16.mxu0 %v1961
  %2262 = vmatpush1.bf16.msra.mxu0 %v1960
  %2263 = vmatprep.subr.bf16.mxu0 %v1953
  %2264 = vmatpush1.bf16.msra.mxu0 %v1952
  %2265 = vmatprep.subr.bf16.mxu0 %v2073
  %2266 = vmatpush2.bf16.msra.mxu0 %v2072
  %2267 = vmatprep.subr.bf16.mxu0 %v2065
  %2268 = vmatpush2.bf16.msra.mxu0 %v2064
  %2269 = vmatprep.subr.bf16.mxu0 %v2057
  %2270 = vmatpush2.bf16.msra.mxu0 %v2056
  %2271 = vmatprep.subr.bf16.mxu0 %v2049
  %2272 = vmatpush2.bf16.msra.mxu0 %v2048
  %2273 = vmatprep.subr.bf16.mxu0 %v2041
  %2274 = vmatpush2.bf16.msra.mxu0 %v2040
  %2275 = vmatprep.subr.bf16.mxu0 %v2033
  %2276 = vmatpush2.bf16.msra.mxu0 %v2032
  %2277 = vmatprep.subr.bf16.mxu0 %v2025
  %2278 = vmatpush2.bf16.msra.mxu0 %v2024
  %2279 = vmatprep.subr.bf16.mxu0 %v2017
  %2280 = vmatpush2.bf16.msra.mxu0 %v2016
  %2281 = vmatprep.mubr.bf16.mxu0 %v1437
  %2282 = vmatmul.mubr.bf16.gmra.mxu0 %v1436
  %v2283 = vpop.f32.mrf.mxu0
  %v2284 = vadd.f32 0.0, %v2283
  %v2285 = vpop.f32.mrf.mxu0
  %v2286 = vadd.f32 0.0, %v2285
  %v2287 = vpop.f32.mrf.mxu0
  %v2288 = vadd.f32 0.0, %v2287
  %v2289 = vpop.f32.mrf.mxu0
  %v2290 = vadd.f32 0.0, %v2289
  %2291 = vdwg.mxu0
  %2292 = vmatprep.subr.bf16.mxu0 %v2011
  %2293 = vmatpush1.bf16.msra.mxu0 %v2010
  %2294 = vmatprep.subr.bf16.mxu0 %v2003
  %2295 = vmatpush1.bf16.msra.mxu0 %v2002
  %2296 = vmatprep.subr.bf16.mxu0 %v1995
  %2297 = vmatpush1.bf16.msra.mxu0 %v1994
  %2298 = vmatprep.subr.bf16.mxu0 %v1987
  %2299 = vmatpush1.bf16.msra.mxu0 %v1986
  %2300 = vmatprep.subr.bf16.mxu0 %v1979
  %2301 = vmatpush1.bf16.msra.mxu0 %v1978
  %2302 = vmatprep.subr.bf16.mxu0 %v1971
  %2303 = vmatpush1.bf16.msra.mxu0 %v1970
  %2304 = vmatprep.subr.bf16.mxu0 %v1963
  %2305 = vmatpush1.bf16.msra.mxu0 %v1962
  %2306 = vmatprep.subr.bf16.mxu0 %v1955
  %2307 = vmatpush1.bf16.msra.mxu0 %v1954
  %2308 = vmatprep.subr.bf16.mxu0 %v2075
  %2309 = vmatpush2.bf16.msra.mxu0 %v2074
  %2310 = vmatprep.subr.bf16.mxu0 %v2067
  %2311 = vmatpush2.bf16.msra.mxu0 %v2066
  %2312 = vmatprep.subr.bf16.mxu0 %v2059
  %2313 = vmatpush2.bf16.msra.mxu0 %v2058
  %2314 = vmatprep.subr.bf16.mxu0 %v2051
  %2315 = vmatpush2.bf16.msra.mxu0 %v2050
  %2316 = vmatprep.subr.bf16.mxu0 %v2043
  %2317 = vmatpush2.bf16.msra.mxu0 %v2042
  %2318 = vmatprep.subr.bf16.mxu0 %v2035
  %2319 = vmatpush2.bf16.msra.mxu0 %v2034
  %2320 = vmatprep.subr.bf16.mxu0 %v2027
  %2321 = vmatpush2.bf16.msra.mxu0 %v2026
  %2322 = vmatprep.subr.bf16.mxu0 %v2019
  %2323 = vmatpush2.bf16.msra.mxu0 %v2018
  %2324 = vmatprep.mubr.bf16.mxu0 %v1437
  %2325 = vmatmul.mubr.bf16.gmra.mxu0 %v1436
  %v2326 = vpop.f32.mrf.mxu0
  %v2327 = vadd.f32 0.0, %v2326
  %v2328 = vpop.f32.mrf.mxu0
  %v2329 = vadd.f32 0.0, %v2328
  %v2330 = vpop.f32.mrf.mxu0
  %v2331 = vadd.f32 0.0, %v2330
  %v2332 = vpop.f32.mrf.mxu0
  %v2333 = vadd.f32 0.0, %v2332
  %2334 = vdwg.mxu0
  %2335 = vmatprep.subr.bf16.mxu0 %v2013
  %2336 = vmatpush1.bf16.msra.mxu0 %v2012
  %2337 = vmatprep.subr.bf16.mxu0 %v2005
  %2338 = vmatpush1.bf16.msra.mxu0 %v2004
  %2339 = vmatprep.subr.bf16.mxu0 %v1997
  %2340 = vmatpush1.bf16.msra.mxu0 %v1996
  %2341 = vmatprep.subr.bf16.mxu0 %v1989
  %2342 = vmatpush1.bf16.msra.mxu0 %v1988
  %2343 = vmatprep.subr.bf16.mxu0 %v1981
  %2344 = vmatpush1.bf16.msra.mxu0 %v1980
  %2345 = vmatprep.subr.bf16.mxu0 %v1973
  %2346 = vmatpush1.bf16.msra.mxu0 %v1972
  %2347 = vmatprep.subr.bf16.mxu0 %v1965
  %2348 = vmatpush1.bf16.msra.mxu0 %v1964
  %2349 = vmatprep.subr.bf16.mxu0 %v1957
  %2350 = vmatpush1.bf16.msra.mxu0 %v1956
  %2351 = vmatprep.subr.bf16.mxu0 %v2077
  %2352 = vmatpush2.bf16.msra.mxu0 %v2076
  %2353 = vmatprep.subr.bf16.mxu0 %v2069
  %2354 = vmatpush2.bf16.msra.mxu0 %v2068
  %2355 = vmatprep.subr.bf16.mxu0 %v2061
  %2356 = vmatpush2.bf16.msra.mxu0 %v2060
  %2357 = vmatprep.subr.bf16.mxu0 %v2053
  %2358 = vmatpush2.bf16.msra.mxu0 %v2052
  %2359 = vmatprep.subr.bf16.mxu0 %v2045
  %2360 = vmatpush2.bf16.msra.mxu0 %v2044
  %2361 = vmatprep.subr.bf16.mxu0 %v2037
  %2362 = vmatpush2.bf16.msra.mxu0 %v2036
  %2363 = vmatprep.subr.bf16.mxu0 %v2029
  %2364 = vmatpush2.bf16.msra.mxu0 %v2028
  %2365 = vmatprep.subr.bf16.mxu0 %v2021
  %2366 = vmatpush2.bf16.msra.mxu0 %v2020
  %2367 = vmatprep.mubr.bf16.mxu0 %v1437
  %2368 = vmatmul.mubr.bf16.gmra.mxu0 %v1436
  %v2369 = vpop.f32.mrf.mxu0
  %v2370 = vadd.f32 0.0, %v2369
  %v2371 = vpop.f32.mrf.mxu0
  %v2372 = vadd.f32 0.0, %v2371
  %v2373 = vpop.f32.mrf.mxu0
  %v2374 = vadd.f32 0.0, %v2373
  %v2375 = vpop.f32.mrf.mxu0
  %v2376 = vadd.f32 0.0, %v2375
  %2377 = vdwg.mxu0
  %v2378 = vadd.f32 %v1416, %v2241
  %v2379 = vadd.f32 %v1417, %v2243
  %v2380 = vadd.f32 %v1418, %v2284
  %v2381 = vadd.f32 %v1419, %v2286
  %v2382 = vadd.f32 %v1420, %v2327
  %v2383 = vadd.f32 %v1421, %v2329
  %v2384 = vadd.f32 %v1422, %v2370
  %v2385 = vadd.f32 %v1423, %v2372
  %v2386 = vadd.f32 %v1424, %v2245
  %v2387 = vadd.f32 %v1425, %v2247
  %v2388 = vadd.f32 %v1426, %v2288
  %v2389 = vadd.f32 %v1427, %v2290
  %v2390 = vadd.f32 %v1428, %v2331
  %v2391 = vadd.f32 %v1429, %v2333
  %v2392 = vadd.f32 %v1430, %v2374
  %v2393 = vadd.f32 %v1431, %v2376
  %v2394 = vxor.u32 %v2378, 2147483648
  %v2395 = vxor.u32 %v2379, 2147483648
  %v2396 = vxor.u32 %v2386, 2147483648
  %v2397 = vxor.u32 %v2387, 2147483648
  %v2398 = vmul.f32 %v2394, 1.442695
  %v2399 = vpow.pop %v2398
  %v2400 = vmul.f32 %v2395, 1.442695
  %v2401 = vpow.pop %v2400
  %v2402 = vmul.f32 %v2396, 1.442695
  %v2403 = vpow.pop %v2402
  %v2404 = vmul.f32 %v2397, 1.442695
  %v2405 = vpow.pop %v2404
  %v2406 = vadd.f32 %v2399, 1.0
  %v2407 = vadd.f32 %v2401, 1.0
  %v2408 = vadd.f32 %v2403, 1.0
  %v2409 = vadd.f32 %v2405, 1.0
  %v2410 = vrcp.pop %v2406
  %v2411 = vmul.f32 1.0, %v2410
  %v2412 = vrcp.pop %v2407
  %v2413 = vmul.f32 1.0, %v2412
  %v2414 = vrcp.pop %v2408
  %v2415 = vmul.f32 1.0, %v2414
  %v2416 = vrcp.pop %v2409
  %v2417 = vmul.f32 1.0, %v2416
  %v2418 = vxor.u32 %v2380, 2147483648
  %v2419 = vxor.u32 %v2381, 2147483648
  %v2420 = vxor.u32 %v2388, 2147483648
  %v2421 = vxor.u32 %v2389, 2147483648
  %v2422 = vmul.f32 %v2418, 1.442695
  %v2423 = vpow.pop %v2422
  %v2424 = vmul.f32 %v2419, 1.442695
  %v2425 = vpow.pop %v2424
  %v2426 = vmul.f32 %v2420, 1.442695
  %v2427 = vpow.pop %v2426
  %v2428 = vmul.f32 %v2421, 1.442695
  %v2429 = vpow.pop %v2428
  %v2430 = vadd.f32 %v2423, 1.0
  %v2431 = vadd.f32 %v2425, 1.0
  %v2432 = vadd.f32 %v2427, 1.0
  %v2433 = vadd.f32 %v2429, 1.0
  %v2434 = vrcp.pop %v2430
  %v2435 = vmul.f32 1.0, %v2434
  %v2436 = vrcp.pop %v2431
  %v2437 = vmul.f32 1.0, %v2436
  %v2438 = vrcp.pop %v2432
  %v2439 = vmul.f32 1.0, %v2438
  %v2440 = vrcp.pop %v2433
  %v2441 = vmul.f32 1.0, %v2440
  %v2442 = vtanh.pop %v2382
  %v2443 = vtanh.pop %v2383
  %v2444 = vtanh.pop %v2390
  %v2445 = vtanh.pop %v2391
  %v2446 = vxor.u32 %v2384, 2147483648
  %v2447 = vxor.u32 %v2385, 2147483648
  %v2448 = vxor.u32 %v2392, 2147483648
  %v2449 = vxor.u32 %v2393, 2147483648
  %v2450 = vmul.f32 %v2446, 1.442695
  %v2451 = vpow.pop %v2450
  %v2452 = vmul.f32 %v2447, 1.442695
  %v2453 = vpow.pop %v2452
  %v2454 = vmul.f32 %v2448, 1.442695
  %v2455 = vpow.pop %v2454
  %v2456 = vmul.f32 %v2449, 1.442695
  %v2457 = vpow.pop %v2456
  %v2458 = vadd.f32 %v2451, 1.0
  %v2459 = vadd.f32 %v2453, 1.0
  %v2460 = vadd.f32 %v2455, 1.0
  %v2461 = vadd.f32 %v2457, 1.0
  %v2462 = vrcp.pop %v2458
  %v2463 = vmul.f32 1.0, %v2462
  %v2464 = vrcp.pop %v2459
  %v2465 = vmul.f32 1.0, %v2464
  %v2466 = vrcp.pop %v2460
  %v2467 = vmul.f32 1.0, %v2466
  %v2468 = vrcp.pop %v2461
  %v2469 = vmul.f32 1.0, %v2468
  %v2470 = vld [vmem:[#allocation3] sm:$0xff]
  %v2471 = vld [vmem:[#allocation3 + $0x8] sm:$0xff]
  %v2472 = vld [vmem:[#allocation3 + $0x10] sm:$0xff]
  %v2473 = vld [vmem:[#allocation3 + $0x18] sm:$0xff]
  %v2474 = vmul.f32 %v2435, %v2470
  %v2475 = vmul.f32 %v2437, %v2471
  %v2476 = vmul.f32 %v2439, %v2472
  %v2477 = vmul.f32 %v2441, %v2473
  %v2478 = vmul.f32 %v2411, %v2442
  %v2479 = vmul.f32 %v2413, %v2443
  %v2480 = vmul.f32 %v2415, %v2444
  %v2481 = vmul.f32 %v2417, %v2445
  %v2482 = vadd.f32 %v2474, %v2478
  %v2483 = vadd.f32 %v2475, %v2479
  %v2484 = vadd.f32 %v2476, %v2480
  %v2485 = vadd.f32 %v2477, %v2481
  %v2486 = vtanh.pop %v2482
  %v2487 = vtanh.pop %v2483
  %v2488 = vtanh.pop %v2484
  %v2489 = vtanh.pop %v2485
  %v2490 = vmul.f32 %v2463, %v2486
  %v2491 = vmul.f32 %v2465, %v2487
  %v2492 = vmul.f32 %v2467, %v2488
  %v2493 = vmul.f32 %v2469, %v2489
  %2494 = vst [vmem:[#allocation3] sm:$0xff] %v2482
  %2495 = vst [vmem:[#allocation3 + $0x8] sm:$0xff] %v2483
  %2496 = vst [vmem:[#allocation3 + $0x10] sm:$0xff] %v2484
  %2497 = vst [vmem:[#allocation3 + $0x18] sm:$0xff] %v2485
  %2498 = vst [vmem:[#allocation2] sm:$0xff] %v2490
  %2499 = vst [vmem:[#allocation2 + $0x8] sm:$0xff] %v2491
  %2500 = vst [vmem:[#allocation2 + $0x10] sm:$0xff] %v2492
  %2501 = vst [vmem:[#allocation2 + $0x18] sm:$0xff] %v2493
  %v2502 = vpack.c.bf16 %v2492, %v2490
  %v2503 = vpack.c.bf16 %v2493, %v2491
  %2504 = vmatprep.subr.bf16.mxu0 0
  %2505 = vmatpush1.bf16.msra.mxu0 %v214
  %2506 = vmatprep.subr.bf16.mxu0 0
  %2507 = vmatpush1.bf16.msra.mxu0 %v213
  %2508 = vmatprep.subr.bf16.mxu0 0
  %2509 = vmatpush1.bf16.msra.mxu0 %v212
  %2510 = vmatprep.subr.bf16.mxu0 0
  %2511 = vmatpush1.bf16.msra.mxu0 %v211
  %2512 = vmatprep.subr.bf16.mxu0 0
  %2513 = vmatpush1.bf16.msra.mxu0 %v210
  %2514 = vmatprep.subr.bf16.mxu0 0
  %2515 = vmatpush1.bf16.msra.mxu0 %v209
  %2516 = vmatprep.subr.bf16.mxu0 0
  %2517 = vmatpush1.bf16.msra.mxu0 %v208
  %2518 = vmatprep.subr.bf16.mxu0 0
  %2519 = vmatpush1.bf16.msra.mxu0 %v207
  %2520 = vmatprep.subr.bf16.mxu0 0
  %2521 = vmatpush2.bf16.msra.mxu0 %v222
  %2522 = vmatprep.subr.bf16.mxu0 0
  %2523 = vmatpush2.bf16.msra.mxu0 %v221
  %2524 = vmatprep.subr.bf16.mxu0 0
  %2525 = vmatpush2.bf16.msra.mxu0 %v220
  %2526 = vmatprep.subr.bf16.mxu0 0
  %2527 = vmatpush2.bf16.msra.mxu0 %v219
  %2528 = vmatprep.subr.bf16.mxu0 0
  %2529 = vmatpush2.bf16.msra.mxu0 %v218
  %2530 = vmatprep.subr.bf16.mxu0 0
  %2531 = vmatpush2.bf16.msra.mxu0 %v217
  %2532 = vmatprep.subr.bf16.mxu0 0
  %2533 = vmatpush2.bf16.msra.mxu0 %v216
  %2534 = vmatprep.subr.bf16.mxu0 0
  %2535 = vmatpush2.bf16.msra.mxu0 %v215
  %2536 = vmatprep.mubr.bf16.mxu0 %v2503
  %2537 = vmatmul.mubr.bf16.gmra.mxu0 %v2502
  %v2538 = vpop.f32.mrf.mxu0
  %v2539 = vadd.f32 %v141, %v2538
  %v2540 = vpop.f32.mrf.mxu0
  %v2541 = vpop.f32.mrf.mxu0
  %v2542 = vadd.f32 %v141, %v2541
  %v2543 = vpop.f32.mrf.mxu0
  %2544 = vdwg.mxu0
  %s2545 = scalar_lea.vmem %s4, 32
  %2546 = vst [vmem:[%s2545] sm:$0xff] %v2539
  %2547 = vst [vmem:[%s2545 + $0x8] sm:$0xff] %v2542
  %s2548 = scalar_lea.vmem %s0, 384
  %v2549 = vld [vmem:[%s2548] sm:$0xff]
  %v2550 = vld [vmem:[%s2548 + $0x8] sm:$0xff]
  %v2551 = vld [vmem:[%s2548 + $0x10] sm:$0xff]
  %v2552 = vld [vmem:[%s2548 + $0x18] sm:$0xff]
  %v2553 = vld [vmem:[%s2548 + $0x20] sm:$0xff]
  %v2554 = vld [vmem:[%s2548 + $0x28] sm:$0xff]
  %v2555 = vld [vmem:[%s2548 + $0x30] sm:$0xff]
  %v2556 = vld [vmem:[%s2548 + $0x38] sm:$0xff]
  %v2557 = vld [vmem:[%s2548 + $0x40] sm:$0xff]
  %v2558 = vld [vmem:[%s2548 + $0x48] sm:$0xff]
  %v2559 = vld [vmem:[%s2548 + $0x50] sm:$0xff]
  %v2560 = vld [vmem:[%s2548 + $0x58] sm:$0xff]
  %v2561 = vld [vmem:[%s2548 + $0x60] sm:$0xff]
  %v2562 = vld [vmem:[%s2548 + $0x68] sm:$0xff]
  %v2563 = vld [vmem:[%s2548 + $0x70] sm:$0xff]
  %v2564 = vld [vmem:[%s2548 + $0x78] sm:$0xff]
  %v2565 = vld [vmem:[#allocation2] sm:$0xff]
  %v2566 = vld [vmem:[#allocation2 + $0x8] sm:$0xff]
  %v2567 = vld [vmem:[#allocation2 + $0x10] sm:$0xff]
  %v2568 = vld [vmem:[#allocation2 + $0x18] sm:$0xff]
  %v2569 = vpack.c.bf16 %v2567, %v2565
  %v2570 = vpack.c.bf16 %v2568, %v2566
  %v2571 = vld [vmem:[%s1] sm:$0xff]
  %v2572 = vld [vmem:[%s1 + $0x8] sm:$0xff]
  %v2573 = vld [vmem:[%s1 + $0x10] sm:$0xff]
  %v2574 = vld [vmem:[%s1 + $0x18] sm:$0xff]
  %v2575 = vld [vmem:[%s1 + $0x20] sm:$0xff]
  %v2576 = vld [vmem:[%s1 + $0x28] sm:$0xff]
  %v2577 = vld [vmem:[%s1 + $0x30] sm:$0xff]
  %v2578 = vld [vmem:[%s1 + $0x38] sm:$0xff]
  %v2579 = vld [vmem:[%s1 + $0x40] sm:$0xff]
  %v2580 = vld [vmem:[%s1 + $0x48] sm:$0xff]
  %v2581 = vld [vmem:[%s1 + $0x50] sm:$0xff]
  %v2582 = vld [vmem:[%s1 + $0x58] sm:$0xff]
  %v2583 = vld [vmem:[%s1 + $0x60] sm:$0xff]
  %v2584 = vld [vmem:[%s1 + $0x68] sm:$0xff]
  %v2585 = vld [vmem:[%s1 + $0x70] sm:$0xff]
  %v2586 = vld [vmem:[%s1 + $0x78] sm:$0xff]
  %v2587 = vld [vmem:[%s1 + $0x80] sm:$0xff]
  %v2588 = vld [vmem:[%s1 + $0x88] sm:$0xff]
  %v2589 = vld [vmem:[%s1 + $0x90] sm:$0xff]
  %v2590 = vld [vmem:[%s1 + $0x98] sm:$0xff]
  %v2591 = vld [vmem:[%s1 + $0xa0] sm:$0xff]
  %v2592 = vld [vmem:[%s1 + $0xa8] sm:$0xff]
  %v2593 = vld [vmem:[%s1 + $0xb0] sm:$0xff]
  %v2594 = vld [vmem:[%s1 + $0xb8] sm:$0xff]
  %v2595 = vld [vmem:[%s1 + $0xc0] sm:$0xff]
  %v2596 = vld [vmem:[%s1 + $0xc8] sm:$0xff]
  %v2597 = vld [vmem:[%s1 + $0xd0] sm:$0xff]
  %v2598 = vld [vmem:[%s1 + $0xd8] sm:$0xff]
  %v2599 = vld [vmem:[%s1 + $0xe0] sm:$0xff]
  %v2600 = vld [vmem:[%s1 + $0xe8] sm:$0xff]
  %v2601 = vld [vmem:[%s1 + $0xf0] sm:$0xff]
  %v2602 = vld [vmem:[%s1 + $0xf8] sm:$0xff]
  %v2603 = vld [vmem:[%s1 + $0x100] sm:$0xff]
  %v2604 = vld [vmem:[%s1 + $0x108] sm:$0xff]
  %v2605 = vld [vmem:[%s1 + $0x110] sm:$0xff]
  %v2606 = vld [vmem:[%s1 + $0x118] sm:$0xff]
  %v2607 = vld [vmem:[%s1 + $0x120] sm:$0xff]
  %v2608 = vld [vmem:[%s1 + $0x128] sm:$0xff]
  %v2609 = vld [vmem:[%s1 + $0x130] sm:$0xff]
  %v2610 = vld [vmem:[%s1 + $0x138] sm:$0xff]
  %v2611 = vld [vmem:[%s1 + $0x140] sm:$0xff]
  %v2612 = vld [vmem:[%s1 + $0x148] sm:$0xff]
  %v2613 = vld [vmem:[%s1 + $0x150] sm:$0xff]
  %v2614 = vld [vmem:[%s1 + $0x158] sm:$0xff]
  %v2615 = vld [vmem:[%s1 + $0x160] sm:$0xff]
  %v2616 = vld [vmem:[%s1 + $0x168] sm:$0xff]
  %v2617 = vld [vmem:[%s1 + $0x170] sm:$0xff]
  %v2618 = vld [vmem:[%s1 + $0x178] sm:$0xff]
  %v2619 = vld [vmem:[%s1 + $0x180] sm:$0xff]
  %v2620 = vld [vmem:[%s1 + $0x188] sm:$0xff]
  %v2621 = vld [vmem:[%s1 + $0x190] sm:$0xff]
  %v2622 = vld [vmem:[%s1 + $0x198] sm:$0xff]
  %v2623 = vld [vmem:[%s1 + $0x1a0] sm:$0xff]
  %v2624 = vld [vmem:[%s1 + $0x1a8] sm:$0xff]
  %v2625 = vld [vmem:[%s1 + $0x1b0] sm:$0xff]
  %v2626 = vld [vmem:[%s1 + $0x1b8] sm:$0xff]
  %v2627 = vld [vmem:[%s1 + $0x1c0] sm:$0xff]
  %v2628 = vld [vmem:[%s1 + $0x1c8] sm:$0xff]
  %v2629 = vld [vmem:[%s1 + $0x1d0] sm:$0xff]
  %v2630 = vld [vmem:[%s1 + $0x1d8] sm:$0xff]
  %v2631 = vld [vmem:[%s1 + $0x1e0] sm:$0xff]
  %v2632 = vld [vmem:[%s1 + $0x1e8] sm:$0xff]
  %v2633 = vld [vmem:[%s1 + $0x1f0] sm:$0xff]
  %v2634 = vld [vmem:[%s1 + $0x1f8] sm:$0xff]
  %v2635 = vld [vmem:[%s1 + $0x200] sm:$0xff]
  %v2636 = vld [vmem:[%s1 + $0x208] sm:$0xff]
  %v2637 = vld [vmem:[%s1 + $0x210] sm:$0xff]
  %v2638 = vld [vmem:[%s1 + $0x218] sm:$0xff]
  %v2639 = vld [vmem:[%s1 + $0x220] sm:$0xff]
  %v2640 = vld [vmem:[%s1 + $0x228] sm:$0xff]
  %v2641 = vld [vmem:[%s1 + $0x230] sm:$0xff]
  %v2642 = vld [vmem:[%s1 + $0x238] sm:$0xff]
  %v2643 = vld [vmem:[%s1 + $0x240] sm:$0xff]
  %v2644 = vld [vmem:[%s1 + $0x248] sm:$0xff]
  %v2645 = vld [vmem:[%s1 + $0x250] sm:$0xff]
  %v2646 = vld [vmem:[%s1 + $0x258] sm:$0xff]
  %v2647 = vld [vmem:[%s1 + $0x260] sm:$0xff]
  %v2648 = vld [vmem:[%s1 + $0x268] sm:$0xff]
  %v2649 = vld [vmem:[%s1 + $0x270] sm:$0xff]
  %v2650 = vld [vmem:[%s1 + $0x278] sm:$0xff]
  %v2651 = vld [vmem:[%s1 + $0x280] sm:$0xff]
  %v2652 = vld [vmem:[%s1 + $0x288] sm:$0xff]
  %v2653 = vld [vmem:[%s1 + $0x290] sm:$0xff]
  %v2654 = vld [vmem:[%s1 + $0x298] sm:$0xff]
  %v2655 = vld [vmem:[%s1 + $0x2a0] sm:$0xff]
  %v2656 = vld [vmem:[%s1 + $0x2a8] sm:$0xff]
  %v2657 = vld [vmem:[%s1 + $0x2b0] sm:$0xff]
  %v2658 = vld [vmem:[%s1 + $0x2b8] sm:$0xff]
  %v2659 = vld [vmem:[%s1 + $0x2c0] sm:$0xff]
  %v2660 = vld [vmem:[%s1 + $0x2c8] sm:$0xff]
  %v2661 = vld [vmem:[%s1 + $0x2d0] sm:$0xff]
  %v2662 = vld [vmem:[%s1 + $0x2d8] sm:$0xff]
  %v2663 = vld [vmem:[%s1 + $0x2e0] sm:$0xff]
  %v2664 = vld [vmem:[%s1 + $0x2e8] sm:$0xff]
  %v2665 = vld [vmem:[%s1 + $0x2f0] sm:$0xff]
  %v2666 = vld [vmem:[%s1 + $0x2f8] sm:$0xff]
  %v2667 = vld [vmem:[%s1 + $0x300] sm:$0xff]
  %v2668 = vld [vmem:[%s1 + $0x308] sm:$0xff]
  %v2669 = vld [vmem:[%s1 + $0x310] sm:$0xff]
  %v2670 = vld [vmem:[%s1 + $0x318] sm:$0xff]
  %v2671 = vld [vmem:[%s1 + $0x320] sm:$0xff]
  %v2672 = vld [vmem:[%s1 + $0x328] sm:$0xff]
  %v2673 = vld [vmem:[%s1 + $0x330] sm:$0xff]
  %v2674 = vld [vmem:[%s1 + $0x338] sm:$0xff]
  %v2675 = vld [vmem:[%s1 + $0x340] sm:$0xff]
  %v2676 = vld [vmem:[%s1 + $0x348] sm:$0xff]
  %v2677 = vld [vmem:[%s1 + $0x350] sm:$0xff]
  %v2678 = vld [vmem:[%s1 + $0x358] sm:$0xff]
  %v2679 = vld [vmem:[%s1 + $0x360] sm:$0xff]
  %v2680 = vld [vmem:[%s1 + $0x368] sm:$0xff]
  %v2681 = vld [vmem:[%s1 + $0x370] sm:$0xff]
  %v2682 = vld [vmem:[%s1 + $0x378] sm:$0xff]
  %v2683 = vld [vmem:[%s1 + $0x380] sm:$0xff]
  %v2684 = vld [vmem:[%s1 + $0x388] sm:$0xff]
  %v2685 = vld [vmem:[%s1 + $0x390] sm:$0xff]
  %v2686 = vld [vmem:[%s1 + $0x398] sm:$0xff]
  %v2687 = vld [vmem:[%s1 + $0x3a0] sm:$0xff]
  %v2688 = vld [vmem:[%s1 + $0x3a8] sm:$0xff]
  %v2689 = vld [vmem:[%s1 + $0x3b0] sm:$0xff]
  %v2690 = vld [vmem:[%s1 + $0x3b8] sm:$0xff]
  %v2691 = vld [vmem:[%s1 + $0x3c0] sm:$0xff]
  %v2692 = vld [vmem:[%s1 + $0x3c8] sm:$0xff]
  %v2693 = vld [vmem:[%s1 + $0x3d0] sm:$0xff]
  %v2694 = vld [vmem:[%s1 + $0x3d8] sm:$0xff]
  %v2695 = vld [vmem:[%s1 + $0x3e0] sm:$0xff]
  %v2696 = vld [vmem:[%s1 + $0x3e8] sm:$0xff]
  %v2697 = vld [vmem:[%s1 + $0x3f0] sm:$0xff]
  %v2698 = vld [vmem:[%s1 + $0x3f8] sm:$0xff]
  %v2827 = vunpack.c.l.b16 %v2571
  %v2828 = vunpack.c.h.b16 %v2571
  %v2829 = vunpack.c.l.b16 %v2572
  %v2830 = vunpack.c.h.b16 %v2572
  %v2831 = vunpack.c.l.b16 %v2573
  %v2832 = vunpack.c.h.b16 %v2573
  %v2833 = vunpack.c.l.b16 %v2574
  %v2834 = vunpack.c.h.b16 %v2574
  %v2835 = vunpack.c.l.b16 %v2575
  %v2836 = vunpack.c.h.b16 %v2575
  %v2837 = vunpack.c.l.b16 %v2576
  %v2838 = vunpack.c.h.b16 %v2576
  %v2839 = vunpack.c.l.b16 %v2577
  %v2840 = vunpack.c.h.b16 %v2577
  %v2841 = vunpack.c.l.b16 %v2578
  %v2842 = vunpack.c.h.b16 %v2578
  %v2843 = vunpack.c.l.b16 %v2579
  %v2844 = vunpack.c.h.b16 %v2579
  %v2845 = vunpack.c.l.b16 %v2580
  %v2846 = vunpack.c.h.b16 %v2580
  %v2847 = vunpack.c.l.b16 %v2581
  %v2848 = vunpack.c.h.b16 %v2581
  %v2849 = vunpack.c.l.b16 %v2582
  %v2850 = vunpack.c.h.b16 %v2582
  %v2851 = vunpack.c.l.b16 %v2583
  %v2852 = vunpack.c.h.b16 %v2583
  %v2853 = vunpack.c.l.b16 %v2584
  %v2854 = vunpack.c.h.b16 %v2584
  %v2855 = vunpack.c.l.b16 %v2585
  %v2856 = vunpack.c.h.b16 %v2585
  %v2857 = vunpack.c.l.b16 %v2586
  %v2858 = vunpack.c.h.b16 %v2586
  %v2859 = vunpack.c.l.b16 %v2587
  %v2860 = vunpack.c.h.b16 %v2587
  %v2861 = vunpack.c.l.b16 %v2588
  %v2862 = vunpack.c.h.b16 %v2588
  %v2863 = vunpack.c.l.b16 %v2589
  %v2864 = vunpack.c.h.b16 %v2589
  %v2865 = vunpack.c.l.b16 %v2590
  %v2866 = vunpack.c.h.b16 %v2590
  %v2867 = vunpack.c.l.b16 %v2591
  %v2868 = vunpack.c.h.b16 %v2591
  %v2869 = vunpack.c.l.b16 %v2592
  %v2870 = vunpack.c.h.b16 %v2592
  %v2871 = vunpack.c.l.b16 %v2593
  %v2872 = vunpack.c.h.b16 %v2593
  %v2873 = vunpack.c.l.b16 %v2594
  %v2874 = vunpack.c.h.b16 %v2594
  %v2875 = vunpack.c.l.b16 %v2595
  %v2876 = vunpack.c.h.b16 %v2595
  %v2877 = vunpack.c.l.b16 %v2596
  %v2878 = vunpack.c.h.b16 %v2596
  %v2879 = vunpack.c.l.b16 %v2597
  %v2880 = vunpack.c.h.b16 %v2597
  %v2881 = vunpack.c.l.b16 %v2598
  %v2882 = vunpack.c.h.b16 %v2598
  %v2883 = vunpack.c.l.b16 %v2599
  %v2884 = vunpack.c.h.b16 %v2599
  %v2885 = vunpack.c.l.b16 %v2600
  %v2886 = vunpack.c.h.b16 %v2600
  %v2887 = vunpack.c.l.b16 %v2601
  %v2888 = vunpack.c.h.b16 %v2601
  %v2889 = vunpack.c.l.b16 %v2602
  %v2890 = vunpack.c.h.b16 %v2602
  %v2891 = vunpack.c.l.b16 %v2603
  %v2892 = vunpack.c.h.b16 %v2603
  %v2893 = vunpack.c.l.b16 %v2604
  %v2894 = vunpack.c.h.b16 %v2604
  %v2895 = vunpack.c.l.b16 %v2605
  %v2896 = vunpack.c.h.b16 %v2605
  %v2897 = vunpack.c.l.b16 %v2606
  %v2898 = vunpack.c.h.b16 %v2606
  %v2899 = vunpack.c.l.b16 %v2607
  %v2900 = vunpack.c.h.b16 %v2607
  %v2901 = vunpack.c.l.b16 %v2608
  %v2902 = vunpack.c.h.b16 %v2608
  %v2903 = vunpack.c.l.b16 %v2609
  %v2904 = vunpack.c.h.b16 %v2609
  %v2905 = vunpack.c.l.b16 %v2610
  %v2906 = vunpack.c.h.b16 %v2610
  %v2907 = vunpack.c.l.b16 %v2611
  %v2908 = vunpack.c.h.b16 %v2611
  %v2909 = vunpack.c.l.b16 %v2612
  %v2910 = vunpack.c.h.b16 %v2612
  %v2911 = vunpack.c.l.b16 %v2613
  %v2912 = vunpack.c.h.b16 %v2613
  %v2913 = vunpack.c.l.b16 %v2614
  %v2914 = vunpack.c.h.b16 %v2614
  %v2915 = vunpack.c.l.b16 %v2615
  %v2916 = vunpack.c.h.b16 %v2615
  %v2917 = vunpack.c.l.b16 %v2616
  %v2918 = vunpack.c.h.b16 %v2616
  %v2919 = vunpack.c.l.b16 %v2617
  %v2920 = vunpack.c.h.b16 %v2617
  %v2921 = vunpack.c.l.b16 %v2618
  %v2922 = vunpack.c.h.b16 %v2618
  %v2923 = vunpack.c.l.b16 %v2619
  %v2924 = vunpack.c.h.b16 %v2619
  %v2925 = vunpack.c.l.b16 %v2620
  %v2926 = vunpack.c.h.b16 %v2620
  %v2927 = vunpack.c.l.b16 %v2621
  %v2928 = vunpack.c.h.b16 %v2621
  %v2929 = vunpack.c.l.b16 %v2622
  %v2930 = vunpack.c.h.b16 %v2622
  %v2931 = vunpack.c.l.b16 %v2623
  %v2932 = vunpack.c.h.b16 %v2623
  %v2933 = vunpack.c.l.b16 %v2624
  %v2934 = vunpack.c.h.b16 %v2624
  %v2935 = vunpack.c.l.b16 %v2625
  %v2936 = vunpack.c.h.b16 %v2625
  %v2937 = vunpack.c.l.b16 %v2626
  %v2938 = vunpack.c.h.b16 %v2626
  %v2939 = vunpack.c.l.b16 %v2627
  %v2940 = vunpack.c.h.b16 %v2627
  %v2941 = vunpack.c.l.b16 %v2628
  %v2942 = vunpack.c.h.b16 %v2628
  %v2943 = vunpack.c.l.b16 %v2629
  %v2944 = vunpack.c.h.b16 %v2629
  %v2945 = vunpack.c.l.b16 %v2630
  %v2946 = vunpack.c.h.b16 %v2630
  %v2947 = vunpack.c.l.b16 %v2631
  %v2948 = vunpack.c.h.b16 %v2631
  %v2949 = vunpack.c.l.b16 %v2632
  %v2950 = vunpack.c.h.b16 %v2632
  %v2951 = vunpack.c.l.b16 %v2633
  %v2952 = vunpack.c.h.b16 %v2633
  %v2953 = vunpack.c.l.b16 %v2634
  %v2954 = vunpack.c.h.b16 %v2634
  %v2955 = vunpack.c.l.b16 %v2635
  %v2956 = vunpack.c.h.b16 %v2635
  %v2957 = vunpack.c.l.b16 %v2636
  %v2958 = vunpack.c.h.b16 %v2636
  %v2959 = vunpack.c.l.b16 %v2637
  %v2960 = vunpack.c.h.b16 %v2637
  %v2961 = vunpack.c.l.b16 %v2638
  %v2962 = vunpack.c.h.b16 %v2638
  %v2963 = vunpack.c.l.b16 %v2639
  %v2964 = vunpack.c.h.b16 %v2639
  %v2965 = vunpack.c.l.b16 %v2640
  %v2966 = vunpack.c.h.b16 %v2640
  %v2967 = vunpack.c.l.b16 %v2641
  %v2968 = vunpack.c.h.b16 %v2641
  %v2969 = vunpack.c.l.b16 %v2642
  %v2970 = vunpack.c.h.b16 %v2642
  %v2971 = vunpack.c.l.b16 %v2643
  %v2972 = vunpack.c.h.b16 %v2643
  %v2973 = vunpack.c.l.b16 %v2644
  %v2974 = vunpack.c.h.b16 %v2644
  %v2975 = vunpack.c.l.b16 %v2645
  %v2976 = vunpack.c.h.b16 %v2645
  %v2977 = vunpack.c.l.b16 %v2646
  %v2978 = vunpack.c.h.b16 %v2646
  %v2979 = vunpack.c.l.b16 %v2647
  %v2980 = vunpack.c.h.b16 %v2647
  %v2981 = vunpack.c.l.b16 %v2648
  %v2982 = vunpack.c.h.b16 %v2648
  %v2983 = vunpack.c.l.b16 %v2649
  %v2984 = vunpack.c.h.b16 %v2649
  %v2985 = vunpack.c.l.b16 %v2650
  %v2986 = vunpack.c.h.b16 %v2650
  %v2987 = vunpack.c.l.b16 %v2651
  %v2988 = vunpack.c.h.b16 %v2651
  %v2989 = vunpack.c.l.b16 %v2652
  %v2990 = vunpack.c.h.b16 %v2652
  %v2991 = vunpack.c.l.b16 %v2653
  %v2992 = vunpack.c.h.b16 %v2653
  %v2993 = vunpack.c.l.b16 %v2654
  %v2994 = vunpack.c.h.b16 %v2654
  %v2995 = vunpack.c.l.b16 %v2655
  %v2996 = vunpack.c.h.b16 %v2655
  %v2997 = vunpack.c.l.b16 %v2656
  %v2998 = vunpack.c.h.b16 %v2656
  %v2999 = vunpack.c.l.b16 %v2657
  %v3000 = vunpack.c.h.b16 %v2657
  %v3001 = vunpack.c.l.b16 %v2658
  %v3002 = vunpack.c.h.b16 %v2658
  %v3003 = vunpack.c.l.b16 %v2659
  %v3004 = vunpack.c.h.b16 %v2659
  %v3005 = vunpack.c.l.b16 %v2660
  %v3006 = vunpack.c.h.b16 %v2660
  %v3007 = vunpack.c.l.b16 %v2661
  %v3008 = vunpack.c.h.b16 %v2661
  %v3009 = vunpack.c.l.b16 %v2662
  %v3010 = vunpack.c.h.b16 %v2662
  %v3011 = vunpack.c.l.b16 %v2663
  %v3012 = vunpack.c.h.b16 %v2663
  %v3013 = vunpack.c.l.b16 %v2664
  %v3014 = vunpack.c.h.b16 %v2664
  %v3015 = vunpack.c.l.b16 %v2665
  %v3016 = vunpack.c.h.b16 %v2665
  %v3017 = vunpack.c.l.b16 %v2666
  %v3018 = vunpack.c.h.b16 %v2666
  %v3019 = vunpack.c.l.b16 %v2667
  %v3020 = vunpack.c.h.b16 %v2667
  %v3021 = vunpack.c.l.b16 %v2668
  %v3022 = vunpack.c.h.b16 %v2668
  %v3023 = vunpack.c.l.b16 %v2669
  %v3024 = vunpack.c.h.b16 %v2669
  %v3025 = vunpack.c.l.b16 %v2670
  %v3026 = vunpack.c.h.b16 %v2670
  %v3027 = vunpack.c.l.b16 %v2671
  %v3028 = vunpack.c.h.b16 %v2671
  %v3029 = vunpack.c.l.b16 %v2672
  %v3030 = vunpack.c.h.b16 %v2672
  %v3031 = vunpack.c.l.b16 %v2673
  %v3032 = vunpack.c.h.b16 %v2673
  %v3033 = vunpack.c.l.b16 %v2674
  %v3034 = vunpack.c.h.b16 %v2674
  %v3035 = vunpack.c.l.b16 %v2675
  %v3036 = vunpack.c.h.b16 %v2675
  %v3037 = vunpack.c.l.b16 %v2676
  %v3038 = vunpack.c.h.b16 %v2676
  %v3039 = vunpack.c.l.b16 %v2677
  %v3040 = vunpack.c.h.b16 %v2677
  %v3041 = vunpack.c.l.b16 %v2678
  %v3042 = vunpack.c.h.b16 %v2678
  %v3043 = vunpack.c.l.b16 %v2679
  %v3044 = vunpack.c.h.b16 %v2679
  %v3045 = vunpack.c.l.b16 %v2680
  %v3046 = vunpack.c.h.b16 %v2680
  %v3047 = vunpack.c.l.b16 %v2681
  %v3048 = vunpack.c.h.b16 %v2681
  %v3049 = vunpack.c.l.b16 %v2682
  %v3050 = vunpack.c.h.b16 %v2682
  %v3051 = vunpack.c.l.b16 %v2683
  %v3052 = vunpack.c.h.b16 %v2683
  %v3053 = vunpack.c.l.b16 %v2684
  %v3054 = vunpack.c.h.b16 %v2684
  %v3055 = vunpack.c.l.b16 %v2685
  %v3056 = vunpack.c.h.b16 %v2685
  %v3057 = vunpack.c.l.b16 %v2686
  %v3058 = vunpack.c.h.b16 %v2686
  %v3059 = vunpack.c.l.b16 %v2687
  %v3060 = vunpack.c.h.b16 %v2687
  %v3061 = vunpack.c.l.b16 %v2688
  %v3062 = vunpack.c.h.b16 %v2688
  %v3063 = vunpack.c.l.b16 %v2689
  %v3064 = vunpack.c.h.b16 %v2689
  %v3065 = vunpack.c.l.b16 %v2690
  %v3066 = vunpack.c.h.b16 %v2690
  %v3067 = vunpack.c.l.b16 %v2691
  %v3068 = vunpack.c.h.b16 %v2691
  %v3069 = vunpack.c.l.b16 %v2692
  %v3070 = vunpack.c.h.b16 %v2692
  %v3071 = vunpack.c.l.b16 %v2693
  %v3072 = vunpack.c.h.b16 %v2693
  %v3073 = vunpack.c.l.b16 %v2694
  %v3074 = vunpack.c.h.b16 %v2694
  %v3075 = vunpack.c.l.b16 %v2695
  %v3076 = vunpack.c.h.b16 %v2695
  %v3077 = vunpack.c.l.b16 %v2696
  %v3078 = vunpack.c.h.b16 %v2696
  %v3079 = vunpack.c.l.b16 %v2697
  %v3080 = vunpack.c.h.b16 %v2697
  %v3081 = vunpack.c.l.b16 %v2698
  %v3082 = vunpack.c.h.b16 %v2698
  %v3083 = vpack.c.b16 %v2835, %v2827
  %v3084 = vpack.c.b16 %v2836, %v2828
  %v3085 = vpack.c.b16 %v2837, %v2829
  %v3086 = vpack.c.b16 %v2838, %v2830
  %v3087 = vpack.c.b16 %v2839, %v2831
  %v3088 = vpack.c.b16 %v2840, %v2832
  %v3089 = vpack.c.b16 %v2841, %v2833
  %v3090 = vpack.c.b16 %v2842, %v2834
  %v3091 = vpack.c.b16 %v2851, %v2843
  %v3092 = vpack.c.b16 %v2852, %v2844
  %v3093 = vpack.c.b16 %v2853, %v2845
  %v3094 = vpack.c.b16 %v2854, %v2846
  %v3095 = vpack.c.b16 %v2855, %v2847
  %v3096 = vpack.c.b16 %v2856, %v2848
  %v3097 = vpack.c.b16 %v2857, %v2849
  %v3098 = vpack.c.b16 %v2858, %v2850
  %v3099 = vpack.c.b16 %v2867, %v2859
  %v3100 = vpack.c.b16 %v2868, %v2860
  %v3101 = vpack.c.b16 %v2869, %v2861
  %v3102 = vpack.c.b16 %v2870, %v2862
  %v3103 = vpack.c.b16 %v2871, %v2863
  %v3104 = vpack.c.b16 %v2872, %v2864
  %v3105 = vpack.c.b16 %v2873, %v2865
  %v3106 = vpack.c.b16 %v2874, %v2866
  %v3107 = vpack.c.b16 %v2883, %v2875
  %v3108 = vpack.c.b16 %v2884, %v2876
  %v3109 = vpack.c.b16 %v2885, %v2877
  %v3110 = vpack.c.b16 %v2886, %v2878
  %v3111 = vpack.c.b16 %v2887, %v2879
  %v3112 = vpack.c.b16 %v2888, %v2880
  %v3113 = vpack.c.b16 %v2889, %v2881
  %v3114 = vpack.c.b16 %v2890, %v2882
  %v3115 = vpack.c.b16 %v2899, %v2891
  %v3116 = vpack.c.b16 %v2900, %v2892
  %v3117 = vpack.c.b16 %v2901, %v2893
  %v3118 = vpack.c.b16 %v2902, %v2894
  %v3119 = vpack.c.b16 %v2903, %v2895
  %v3120 = vpack.c.b16 %v2904, %v2896
  %v3121 = vpack.c.b16 %v2905, %v2897
  %v3122 = vpack.c.b16 %v2906, %v2898
  %v3123 = vpack.c.b16 %v2915, %v2907
  %v3124 = vpack.c.b16 %v2916, %v2908
  %v3125 = vpack.c.b16 %v2917, %v2909
  %v3126 = vpack.c.b16 %v2918, %v2910
  %v3127 = vpack.c.b16 %v2919, %v2911
  %v3128 = vpack.c.b16 %v2920, %v2912
  %v3129 = vpack.c.b16 %v2921, %v2913
  %v3130 = vpack.c.b16 %v2922, %v2914
  %v3131 = vpack.c.b16 %v2931, %v2923
  %v3132 = vpack.c.b16 %v2932, %v2924
  %v3133 = vpack.c.b16 %v2933, %v2925
  %v3134 = vpack.c.b16 %v2934, %v2926
  %v3135 = vpack.c.b16 %v2935, %v2927
  %v3136 = vpack.c.b16 %v2936, %v2928
  %v3137 = vpack.c.b16 %v2937, %v2929
  %v3138 = vpack.c.b16 %v2938, %v2930
  %v3139 = vpack.c.b16 %v2947, %v2939
  %v3140 = vpack.c.b16 %v2948, %v2940
  %v3141 = vpack.c.b16 %v2949, %v2941
  %v3142 = vpack.c.b16 %v2950, %v2942
  %v3143 = vpack.c.b16 %v2951, %v2943
  %v3144 = vpack.c.b16 %v2952, %v2944
  %v3145 = vpack.c.b16 %v2953, %v2945
  %v3146 = vpack.c.b16 %v2954, %v2946
  %v3147 = vpack.c.b16 %v2963, %v2955
  %v3148 = vpack.c.b16 %v2964, %v2956
  %v3149 = vpack.c.b16 %v2965, %v2957
  %v3150 = vpack.c.b16 %v2966, %v2958
  %v3151 = vpack.c.b16 %v2967, %v2959
  %v3152 = vpack.c.b16 %v2968, %v2960
  %v3153 = vpack.c.b16 %v2969, %v2961
  %v3154 = vpack.c.b16 %v2970, %v2962
  %v3155 = vpack.c.b16 %v2979, %v2971
  %v3156 = vpack.c.b16 %v2980, %v2972
  %v3157 = vpack.c.b16 %v2981, %v2973
  %v3158 = vpack.c.b16 %v2982, %v2974
  %v3159 = vpack.c.b16 %v2983, %v2975
  %v3160 = vpack.c.b16 %v2984, %v2976
  %v3161 = vpack.c.b16 %v2985, %v2977
  %v3162 = vpack.c.b16 %v2986, %v2978
  %v3163 = vpack.c.b16 %v2995, %v2987
  %v3164 = vpack.c.b16 %v2996, %v2988
  %v3165 = vpack.c.b16 %v2997, %v2989
  %v3166 = vpack.c.b16 %v2998, %v2990
  %v3167 = vpack.c.b16 %v2999, %v2991
  %v3168 = vpack.c.b16 %v3000, %v2992
  %v3169 = vpack.c.b16 %v3001, %v2993
  %v3170 = vpack.c.b16 %v3002, %v2994
  %v3171 = vpack.c.b16 %v3011, %v3003
  %v3172 = vpack.c.b16 %v3012, %v3004
  %v3173 = vpack.c.b16 %v3013, %v3005
  %v3174 = vpack.c.b16 %v3014, %v3006
  %v3175 = vpack.c.b16 %v3015, %v3007
  %v3176 = vpack.c.b16 %v3016, %v3008
  %v3177 = vpack.c.b16 %v3017, %v3009
  %v3178 = vpack.c.b16 %v3018, %v3010
  %v3179 = vpack.c.b16 %v3027, %v3019
  %v3180 = vpack.c.b16 %v3028, %v3020
  %v3181 = vpack.c.b16 %v3029, %v3021
  %v3182 = vpack.c.b16 %v3030, %v3022
  %v3183 = vpack.c.b16 %v3031, %v3023
  %v3184 = vpack.c.b16 %v3032, %v3024
  %v3185 = vpack.c.b16 %v3033, %v3025
  %v3186 = vpack.c.b16 %v3034, %v3026
  %v3187 = vpack.c.b16 %v3043, %v3035
  %v3188 = vpack.c.b16 %v3044, %v3036
  %v3189 = vpack.c.b16 %v3045, %v3037
  %v3190 = vpack.c.b16 %v3046, %v3038
  %v3191 = vpack.c.b16 %v3047, %v3039
  %v3192 = vpack.c.b16 %v3048, %v3040
  %v3193 = vpack.c.b16 %v3049, %v3041
  %v3194 = vpack.c.b16 %v3050, %v3042
  %v3195 = vpack.c.b16 %v3059, %v3051
  %v3196 = vpack.c.b16 %v3060, %v3052
  %v3197 = vpack.c.b16 %v3061, %v3053
  %v3198 = vpack.c.b16 %v3062, %v3054
  %v3199 = vpack.c.b16 %v3063, %v3055
  %v3200 = vpack.c.b16 %v3064, %v3056
  %v3201 = vpack.c.b16 %v3065, %v3057
  %v3202 = vpack.c.b16 %v3066, %v3058
  %v3203 = vpack.c.b16 %v3075, %v3067
  %v3204 = vpack.c.b16 %v3076, %v3068
  %v3205 = vpack.c.b16 %v3077, %v3069
  %v3206 = vpack.c.b16 %v3078, %v3070
  %v3207 = vpack.c.b16 %v3079, %v3071
  %v3208 = vpack.c.b16 %v3080, %v3072
  %v3209 = vpack.c.b16 %v3081, %v3073
  %v3210 = vpack.c.b16 %v3082, %v3074
  %3339 = vmatprep.subr.bf16.mxu0 %v3140
  %3340 = vmatpush1.bf16.msra.mxu0 %v3139
  %3341 = vmatprep.subr.bf16.mxu0 %v3132
  %3342 = vmatpush1.bf16.msra.mxu0 %v3131
  %3343 = vmatprep.subr.bf16.mxu0 %v3124
  %3344 = vmatpush1.bf16.msra.mxu0 %v3123
  %3345 = vmatprep.subr.bf16.mxu0 %v3116
  %3346 = vmatpush1.bf16.msra.mxu0 %v3115
  %3347 = vmatprep.subr.bf16.mxu0 %v3108
  %3348 = vmatpush1.bf16.msra.mxu0 %v3107
  %3349 = vmatprep.subr.bf16.mxu0 %v3100
  %3350 = vmatpush1.bf16.msra.mxu0 %v3099
  %3351 = vmatprep.subr.bf16.mxu0 %v3092
  %3352 = vmatpush1.bf16.msra.mxu0 %v3091
  %3353 = vmatprep.subr.bf16.mxu0 %v3084
  %3354 = vmatpush1.bf16.msra.mxu0 %v3083
  %3355 = vmatprep.subr.bf16.mxu0 %v3204
  %3356 = vmatpush2.bf16.msra.mxu0 %v3203
  %3357 = vmatprep.subr.bf16.mxu0 %v3196
  %3358 = vmatpush2.bf16.msra.mxu0 %v3195
  %3359 = vmatprep.subr.bf16.mxu0 %v3188
  %3360 = vmatpush2.bf16.msra.mxu0 %v3187
  %3361 = vmatprep.subr.bf16.mxu0 %v3180
  %3362 = vmatpush2.bf16.msra.mxu0 %v3179
  %3363 = vmatprep.subr.bf16.mxu0 %v3172
  %3364 = vmatpush2.bf16.msra.mxu0 %v3171
  %3365 = vmatprep.subr.bf16.mxu0 %v3164
  %3366 = vmatpush2.bf16.msra.mxu0 %v3163
  %3367 = vmatprep.subr.bf16.mxu0 %v3156
  %3368 = vmatpush2.bf16.msra.mxu0 %v3155
  %3369 = vmatprep.subr.bf16.mxu0 %v3148
  %3370 = vmatpush2.bf16.msra.mxu0 %v3147
  %3371 = vmatprep.mubr.bf16.mxu0 %v2570
  %3372 = vmatmul.mubr.bf16.gmra.mxu0 %v2569
  %v3373 = vpop.f32.mrf.mxu0
  %v3374 = vadd.f32 0.0, %v3373
  %v3375 = vpop.f32.mrf.mxu0
  %v3376 = vadd.f32 0.0, %v3375
  %v3377 = vpop.f32.mrf.mxu0
  %v3378 = vadd.f32 0.0, %v3377
  %v3379 = vpop.f32.mrf.mxu0
  %v3380 = vadd.f32 0.0, %v3379
  %3381 = vdwg.mxu0
  %3382 = vmatprep.subr.bf16.mxu0 %v3142
  %3383 = vmatpush1.bf16.msra.mxu0 %v3141
  %3384 = vmatprep.subr.bf16.mxu0 %v3134
  %3385 = vmatpush1.bf16.msra.mxu0 %v3133
  %3386 = vmatprep.subr.bf16.mxu0 %v3126
  %3387 = vmatpush1.bf16.msra.mxu0 %v3125
  %3388 = vmatprep.subr.bf16.mxu0 %v3118
  %3389 = vmatpush1.bf16.msra.mxu0 %v3117
  %3390 = vmatprep.subr.bf16.mxu0 %v3110
  %3391 = vmatpush1.bf16.msra.mxu0 %v3109
  %3392 = vmatprep.subr.bf16.mxu0 %v3102
  %3393 = vmatpush1.bf16.msra.mxu0 %v3101
  %3394 = vmatprep.subr.bf16.mxu0 %v3094
  %3395 = vmatpush1.bf16.msra.mxu0 %v3093
  %3396 = vmatprep.subr.bf16.mxu0 %v3086
  %3397 = vmatpush1.bf16.msra.mxu0 %v3085
  %3398 = vmatprep.subr.bf16.mxu0 %v3206
  %3399 = vmatpush2.bf16.msra.mxu0 %v3205
  %3400 = vmatprep.subr.bf16.mxu0 %v3198
  %3401 = vmatpush2.bf16.msra.mxu0 %v3197
  %3402 = vmatprep.subr.bf16.mxu0 %v3190
  %3403 = vmatpush2.bf16.msra.mxu0 %v3189
  %3404 = vmatprep.subr.bf16.mxu0 %v3182
  %3405 = vmatpush2.bf16.msra.mxu0 %v3181
  %3406 = vmatprep.subr.bf16.mxu0 %v3174
  %3407 = vmatpush2.bf16.msra.mxu0 %v3173
  %3408 = vmatprep.subr.bf16.mxu0 %v3166
  %3409 = vmatpush2.bf16.msra.mxu0 %v3165
  %3410 = vmatprep.subr.bf16.mxu0 %v3158
  %3411 = vmatpush2.bf16.msra.mxu0 %v3157
  %3412 = vmatprep.subr.bf16.mxu0 %v3150
  %3413 = vmatpush2.bf16.msra.mxu0 %v3149
  %3414 = vmatprep.mubr.bf16.mxu0 %v2570
  %3415 = vmatmul.mubr.bf16.gmra.mxu0 %v2569
  %v3416 = vpop.f32.mrf.mxu0
  %v3417 = vadd.f32 0.0, %v3416
  %v3418 = vpop.f32.mrf.mxu0
  %v3419 = vadd.f32 0.0, %v3418
  %v3420 = vpop.f32.mrf.mxu0
  %v3421 = vadd.f32 0.0, %v3420
  %v3422 = vpop.f32.mrf.mxu0
  %v3423 = vadd.f32 0.0, %v3422
  %3424 = vdwg.mxu0
  %3425 = vmatprep.subr.bf16.mxu0 %v3144
  %3426 = vmatpush1.bf16.msra.mxu0 %v3143
  %3427 = vmatprep.subr.bf16.mxu0 %v3136
  %3428 = vmatpush1.bf16.msra.mxu0 %v3135
  %3429 = vmatprep.subr.bf16.mxu0 %v3128
  %3430 = vmatpush1.bf16.msra.mxu0 %v3127
  %3431 = vmatprep.subr.bf16.mxu0 %v3120
  %3432 = vmatpush1.bf16.msra.mxu0 %v3119
  %3433 = vmatprep.subr.bf16.mxu0 %v3112
  %3434 = vmatpush1.bf16.msra.mxu0 %v3111
  %3435 = vmatprep.subr.bf16.mxu0 %v3104
  %3436 = vmatpush1.bf16.msra.mxu0 %v3103
  %3437 = vmatprep.subr.bf16.mxu0 %v3096
  %3438 = vmatpush1.bf16.msra.mxu0 %v3095
  %3439 = vmatprep.subr.bf16.mxu0 %v3088
  %3440 = vmatpush1.bf16.msra.mxu0 %v3087
  %3441 = vmatprep.subr.bf16.mxu0 %v3208
  %3442 = vmatpush2.bf16.msra.mxu0 %v3207
  %3443 = vmatprep.subr.bf16.mxu0 %v3200
  %3444 = vmatpush2.bf16.msra.mxu0 %v3199
  %3445 = vmatprep.subr.bf16.mxu0 %v3192
  %3446 = vmatpush2.bf16.msra.mxu0 %v3191
  %3447 = vmatprep.subr.bf16.mxu0 %v3184
  %3448 = vmatpush2.bf16.msra.mxu0 %v3183
  %3449 = vmatprep.subr.bf16.mxu0 %v3176
  %3450 = vmatpush2.bf16.msra.mxu0 %v3175
  %3451 = vmatprep.subr.bf16.mxu0 %v3168
  %3452 = vmatpush2.bf16.msra.mxu0 %v3167
  %3453 = vmatprep.subr.bf16.mxu0 %v3160
  %3454 = vmatpush2.bf16.msra.mxu0 %v3159
  %3455 = vmatprep.subr.bf16.mxu0 %v3152
  %3456 = vmatpush2.bf16.msra.mxu0 %v3151
  %3457 = vmatprep.mubr.bf16.mxu0 %v2570
  %3458 = vmatmul.mubr.bf16.gmra.mxu0 %v2569
  %v3459 = vpop.f32.mrf.mxu0
  %v3460 = vadd.f32 0.0, %v3459
  %v3461 = vpop.f32.mrf.mxu0
  %v3462 = vadd.f32 0.0, %v3461
  %v3463 = vpop.f32.mrf.mxu0
  %v3464 = vadd.f32 0.0, %v3463
  %v3465 = vpop.f32.mrf.mxu0
  %v3466 = vadd.f32 0.0, %v3465
  %3467 = vdwg.mxu0
  %3468 = vmatprep.subr.bf16.mxu0 %v3146
  %3469 = vmatpush1.bf16.msra.mxu0 %v3145
  %3470 = vmatprep.subr.bf16.mxu0 %v3138
  %3471 = vmatpush1.bf16.msra.mxu0 %v3137
  %3472 = vmatprep.subr.bf16.mxu0 %v3130
  %3473 = vmatpush1.bf16.msra.mxu0 %v3129
  %3474 = vmatprep.subr.bf16.mxu0 %v3122
  %3475 = vmatpush1.bf16.msra.mxu0 %v3121
  %3476 = vmatprep.subr.bf16.mxu0 %v3114
  %3477 = vmatpush1.bf16.msra.mxu0 %v3113
  %3478 = vmatprep.subr.bf16.mxu0 %v3106
  %3479 = vmatpush1.bf16.msra.mxu0 %v3105
  %3480 = vmatprep.subr.bf16.mxu0 %v3098
  %3481 = vmatpush1.bf16.msra.mxu0 %v3097
  %3482 = vmatprep.subr.bf16.mxu0 %v3090
  %3483 = vmatpush1.bf16.msra.mxu0 %v3089
  %3484 = vmatprep.subr.bf16.mxu0 %v3210
  %3485 = vmatpush2.bf16.msra.mxu0 %v3209
  %3486 = vmatprep.subr.bf16.mxu0 %v3202
  %3487 = vmatpush2.bf16.msra.mxu0 %v3201
  %3488 = vmatprep.subr.bf16.mxu0 %v3194
  %3489 = vmatpush2.bf16.msra.mxu0 %v3193
  %3490 = vmatprep.subr.bf16.mxu0 %v3186
  %3491 = vmatpush2.bf16.msra.mxu0 %v3185
  %3492 = vmatprep.subr.bf16.mxu0 %v3178
  %3493 = vmatpush2.bf16.msra.mxu0 %v3177
  %3494 = vmatprep.subr.bf16.mxu0 %v3170
  %3495 = vmatpush2.bf16.msra.mxu0 %v3169
  %3496 = vmatprep.subr.bf16.mxu0 %v3162
  %3497 = vmatpush2.bf16.msra.mxu0 %v3161
  %3498 = vmatprep.subr.bf16.mxu0 %v3154
  %3499 = vmatpush2.bf16.msra.mxu0 %v3153
  %3500 = vmatprep.mubr.bf16.mxu0 %v2570
  %3501 = vmatmul.mubr.bf16.gmra.mxu0 %v2569
  %v3502 = vpop.f32.mrf.mxu0
  %v3503 = vadd.f32 0.0, %v3502
  %v3504 = vpop.f32.mrf.mxu0
  %v3505 = vadd.f32 0.0, %v3504
  %v3506 = vpop.f32.mrf.mxu0
  %v3507 = vadd.f32 0.0, %v3506
  %v3508 = vpop.f32.mrf.mxu0
  %v3509 = vadd.f32 0.0, %v3508
  %3510 = vdwg.mxu0
  %v3511 = vadd.f32 %v2549, %v3374
  %v3512 = vadd.f32 %v2550, %v3376
  %v3513 = vadd.f32 %v2551, %v3417
  %v3514 = vadd.f32 %v2552, %v3419
  %v3515 = vadd.f32 %v2553, %v3460
  %v3516 = vadd.f32 %v2554, %v3462
  %v3517 = vadd.f32 %v2555, %v3503
  %v3518 = vadd.f32 %v2556, %v3505
  %v3519 = vadd.f32 %v2557, %v3378
  %v3520 = vadd.f32 %v2558, %v3380
  %v3521 = vadd.f32 %v2559, %v3421
  %v3522 = vadd.f32 %v2560, %v3423
  %v3523 = vadd.f32 %v2561, %v3464
  %v3524 = vadd.f32 %v2562, %v3466
  %v3525 = vadd.f32 %v2563, %v3507
  %v3526 = vadd.f32 %v2564, %v3509
  %v3527 = vxor.u32 %v3511, 2147483648
  %v3528 = vxor.u32 %v3512, 2147483648
  %v3529 = vxor.u32 %v3519, 2147483648
  %v3530 = vxor.u32 %v3520, 2147483648
  %v3531 = vmul.f32 %v3527, 1.442695
  %v3532 = vpow.pop %v3531
  %v3533 = vmul.f32 %v3528, 1.442695
  %v3534 = vpow.pop %v3533
  %v3535 = vmul.f32 %v3529, 1.442695
  %v3536 = vpow.pop %v3535
  %v3537 = vmul.f32 %v3530, 1.442695
  %v3538 = vpow.pop %v3537
  %v3539 = vadd.f32 %v3532, 1.0
  %v3540 = vadd.f32 %v3534, 1.0
  %v3541 = vadd.f32 %v3536, 1.0
  %v3542 = vadd.f32 %v3538, 1.0
  %v3543 = vrcp.pop %v3539
  %v3544 = vmul.f32 1.0, %v3543
  %v3545 = vrcp.pop %v3540
  %v3546 = vmul.f32 1.0, %v3545
  %v3547 = vrcp.pop %v3541
  %v3548 = vmul.f32 1.0, %v3547
  %v3549 = vrcp.pop %v3542
  %v3550 = vmul.f32 1.0, %v3549
  %v3551 = vxor.u32 %v3513, 2147483648
  %v3552 = vxor.u32 %v3514, 2147483648
  %v3553 = vxor.u32 %v3521, 2147483648
  %v3554 = vxor.u32 %v3522, 2147483648
  %v3555 = vmul.f32 %v3551, 1.442695
  %v3556 = vpow.pop %v3555
  %v3557 = vmul.f32 %v3552, 1.442695
  %v3558 = vpow.pop %v3557
  %v3559 = vmul.f32 %v3553, 1.442695
  %v3560 = vpow.pop %v3559
  %v3561 = vmul.f32 %v3554, 1.442695
  %v3562 = vpow.pop %v3561
  %v3563 = vadd.f32 %v3556, 1.0
  %v3564 = vadd.f32 %v3558, 1.0
  %v3565 = vadd.f32 %v3560, 1.0
  %v3566 = vadd.f32 %v3562, 1.0
  %v3567 = vrcp.pop %v3563
  %v3568 = vmul.f32 1.0, %v3567
  %v3569 = vrcp.pop %v3564
  %v3570 = vmul.f32 1.0, %v3569
  %v3571 = vrcp.pop %v3565
  %v3572 = vmul.f32 1.0, %v3571
  %v3573 = vrcp.pop %v3566
  %v3574 = vmul.f32 1.0, %v3573
  %v3575 = vtanh.pop %v3515
  %v3576 = vtanh.pop %v3516
  %v3577 = vtanh.pop %v3523
  %v3578 = vtanh.pop %v3524
  %v3579 = vxor.u32 %v3517, 2147483648
  %v3580 = vxor.u32 %v3518, 2147483648
  %v3581 = vxor.u32 %v3525, 2147483648
  %v3582 = vxor.u32 %v3526, 2147483648
  %v3583 = vmul.f32 %v3579, 1.442695
  %v3584 = vpow.pop %v3583
  %v3585 = vmul.f32 %v3580, 1.442695
  %v3586 = vpow.pop %v3585
  %v3587 = vmul.f32 %v3581, 1.442695
  %v3588 = vpow.pop %v3587
  %v3589 = vmul.f32 %v3582, 1.442695
  %v3590 = vpow.pop %v3589
  %v3591 = vadd.f32 %v3584, 1.0
  %v3592 = vadd.f32 %v3586, 1.0
  %v3593 = vadd.f32 %v3588, 1.0
  %v3594 = vadd.f32 %v3590, 1.0
  %v3595 = vrcp.pop %v3591
  %v3596 = vmul.f32 1.0, %v3595
  %v3597 = vrcp.pop %v3592
  %v3598 = vmul.f32 1.0, %v3597
  %v3599 = vrcp.pop %v3593
  %v3600 = vmul.f32 1.0, %v3599
  %v3601 = vrcp.pop %v3594
  %v3602 = vmul.f32 1.0, %v3601
  %v3603 = vld [vmem:[#allocation3] sm:$0xff]
  %v3604 = vld [vmem:[#allocation3 + $0x8] sm:$0xff]
  %v3605 = vld [vmem:[#allocation3 + $0x10] sm:$0xff]
  %v3606 = vld [vmem:[#allocation3 + $0x18] sm:$0xff]
  %v3607 = vmul.f32 %v3568, %v3603
  %v3608 = vmul.f32 %v3570, %v3604
  %v3609 = vmul.f32 %v3572, %v3605
  %v3610 = vmul.f32 %v3574, %v3606
  %v3611 = vmul.f32 %v3544, %v3575
  %v3612 = vmul.f32 %v3546, %v3576
  %v3613 = vmul.f32 %v3548, %v3577
  %v3614 = vmul.f32 %v3550, %v3578
  %v3615 = vadd.f32 %v3607, %v3611
  %v3616 = vadd.f32 %v3608, %v3612
  %v3617 = vadd.f32 %v3609, %v3613
  %v3618 = vadd.f32 %v3610, %v3614
  %v3619 = vtanh.pop %v3615
  %v3620 = vtanh.pop %v3616
  %v3621 = vtanh.pop %v3617
  %v3622 = vtanh.pop %v3618
  %v3623 = vmul.f32 %v3596, %v3619
  %v3624 = vmul.f32 %v3598, %v3620
  %v3625 = vmul.f32 %v3600, %v3621
  %v3626 = vmul.f32 %v3602, %v3622
  %3627 = vst [vmem:[#allocation3] sm:$0xff] %v3615
  %3628 = vst [vmem:[#allocation3 + $0x8] sm:$0xff] %v3616
  %3629 = vst [vmem:[#allocation3 + $0x10] sm:$0xff] %v3617
  %3630 = vst [vmem:[#allocation3 + $0x18] sm:$0xff] %v3618
  %3631 = vst [vmem:[#allocation2] sm:$0xff] %v3623
  %3632 = vst [vmem:[#allocation2 + $0x8] sm:$0xff] %v3624
  %3633 = vst [vmem:[#allocation2 + $0x10] sm:$0xff] %v3625
  %3634 = vst [vmem:[#allocation2 + $0x18] sm:$0xff] %v3626
  %v3635 = vpack.c.bf16 %v3625, %v3623
  %v3636 = vpack.c.bf16 %v3626, %v3624
  %3637 = vmatprep.subr.bf16.mxu0 0
  %3638 = vmatpush1.bf16.msra.mxu0 %v214
  %3639 = vmatprep.subr.bf16.mxu0 0
  %3640 = vmatpush1.bf16.msra.mxu0 %v213
  %3641 = vmatprep.subr.bf16.mxu0 0
  %3642 = vmatpush1.bf16.msra.mxu0 %v212
  %3643 = vmatprep.subr.bf16.mxu0 0
  %3644 = vmatpush1.bf16.msra.mxu0 %v211
  %3645 = vmatprep.subr.bf16.mxu0 0
  %3646 = vmatpush1.bf16.msra.mxu0 %v210
  %3647 = vmatprep.subr.bf16.mxu0 0
  %3648 = vmatpush1.bf16.msra.mxu0 %v209
  %3649 = vmatprep.subr.bf16.mxu0 0
  %3650 = vmatpush1.bf16.msra.mxu0 %v208
  %3651 = vmatprep.subr.bf16.mxu0 0
  %3652 = vmatpush1.bf16.msra.mxu0 %v207
  %3653 = vmatprep.subr.bf16.mxu0 0
  %3654 = vmatpush2.bf16.msra.mxu0 %v222
  %3655 = vmatprep.subr.bf16.mxu0 0
  %3656 = vmatpush2.bf16.msra.mxu0 %v221
  %3657 = vmatprep.subr.bf16.mxu0 0
  %3658 = vmatpush2.bf16.msra.mxu0 %v220
  %3659 = vmatprep.subr.bf16.mxu0 0
  %3660 = vmatpush2.bf16.msra.mxu0 %v219
  %3661 = vmatprep.subr.bf16.mxu0 0
  %3662 = vmatpush2.bf16.msra.mxu0 %v218
  %3663 = vmatprep.subr.bf16.mxu0 0
  %3664 = vmatpush2.bf16.msra.mxu0 %v217
  %3665 = vmatprep.subr.bf16.mxu0 0
  %3666 = vmatpush2.bf16.msra.mxu0 %v216
  %3667 = vmatprep.subr.bf16.mxu0 0
  %3668 = vmatpush2.bf16.msra.mxu0 %v215
  %3669 = vmatprep.mubr.bf16.mxu0 %v3636
  %3670 = vmatmul.mubr.bf16.gmra.mxu0 %v3635
  %v3671 = vpop.f32.mrf.mxu0
  %v3672 = vadd.f32 %v141, %v3671
  %v3673 = vpop.f32.mrf.mxu0
  %v3674 = vpop.f32.mrf.mxu0
  %v3675 = vadd.f32 %v141, %v3674
  %v3676 = vpop.f32.mrf.mxu0
  %3677 = vdwg.mxu0
  %s3678 = scalar_lea.vmem %s4, 48
  %3679 = vst [vmem:[%s3678] sm:$0xff] %v3672
  %3680 = vst [vmem:[%s3678 + $0x8] sm:$0xff] %v3675
  // Predicated region
  $region18: #{vgg_classifier_forward.1} parent=0 // pred_check
    _
  $region19: #{vgg_classifier_forward.1} parent=0 // pred_check_branch
    %3682 = sbr.rel (0) target = $region21
  $region20: #{vgg_classifier_forward.1} parent=0 // pred_region
    _
  $region21: #{vgg_classifier_forward.1} parent=0 // pred_fallthru
    _
  // Predicated region
  $region22: #{vgg_classifier_forward.1} parent=0 // pred_check
    _
  $region23: #{vgg_classifier_forward.1} parent=0 // pred_check_branch
    %3684 = sbr.rel (0) target = $region25
  $region24: #{vgg_classifier_forward.1} parent=0 // pred_region
    _
  $region25: #{vgg_classifier_forward.1} parent=0 // pred_fallthru
    _

</llo_original>
